<compile_context>
chip_gen: v7x
topology: tpu7x:2x2x1
jax: 0.10.0
libtpu: 0.0.40
codegen_flags: <defaults>
</compile_context>

<pallas_src>
import jax
import jax.numpy as jnp
from jax.experimental import pallas as pl
from jax.experimental.pallas import tpu as pltpu

RATE = 0.5            # module-level dropout rate in the PyTorch code
_BISECT_ITERS = 30    # tau interval has width 1.0 -> ~1e-9 before exact fix


def _sparsemax_rows(z):
    """Sparsemax along the last axis of a [rows, D] f32 array (sort-free)."""
    z_max = jnp.max(z, axis=-1, keepdims=True)
    lo = z_max - 1.0                 # tau* always lies in [max(z) - 1, max(z)]
    hi = z_max
    # f(tau) = sum(relu(z - tau)) - 1 is monotone decreasing; bisect on it.
    for _ in range(_BISECT_ITERS):
        mid = 0.5 * (lo + hi)
        f = jnp.sum(jnp.maximum(z - mid, 0.0), axis=-1, keepdims=True) - 1.0
        pos = f > 0.0
        lo = jnp.where(pos, mid, lo)
        hi = jnp.where(pos, hi, mid)
    tau0 = 0.5 * (lo + hi)
    # Exact closed-form correction inside the isolated linear segment.
    support = (z > tau0).astype(z.dtype)
    k = jnp.sum(support, axis=-1, keepdims=True)
    tau = (jnp.sum(z * support, axis=-1, keepdims=True) - 1.0) / k
    return jnp.maximum(z - tau, 0.0)


def _dnn_kernel(x1_ref, x2_ref,
                m11_ref, m12_ref, m21_ref, m22_ref,
                wa1_ref, ba1_ref, wa2_ref, ba2_ref,
                w11_ref, b11_ref, w12_ref, b12_ref,
                w21_ref, b21_ref, w22_ref, b22_ref,
                w3a_ref, w3b_ref, b3_ref,
                out_ref, att1_ref, att2_ref):
    x1 = x1_ref[...]
    x2 = x2_ref[...]

    # ---- branch 1: attention1 = sparsemax(fca1(x1)) -------------------------
    z1 = jnp.dot(x1, wa1_ref[...], preferred_element_type=jnp.float32) + ba1_ref[...]
    att1 = _sparsemax_rows(z1)
    att1_ref[...] = att1

    h1 = jnp.dot(x1 * att1, w11_ref[...], preferred_element_type=jnp.float32) + b11_ref[...]
    h1 = jnp.maximum(h1, 0.0) * m11_ref[...]      # relu + dropout (pre-scaled mask)
    h1 = jnp.dot(h1, w12_ref[...], preferred_element_type=jnp.float32) + b12_ref[...]
    h1 = jnp.maximum(h1, 0.0) * m12_ref[...]

    # ---- branch 2: attention2 = sparsemax(fca2(x2)) -------------------------
    z2 = jnp.dot(x2, wa2_ref[...], preferred_element_type=jnp.float32) + ba2_ref[...]
    att2 = _sparsemax_rows(z2)
    att2_ref[...] = att2

    h2 = jnp.dot(x2 * att2, w21_ref[...], preferred_element_type=jnp.float32) + b21_ref[...]
    h2 = jnp.maximum(h2, 0.0) * m21_ref[...]
    h2 = jnp.dot(h2, w22_ref[...], preferred_element_type=jnp.float32) + b22_ref[...]
    h2 = jnp.maximum(h2, 0.0) * m22_ref[...]

    # ---- head: fc3(cat(h1, h2)) == h1 @ W3a + h2 @ W3b + b3 ------------------
    out_ref[...] = (jnp.dot(h1, w3a_ref[...], preferred_element_type=jnp.float32)
                    + jnp.dot(h2, w3b_ref[...], preferred_element_type=jnp.float32)
                    + b3_ref[...])


def dnn_forward(params, x1, x2, masks, *, batch_tile=None):
    """Run DNNNetTwoAttention.forward.  Returns (out, attention1, attention2)."""
    B, D1 = x1.shape
    _, D2 = x2.shape
    H = params["w12"].shape[1]
    C = params["b3"].shape[1]

    TB = batch_tile or min(B, 512)
    assert B % TB == 0, "batch must be divisible by the batch tile"
    grid = (B // TB,)

    def batch_spec(d):                       # tiled over the batch grid axis
        return pl.BlockSpec((TB, d), lambda i: (i, 0))

    def resident(shape):                     # VMEM-resident across all steps
        return pl.BlockSpec(shape, lambda i: (0, 0))

    in_specs = [
        batch_spec(D1), batch_spec(D2),
        batch_spec(H), batch_spec(H), batch_spec(H), batch_spec(H),
        resident((D1, D1)), resident((1, D1)),
        resident((D2, D2)), resident((1, D2)),
        resident((D1, H)), resident((1, H)),
        resident((H, H)), resident((1, H)),
        resident((D2, H)), resident((1, H)),
        resident((H, H)), resident((1, H)),
        resident((H, C)), resident((H, C)), resident((1, C)),
    ]
    out_specs = (batch_spec(C), batch_spec(D1), batch_spec(D2))
    out_shape = (jax.ShapeDtypeStruct((B, C), jnp.float32),
                 jax.ShapeDtypeStruct((B, D1), jnp.float32),
                 jax.ShapeDtypeStruct((B, D2), jnp.float32))

    flops = 2 * B * (D1 * D1 + D1 * H + H * H + D2 * D2 + D2 * H + H * H + 2 * H * C)
    param_bytes = 4 * sum(int(v.size) for v in params.values())
    io_bytes = 4 * int(x1.size + x2.size + 4 * B * H + B * (C + D1 + D2))
    cost = pl.CostEstimate(flops=flops, transcendentals=0,
                           bytes_accessed=param_bytes + io_bytes)

    m11, m12, m21, m22 = masks
    return pl.pallas_call(
        _dnn_kernel,
        grid=grid,
        in_specs=in_specs,
        out_specs=out_specs,
        out_shape=out_shape,
        compiler_params=pltpu.CompilerParams(dimension_semantics=("parallel",)),
        cost_estimate=cost,
    )(
        x1, x2, m11, m12, m21, m22,
        params["wa1"], params["ba1"], params["wa2"], params["ba2"],
        params["w11"], params["b11"], params["w12"], params["b12"],
        params["w21"], params["b21"], params["w22"], params["b22"],
        params["w3a"], params["w3b"], params["b3"],
    )


def make_dropout_masks(key, batch, hidden, train):
    """Four keep-masks, pre-scaled by 1/(1-p) (PyTorch train-mode semantics)."""
    if not train:
        ones = jnp.ones((batch, hidden), jnp.float32)
        return ones, ones, ones, ones
    keep = 1.0 - RATE
    scale = 1.0 / keep
    keys = jax.random.split(key, 4)
    return tuple(jax.random.bernoulli(k, keep, (batch, hidden)).astype(jnp.float32) * scale
                 for k in keys)


def init_params(key, input_size1, input_size2, hidden_size, num_classes):
    """Deterministic synthetic parameters (PyTorch-Linear-like fan-in scaling)."""
    def linear(key, fan_in, fan_out):
        kw, kb = jax.random.split(key)
        bound = fan_in ** -0.5
        w = jax.random.uniform(kw, (fan_in, fan_out), jnp.float32, -bound, bound)
        b = jax.random.uniform(kb, (1, fan_out), jnp.float32, -bound, bound)
        return w, b

    ka1, ka2, k11, k12, k21, k22, k3 = jax.random.split(key, 7)
    wa1, ba1 = linear(ka1, input_size1, input_size1)
    wa2, ba2 = linear(ka2, input_size2, input_size2)
    w11, b11 = linear(k11, input_size1, hidden_size)
    w12, b12 = linear(k12, hidden_size, hidden_size)
    w21, b21 = linear(k21, input_size2, hidden_size)
    w22, b22 = linear(k22, hidden_size, hidden_size)
    w3, b3 = linear(k3, 2 * hidden_size, num_classes)
    w3a, w3b = w3[:hidden_size], w3[hidden_size:]   # pre-split fc3 (no lane concat)
    return dict(wa1=wa1, ba1=ba1, wa2=wa2, ba2=ba2,
                w11=w11, b11=b11, w12=w12, b12=b12,
                w21=w21, b21=b21, w22=w22, b22=b22,
                w3a=w3a, w3b=w3b, b3=b3)


# -------------------------- pure-JAX reference --------------------------------
def _sparsemax_ref(z):
    z_sorted = jnp.flip(jnp.sort(z, axis=-1), axis=-1)
    k = jnp.arange(1, z.shape[-1] + 1, dtype=z.dtype)
    z_cumsum = jnp.cumsum(z_sorted, axis=-1)
    support = 1.0 + k * z_sorted > z_cumsum
    k_z = jnp.sum(support, axis=-1, keepdims=True)
    tau = (jnp.take_along_axis(z_cumsum, k_z.astype(jnp.int32) - 1, axis=-1) - 1.0) / k_z
    return jnp.maximum(z - tau, 0.0)


def _ref_forward(p, x1, x2):
    att1 = _sparsemax_ref(x1 @ p["wa1"] + p["ba1"])
    h1 = jnp.maximum((x1 * att1) @ p["w11"] + p["b11"], 0.0)
    h1 = jnp.maximum(h1 @ p["w12"] + p["b12"], 0.0)
    att2 = _sparsemax_ref(x2 @ p["wa2"] + p["ba2"])
    h2 = jnp.maximum((x2 * att2) @ p["w21"] + p["b21"], 0.0)
    h2 = jnp.maximum(h2 @ p["w22"] + p["b22"], 0.0)
    out = h1 @ p["w3a"] + h2 @ p["w3b"] + p["b3"]
    return out, att1, att2


if __name__ == "__main__":
    input_size1 = 16
    input_size2 = 24
    hidden_size = 32
    num_classes = 8
    batch = 8

    key = jax.random.PRNGKey(0)
    kparam, kx1, kx2, kdrop = jax.random.split(key, 4)
    params = init_params(kparam, input_size1, input_size2, hidden_size, num_classes)
    x1 = jax.random.normal(kx1, (batch, input_size1), dtype=jnp.float32)
    x2 = jax.random.normal(kx2, (batch, input_size2), dtype=jnp.float32)

    # Train mode (dropout active; masks drawn once, deterministically).
    train_masks = make_dropout_masks(kdrop, batch, hidden_size, train=True)
    out_t, att1_t, att2_t = dnn_forward(params, x1, x2, train_masks)
    jax.block_until_ready((out_t, att1_t, att2_t))
    assert out_t.shape == (batch, num_classes)
    assert att1_t.shape == (batch, input_size1)
    assert att2_t.shape == (batch, input_size2)
    assert bool(jnp.all(jnp.isfinite(out_t)))

    # Eval mode (dropout = identity) checked against the pure-JAX reference.
    eval_masks = make_dropout_masks(kdrop, batch, hidden_size, train=False)
    out_e, att1_e, att2_e = dnn_forward(params, x1, x2, eval_masks)
    jax.block_until_ready((out_e, att1_e, att2_e))

    r_out, r_att1, r_att2 = _ref_forward(params, x1, x2)
    assert jnp.allclose(att1_e, r_att1, atol=1e-3, rtol=1e-3)
    assert jnp.allclose(att2_e, r_att2, atol=1e-3, rtol=1e-3)
    assert jnp.allclose(out_e, r_out, atol=1e-3, rtol=1e-3)
    # Sparsemax rows must be valid probability distributions.
    assert jnp.allclose(att1_e.sum(-1), 1.0, atol=1e-3)
    assert jnp.allclose(att2_e.sum(-1), 1.0, atol=1e-3)

    print("KERNEL_OK")
</pallas_src>

<mosaic_0001>
module attributes {stable_mosaic.version = 11 : i64} {
  func.func @_dnn_kernel(%arg0: i32, %arg1: memref<8x16xf32, #tpu.memory_space<vmem>>, %arg2: memref<8x24xf32, #tpu.memory_space<vmem>>, %arg3: memref<8x32xf32, #tpu.memory_space<vmem>>, %arg4: memref<8x32xf32, #tpu.memory_space<vmem>>, %arg5: memref<8x32xf32, #tpu.memory_space<vmem>>, %arg6: memref<8x32xf32, #tpu.memory_space<vmem>>, %arg7: memref<16x16xf32, #tpu.memory_space<vmem>>, %arg8: memref<1x16xf32, #tpu.memory_space<vmem>>, %arg9: memref<24x24xf32, #tpu.memory_space<vmem>>, %arg10: memref<1x24xf32, #tpu.memory_space<vmem>>, %arg11: memref<16x32xf32, #tpu.memory_space<vmem>>, %arg12: memref<1x32xf32, #tpu.memory_space<vmem>>, %arg13: memref<32x32xf32, #tpu.memory_space<vmem>>, %arg14: memref<1x32xf32, #tpu.memory_space<vmem>>, %arg15: memref<24x32xf32, #tpu.memory_space<vmem>>, %arg16: memref<1x32xf32, #tpu.memory_space<vmem>>, %arg17: memref<32x32xf32, #tpu.memory_space<vmem>>, %arg18: memref<1x32xf32, #tpu.memory_space<vmem>>, %arg19: memref<32x8xf32, #tpu.memory_space<vmem>>, %arg20: memref<32x8xf32, #tpu.memory_space<vmem>>, %arg21: memref<1x8xf32, #tpu.memory_space<vmem>>, %arg22: memref<8x8xf32, #tpu.memory_space<vmem>>, %arg23: memref<8x16xf32, #tpu.memory_space<vmem>>, %arg24: memref<8x24xf32, #tpu.memory_space<vmem>>) attributes {dimension_semantics = [#tpu.dimension_semantics<parallel>], iteration_bounds = array<i64: 1>, scalar_prefetch = 0 : i64, scratch_operands = 0 : i64, tpu.core_type = #tpu.core_type<tc>, window_params = [{transform_indices = @transform_0, window_bounds = array<i64: 8, 16>}, {transform_indices = @transform_1, window_bounds = array<i64: 8, 24>}, {transform_indices = @transform_2, window_bounds = array<i64: 8, 32>}, {transform_indices = @transform_3, window_bounds = array<i64: 8, 32>}, {transform_indices = @transform_4, window_bounds = array<i64: 8, 32>}, {transform_indices = @transform_5, window_bounds = array<i64: 8, 32>}, {pipeline_mode = #tpu.pipeline_mode<synchronous>, transform_indices = @transform_6, window_bounds = array<i64: 16, 16>}, {pipeline_mode = #tpu.pipeline_mode<synchronous>, transform_indices = @transform_7, window_bounds = array<i64: 1, 16>}, {pipeline_mode = #tpu.pipeline_mode<synchronous>, transform_indices = @transform_8, window_bounds = array<i64: 24, 24>}, {pipeline_mode = #tpu.pipeline_mode<synchronous>, transform_indices = @transform_9, window_bounds = array<i64: 1, 24>}, {pipeline_mode = #tpu.pipeline_mode<synchronous>, transform_indices = @transform_10, window_bounds = array<i64: 16, 32>}, {pipeline_mode = #tpu.pipeline_mode<synchronous>, transform_indices = @transform_11, window_bounds = array<i64: 1, 32>}, {pipeline_mode = #tpu.pipeline_mode<synchronous>, transform_indices = @transform_12, window_bounds = array<i64: 32, 32>}, {pipeline_mode = #tpu.pipeline_mode<synchronous>, transform_indices = @transform_13, window_bounds = array<i64: 1, 32>}, {pipeline_mode = #tpu.pipeline_mode<synchronous>, transform_indices = @transform_14, window_bounds = array<i64: 24, 32>}, {pipeline_mode = #tpu.pipeline_mode<synchronous>, transform_indices = @transform_15, window_bounds = array<i64: 1, 32>}, {pipeline_mode = #tpu.pipeline_mode<synchronous>, transform_indices = @transform_16, window_bounds = array<i64: 32, 32>}, {pipeline_mode = #tpu.pipeline_mode<synchronous>, transform_indices = @transform_17, window_bounds = array<i64: 1, 32>}, {pipeline_mode = #tpu.pipeline_mode<synchronous>, transform_indices = @transform_18, window_bounds = array<i64: 32, 8>}, {pipeline_mode = #tpu.pipeline_mode<synchronous>, transform_indices = @transform_19, window_bounds = array<i64: 32, 8>}, {pipeline_mode = #tpu.pipeline_mode<synchronous>, transform_indices = @transform_20, window_bounds = array<i64: 1, 8>}, {transform_indices = @transform_21, window_bounds = array<i64: 8, 8>}, {transform_indices = @transform_22, window_bounds = array<i64: 8, 16>}, {transform_indices = @transform_23, window_bounds = array<i64: 8, 24>}]} {
    %c0 = arith.constant 0 : index
    %c0_0 = arith.constant 0 : index
    %0 = vector.load %arg1[%c0, %c0_0] : memref<8x16xf32, #tpu.memory_space<vmem>>, vector<8x16xf32>
    %c0_1 = arith.constant 0 : index
    %c0_2 = arith.constant 0 : index
    %1 = vector.load %arg2[%c0_1, %c0_2] : memref<8x24xf32, #tpu.memory_space<vmem>>, vector<8x24xf32>
    %c0_3 = arith.constant 0 : index
    %c0_4 = arith.constant 0 : index
    %2 = vector.load %arg7[%c0_3, %c0_4] : memref<16x16xf32, #tpu.memory_space<vmem>>, vector<16x16xf32>
    %cst = arith.constant dense<0.000000e+00> : vector<8x16xf32>
    %3 = tpu.matmul %0, %2, %cst {dimension_numbers = #tpu.dot_dimension_numbers<[1], [0], [0], [1], [0, 0, 1, 1], [], []>} : vector<8x16xf32>, vector<16x16xf32>, vector<8x16xf32> -> vector<8x16xf32>
    %c0_5 = arith.constant 0 : index
    %c0_6 = arith.constant 0 : index
    %4 = vector.load %arg8[%c0_5, %c0_6] : memref<1x16xf32, #tpu.memory_space<vmem>>, vector<1x16xf32>
    %5 = vector.broadcast %4 : vector<1x16xf32> to vector<8x16xf32>
    %6 = arith.addf %3, %5 : vector<8x16xf32>
    %cst_7 = arith.constant dense<0xFF800000> : vector<8xf32>
    %7 = vector.multi_reduction <maximumf>, %6, %cst_7 [1] : vector<8x16xf32> to vector<8xf32>
    %8 = vector.shape_cast %7 : vector<8xf32> to vector<8x1xf32>
    %cst_8 = arith.constant 1.000000e+00 : f32
    %9 = vector.broadcast %cst_8 : f32 to vector<8x1xf32>
    %10 = arith.subf %8, %9 : vector<8x1xf32>
    %11 = arith.addf %10, %8 : vector<8x1xf32>
    %cst_9 = arith.constant 5.000000e-01 : f32
    %12 = vector.broadcast %cst_9 : f32 to vector<8x1xf32>
    %13 = arith.mulf %12, %11 : vector<8x1xf32>
    %14 = vector.broadcast %13 : vector<8x1xf32> to vector<8x16xf32>
    %15 = arith.subf %6, %14 : vector<8x16xf32>
    %cst_10 = arith.constant 0.000000e+00 : f32
    %16 = vector.broadcast %cst_10 : f32 to vector<8x16xf32>
    %17 = arith.maximumf %15, %16 : vector<8x16xf32>
    %cst_11 = arith.constant dense<0.000000e+00> : vector<8xf32>
    %18 = vector.multi_reduction <add>, %17, %cst_11 [1] : vector<8x16xf32> to vector<8xf32>
    %19 = vector.shape_cast %18 : vector<8xf32> to vector<8x1xf32>
    %cst_12 = arith.constant 1.000000e+00 : f32
    %20 = vector.broadcast %cst_12 : f32 to vector<8x1xf32>
    %21 = arith.subf %19, %20 : vector<8x1xf32>
    %cst_13 = arith.constant 0.000000e+00 : f32
    %22 = vector.broadcast %cst_13 : f32 to vector<8x1xf32>
    %23 = arith.cmpf ogt, %21, %22 : vector<8x1xf32>
    %24 = arith.select %23, %13, %10 : vector<8x1xi1>, vector<8x1xf32>
    %25 = arith.select %23, %8, %13 : vector<8x1xi1>, vector<8x1xf32>
    %26 = arith.addf %24, %25 : vector<8x1xf32>
    %cst_14 = arith.constant 5.000000e-01 : f32
    %27 = vector.broadcast %cst_14 : f32 to vector<8x1xf32>
    %28 = arith.mulf %27, %26 : vector<8x1xf32>
    %29 = vector.broadcast %28 : vector<8x1xf32> to vector<8x16xf32>
    %30 = arith.subf %6, %29 : vector<8x16xf32>
    %cst_15 = arith.constant 0.000000e+00 : f32
    %31 = vector.broadcast %cst_15 : f32 to vector<8x16xf32>
    %32 = arith.maximumf %30, %31 : vector<8x16xf32>
    %cst_16 = arith.constant dense<0.000000e+00> : vector<8xf32>
    %33 = vector.multi_reduction <add>, %32, %cst_16 [1] : vector<8x16xf32> to vector<8xf32>
    %34 = vector.shape_cast %33 : vector<8xf32> to vector<8x1xf32>
    %cst_17 = arith.constant 1.000000e+00 : f32
    %35 = vector.broadcast %cst_17 : f32 to vector<8x1xf32>
    %36 = arith.subf %34, %35 : vector<8x1xf32>
    %cst_18 = arith.constant 0.000000e+00 : f32
    %37 = vector.broadcast %cst_18 : f32 to vector<8x1xf32>
    %38 = arith.cmpf ogt, %36, %37 : vector<8x1xf32>
    %39 = arith.select %38, %28, %24 : vector<8x1xi1>, vector<8x1xf32>
    %40 = arith.select %38, %25, %28 : vector<8x1xi1>, vector<8x1xf32>
    %41 = arith.addf %39, %40 : vector<8x1xf32>
    %cst_19 = arith.constant 5.000000e-01 : f32
    %42 = vector.broadcast %cst_19 : f32 to vector<8x1xf32>
    %43 = arith.mulf %42, %41 : vector<8x1xf32>
    %44 = vector.broadcast %43 : vector<8x1xf32> to vector<8x16xf32>
    %45 = arith.subf %6, %44 : vector<8x16xf32>
    %cst_20 = arith.constant 0.000000e+00 : f32
    %46 = vector.broadcast %cst_20 : f32 to vector<8x16xf32>
    %47 = arith.maximumf %45, %46 : vector<8x16xf32>
    %cst_21 = arith.constant dense<0.000000e+00> : vector<8xf32>
    %48 = vector.multi_reduction <add>, %47, %cst_21 [1] : vector<8x16xf32> to vector<8xf32>
    %49 = vector.shape_cast %48 : vector<8xf32> to vector<8x1xf32>
    %cst_22 = arith.constant 1.000000e+00 : f32
    %50 = vector.broadcast %cst_22 : f32 to vector<8x1xf32>
    %51 = arith.subf %49, %50 : vector<8x1xf32>
    %cst_23 = arith.constant 0.000000e+00 : f32
    %52 = vector.broadcast %cst_23 : f32 to vector<8x1xf32>
    %53 = arith.cmpf ogt, %51, %52 : vector<8x1xf32>
    %54 = arith.select %53, %43, %39 : vector<8x1xi1>, vector<8x1xf32>
    %55 = arith.select %53, %40, %43 : vector<8x1xi1>, vector<8x1xf32>
    %56 = arith.addf %54, %55 : vector<8x1xf32>
    %cst_24 = arith.constant 5.000000e-01 : f32
    %57 = vector.broadcast %cst_24 : f32 to vector<8x1xf32>
    %58 = arith.mulf %57, %56 : vector<8x1xf32>
    %59 = vector.broadcast %58 : vector<8x1xf32> to vector<8x16xf32>
    %60 = arith.subf %6, %59 : vector<8x16xf32>
    %cst_25 = arith.constant 0.000000e+00 : f32
    %61 = vector.broadcast %cst_25 : f32 to vector<8x16xf32>
    %62 = arith.maximumf %60, %61 : vector<8x16xf32>
    %cst_26 = arith.constant dense<0.000000e+00> : vector<8xf32>
    %63 = vector.multi_reduction <add>, %62, %cst_26 [1] : vector<8x16xf32> to vector<8xf32>
    %64 = vector.shape_cast %63 : vector<8xf32> to vector<8x1xf32>
    %cst_27 = arith.constant 1.000000e+00 : f32
    %65 = vector.broadcast %cst_27 : f32 to vector<8x1xf32>
    %66 = arith.subf %64, %65 : vector<8x1xf32>
    %cst_28 = arith.constant 0.000000e+00 : f32
    %67 = vector.broadcast %cst_28 : f32 to vector<8x1xf32>
    %68 = arith.cmpf ogt, %66, %67 : vector<8x1xf32>
    %69 = arith.select %68, %58, %54 : vector<8x1xi1>, vector<8x1xf32>
    %70 = arith.select %68, %55, %58 : vector<8x1xi1>, vector<8x1xf32>
    %71 = arith.addf %69, %70 : vector<8x1xf32>
    %cst_29 = arith.constant 5.000000e-01 : f32
    %72 = vector.broadcast %cst_29 : f32 to vector<8x1xf32>
    %73 = arith.mulf %72, %71 : vector<8x1xf32>
    %74 = vector.broadcast %73 : vector<8x1xf32> to vector<8x16xf32>
    %75 = arith.subf %6, %74 : vector<8x16xf32>
    %cst_30 = arith.constant 0.000000e+00 : f32
    %76 = vector.broadcast %cst_30 : f32 to vector<8x16xf32>
    %77 = arith.maximumf %75, %76 : vector<8x16xf32>
    %cst_31 = arith.constant dense<0.000000e+00> : vector<8xf32>
    %78 = vector.multi_reduction <add>, %77, %cst_31 [1] : vector<8x16xf32> to vector<8xf32>
    %79 = vector.shape_cast %78 : vector<8xf32> to vector<8x1xf32>
    %cst_32 = arith.constant 1.000000e+00 : f32
    %80 = vector.broadcast %cst_32 : f32 to vector<8x1xf32>
    %81 = arith.subf %79, %80 : vector<8x1xf32>
    %cst_33 = arith.constant 0.000000e+00 : f32
    %82 = vector.broadcast %cst_33 : f32 to vector<8x1xf32>
    %83 = arith.cmpf ogt, %81, %82 : vector<8x1xf32>
    %84 = arith.select %83, %73, %69 : vector<8x1xi1>, vector<8x1xf32>
    %85 = arith.select %83, %70, %73 : vector<8x1xi1>, vector<8x1xf32>
    %86 = arith.addf %84, %85 : vector<8x1xf32>
    %cst_34 = arith.constant 5.000000e-01 : f32
    %87 = vector.broadcast %cst_34 : f32 to vector<8x1xf32>
    %88 = arith.mulf %87, %86 : vector<8x1xf32>
    %89 = vector.broadcast %88 : vector<8x1xf32> to vector<8x16xf32>
    %90 = arith.subf %6, %89 : vector<8x16xf32>
    %cst_35 = arith.constant 0.000000e+00 : f32
    %91 = vector.broadcast %cst_35 : f32 to vector<8x16xf32>
    %92 = arith.maximumf %90, %91 : vector<8x16xf32>
    %cst_36 = arith.constant dense<0.000000e+00> : vector<8xf32>
    %93 = vector.multi_reduction <add>, %92, %cst_36 [1] : vector<8x16xf32> to vector<8xf32>
    %94 = vector.shape_cast %93 : vector<8xf32> to vector<8x1xf32>
    %cst_37 = arith.constant 1.000000e+00 : f32
    %95 = vector.broadcast %cst_37 : f32 to vector<8x1xf32>
    %96 = arith.subf %94, %95 : vector<8x1xf32>
    %cst_38 = arith.constant 0.000000e+00 : f32
    %97 = vector.broadcast %cst_38 : f32 to vector<8x1xf32>
    %98 = arith.cmpf ogt, %96, %97 : vector<8x1xf32>
    %99 = arith.select %98, %88, %84 : vector<8x1xi1>, vector<8x1xf32>
    %100 = arith.select %98, %85, %88 : vector<8x1xi1>, vector<8x1xf32>
    %101 = arith.addf %99, %100 : vector<8x1xf32>
    %cst_39 = arith.constant 5.000000e-01 : f32
    %102 = vector.broadcast %cst_39 : f32 to vector<8x1xf32>
    %103 = arith.mulf %102, %101 : vector<8x1xf32>
    %104 = vector.broadcast %103 : vector<8x1xf32> to vector<8x16xf32>
    %105 = arith.subf %6, %104 : vector<8x16xf32>
    %cst_40 = arith.constant 0.000000e+00 : f32
    %106 = vector.broadcast %cst_40 : f32 to vector<8x16xf32>
    %107 = arith.maximumf %105, %106 : vector<8x16xf32>
    %cst_41 = arith.constant dense<0.000000e+00> : vector<8xf32>
    %108 = vector.multi_reduction <add>, %107, %cst_41 [1] : vector<8x16xf32> to vector<8xf32>
    %109 = vector.shape_cast %108 : vector<8xf32> to vector<8x1xf32>
    %cst_42 = arith.constant 1.000000e+00 : f32
    %110 = vector.broadcast %cst_42 : f32 to vector<8x1xf32>
    %111 = arith.subf %109, %110 : vector<8x1xf32>
    %cst_43 = arith.constant 0.000000e+00 : f32
    %112 = vector.broadcast %cst_43 : f32 to vector<8x1xf32>
    %113 = arith.cmpf ogt, %111, %112 : vector<8x1xf32>
    %114 = arith.select %113, %103, %99 : vector<8x1xi1>, vector<8x1xf32>
    %115 = arith.select %113, %100, %103 : vector<8x1xi1>, vector<8x1xf32>
    %116 = arith.addf %114, %115 : vector<8x1xf32>
    %cst_44 = arith.constant 5.000000e-01 : f32
    %117 = vector.broadcast %cst_44 : f32 to vector<8x1xf32>
    %118 = arith.mulf %117, %116 : vector<8x1xf32>
    %119 = vector.broadcast %118 : vector<8x1xf32> to vector<8x16xf32>
    %120 = arith.subf %6, %119 : vector<8x16xf32>
    %cst_45 = arith.constant 0.000000e+00 : f32
    %121 = vector.broadcast %cst_45 : f32 to vector<8x16xf32>
    %122 = arith.maximumf %120, %121 : vector<8x16xf32>
    %cst_46 = arith.constant dense<0.000000e+00> : vector<8xf32>
    %123 = vector.multi_reduction <add>, %122, %cst_46 [1] : vector<8x16xf32> to vector<8xf32>
    %124 = vector.shape_cast %123 : vector<8xf32> to vector<8x1xf32>
    %cst_47 = arith.constant 1.000000e+00 : f32
    %125 = vector.broadcast %cst_47 : f32 to vector<8x1xf32>
    %126 = arith.subf %124, %125 : vector<8x1xf32>
    %cst_48 = arith.constant 0.000000e+00 : f32
    %127 = vector.broadcast %cst_48 : f32 to vector<8x1xf32>
    %128 = arith.cmpf ogt, %126, %127 : vector<8x1xf32>
    %129 = arith.select %128, %118, %114 : vector<8x1xi1>, vector<8x1xf32>
    %130 = arith.select %128, %115, %118 : vector<8x1xi1>, vector<8x1xf32>
    %131 = arith.addf %129, %130 : vector<8x1xf32>
    %cst_49 = arith.constant 5.000000e-01 : f32
    %132 = vector.broadcast %cst_49 : f32 to vector<8x1xf32>
    %133 = arith.mulf %132, %131 : vector<8x1xf32>
    %134 = vector.broadcast %133 : vector<8x1xf32> to vector<8x16xf32>
    %135 = arith.subf %6, %134 : vector<8x16xf32>
    %cst_50 = arith.constant 0.000000e+00 : f32
    %136 = vector.broadcast %cst_50 : f32 to vector<8x16xf32>
    %137 = arith.maximumf %135, %136 : vector<8x16xf32>
    %cst_51 = arith.constant dense<0.000000e+00> : vector<8xf32>
    %138 = vector.multi_reduction <add>, %137, %cst_51 [1] : vector<8x16xf32> to vector<8xf32>
    %139 = vector.shape_cast %138 : vector<8xf32> to vector<8x1xf32>
    %cst_52 = arith.constant 1.000000e+00 : f32
    %140 = vector.broadcast %cst_52 : f32 to vector<8x1xf32>
    %141 = arith.subf %139, %140 : vector<8x1xf32>
    %cst_53 = arith.constant 0.000000e+00 : f32
    %142 = vector.broadcast %cst_53 : f32 to vector<8x1xf32>
    %143 = arith.cmpf ogt, %141, %142 : vector<8x1xf32>
    %144 = arith.select %143, %133, %129 : vector<8x1xi1>, vector<8x1xf32>
    %145 = arith.select %143, %130, %133 : vector<8x1xi1>, vector<8x1xf32>
    %146 = arith.addf %144, %145 : vector<8x1xf32>
    %cst_54 = arith.constant 5.000000e-01 : f32
    %147 = vector.broadcast %cst_54 : f32 to vector<8x1xf32>
    %148 = arith.mulf %147, %146 : vector<8x1xf32>
    %149 = vector.broadcast %148 : vector<8x1xf32> to vector<8x16xf32>
    %150 = arith.subf %6, %149 : vector<8x16xf32>
    %cst_55 = arith.constant 0.000000e+00 : f32
    %151 = vector.broadcast %cst_55 : f32 to vector<8x16xf32>
    %152 = arith.maximumf %150, %151 : vector<8x16xf32>
    %cst_56 = arith.constant dense<0.000000e+00> : vector<8xf32>
    %153 = vector.multi_reduction <add>, %152, %cst_56 [1] : vector<8x16xf32> to vector<8xf32>
    %154 = vector.shape_cast %153 : vector<8xf32> to vector<8x1xf32>
    %cst_57 = arith.constant 1.000000e+00 : f32
    %155 = vector.broadcast %cst_57 : f32 to vector<8x1xf32>
    %156 = arith.subf %154, %155 : vector<8x1xf32>
    %cst_58 = arith.constant 0.000000e+00 : f32
    %157 = vector.broadcast %cst_58 : f32 to vector<8x1xf32>
    %158 = arith.cmpf ogt, %156, %157 : vector<8x1xf32>
    %159 = arith.select %158, %148, %144 : vector<8x1xi1>, vector<8x1xf32>
    %160 = arith.select %158, %145, %148 : vector<8x1xi1>, vector<8x1xf32>
    %161 = arith.addf %159, %160 : vector<8x1xf32>
    %cst_59 = arith.constant 5.000000e-01 : f32
    %162 = vector.broadcast %cst_59 : f32 to vector<8x1xf32>
    %163 = arith.mulf %162, %161 : vector<8x1xf32>
    %164 = vector.broadcast %163 : vector<8x1xf32> to vector<8x16xf32>
    %165 = arith.subf %6, %164 : vector<8x16xf32>
    %cst_60 = arith.constant 0.000000e+00 : f32
    %166 = vector.broadcast %cst_60 : f32 to vector<8x16xf32>
    %167 = arith.maximumf %165, %166 : vector<8x16xf32>
    %cst_61 = arith.constant dense<0.000000e+00> : vector<8xf32>
    %168 = vector.multi_reduction <add>, %167, %cst_61 [1] : vector<8x16xf32> to vector<8xf32>
    %169 = vector.shape_cast %168 : vector<8xf32> to vector<8x1xf32>
    %cst_62 = arith.constant 1.000000e+00 : f32
    %170 = vector.broadcast %cst_62 : f32 to vector<8x1xf32>
    %171 = arith.subf %169, %170 : vector<8x1xf32>
    %cst_63 = arith.constant 0.000000e+00 : f32
    %172 = vector.broadcast %cst_63 : f32 to vector<8x1xf32>
    %173 = arith.cmpf ogt, %171, %172 : vector<8x1xf32>
    %174 = arith.select %173, %163, %159 : vector<8x1xi1>, vector<8x1xf32>
    %175 = arith.select %173, %160, %163 : vector<8x1xi1>, vector<8x1xf32>
    %176 = arith.addf %174, %175 : vector<8x1xf32>
    %cst_64 = arith.constant 5.000000e-01 : f32
    %177 = vector.broadcast %cst_64 : f32 to vector<8x1xf32>
    %178 = arith.mulf %177, %176 : vector<8x1xf32>
    %179 = vector.broadcast %178 : vector<8x1xf32> to vector<8x16xf32>
    %180 = arith.subf %6, %179 : vector<8x16xf32>
    %cst_65 = arith.constant 0.000000e+00 : f32
    %181 = vector.broadcast %cst_65 : f32 to vector<8x16xf32>
    %182 = arith.maximumf %180, %181 : vector<8x16xf32>
    %cst_66 = arith.constant dense<0.000000e+00> : vector<8xf32>
    %183 = vector.multi_reduction <add>, %182, %cst_66 [1] : vector<8x16xf32> to vector<8xf32>
    %184 = vector.shape_cast %183 : vector<8xf32> to vector<8x1xf32>
    %cst_67 = arith.constant 1.000000e+00 : f32
    %185 = vector.broadcast %cst_67 : f32 to vector<8x1xf32>
    %186 = arith.subf %184, %185 : vector<8x1xf32>
    %cst_68 = arith.constant 0.000000e+00 : f32
    %187 = vector.broadcast %cst_68 : f32 to vector<8x1xf32>
    %188 = arith.cmpf ogt, %186, %187 : vector<8x1xf32>
    %189 = arith.select %188, %178, %174 : vector<8x1xi1>, vector<8x1xf32>
    %190 = arith.select %188, %175, %178 : vector<8x1xi1>, vector<8x1xf32>
    %191 = arith.addf %189, %190 : vector<8x1xf32>
    %cst_69 = arith.constant 5.000000e-01 : f32
    %192 = vector.broadcast %cst_69 : f32 to vector<8x1xf32>
    %193 = arith.mulf %192, %191 : vector<8x1xf32>
    %194 = vector.broadcast %193 : vector<8x1xf32> to vector<8x16xf32>
    %195 = arith.subf %6, %194 : vector<8x16xf32>
    %cst_70 = arith.constant 0.000000e+00 : f32
    %196 = vector.broadcast %cst_70 : f32 to vector<8x16xf32>
    %197 = arith.maximumf %195, %196 : vector<8x16xf32>
    %cst_71 = arith.constant dense<0.000000e+00> : vector<8xf32>
    %198 = vector.multi_reduction <add>, %197, %cst_71 [1] : vector<8x16xf32> to vector<8xf32>
    %199 = vector.shape_cast %198 : vector<8xf32> to vector<8x1xf32>
    %cst_72 = arith.constant 1.000000e+00 : f32
    %200 = vector.broadcast %cst_72 : f32 to vector<8x1xf32>
    %201 = arith.subf %199, %200 : vector<8x1xf32>
    %cst_73 = arith.constant 0.000000e+00 : f32
    %202 = vector.broadcast %cst_73 : f32 to vector<8x1xf32>
    %203 = arith.cmpf ogt, %201, %202 : vector<8x1xf32>
    %204 = arith.select %203, %193, %189 : vector<8x1xi1>, vector<8x1xf32>
    %205 = arith.select %203, %190, %193 : vector<8x1xi1>, vector<8x1xf32>
    %206 = arith.addf %204, %205 : vector<8x1xf32>
    %cst_74 = arith.constant 5.000000e-01 : f32
    %207 = vector.broadcast %cst_74 : f32 to vector<8x1xf32>
    %208 = arith.mulf %207, %206 : vector<8x1xf32>
    %209 = vector.broadcast %208 : vector<8x1xf32> to vector<8x16xf32>
    %210 = arith.subf %6, %209 : vector<8x16xf32>
    %cst_75 = arith.constant 0.000000e+00 : f32
    %211 = vector.broadcast %cst_75 : f32 to vector<8x16xf32>
    %212 = arith.maximumf %210, %211 : vector<8x16xf32>
    %cst_76 = arith.constant dense<0.000000e+00> : vector<8xf32>
    %213 = vector.multi_reduction <add>, %212, %cst_76 [1] : vector<8x16xf32> to vector<8xf32>
    %214 = vector.shape_cast %213 : vector<8xf32> to vector<8x1xf32>
    %cst_77 = arith.constant 1.000000e+00 : f32
    %215 = vector.broadcast %cst_77 : f32 to vector<8x1xf32>
    %216 = arith.subf %214, %215 : vector<8x1xf32>
    %cst_78 = arith.constant 0.000000e+00 : f32
    %217 = vector.broadcast %cst_78 : f32 to vector<8x1xf32>
    %218 = arith.cmpf ogt, %216, %217 : vector<8x1xf32>
    %219 = arith.select %218, %208, %204 : vector<8x1xi1>, vector<8x1xf32>
    %220 = arith.select %218, %205, %208 : vector<8x1xi1>, vector<8x1xf32>
    %221 = arith.addf %219, %220 : vector<8x1xf32>
    %cst_79 = arith.constant 5.000000e-01 : f32
    %222 = vector.broadcast %cst_79 : f32 to vector<8x1xf32>
    %223 = arith.mulf %222, %221 : vector<8x1xf32>
    %224 = vector.broadcast %223 : vector<8x1xf32> to vector<8x16xf32>
    %225 = arith.subf %6, %224 : vector<8x16xf32>
    %cst_80 = arith.constant 0.000000e+00 : f32
    %226 = vector.broadcast %cst_80 : f32 to vector<8x16xf32>
    %227 = arith.maximumf %225, %226 : vector<8x16xf32>
    %cst_81 = arith.constant dense<0.000000e+00> : vector<8xf32>
    %228 = vector.multi_reduction <add>, %227, %cst_81 [1] : vector<8x16xf32> to vector<8xf32>
    %229 = vector.shape_cast %228 : vector<8xf32> to vector<8x1xf32>
    %cst_82 = arith.constant 1.000000e+00 : f32
    %230 = vector.broadcast %cst_82 : f32 to vector<8x1xf32>
    %231 = arith.subf %229, %230 : vector<8x1xf32>
    %cst_83 = arith.constant 0.000000e+00 : f32
    %232 = vector.broadcast %cst_83 : f32 to vector<8x1xf32>
    %233 = arith.cmpf ogt, %231, %232 : vector<8x1xf32>
    %234 = arith.select %233, %223, %219 : vector<8x1xi1>, vector<8x1xf32>
    %235 = arith.select %233, %220, %223 : vector<8x1xi1>, vector<8x1xf32>
    %236 = arith.addf %234, %235 : vector<8x1xf32>
    %cst_84 = arith.constant 5.000000e-01 : f32
    %237 = vector.broadcast %cst_84 : f32 to vector<8x1xf32>
    %238 = arith.mulf %237, %236 : vector<8x1xf32>
    %239 = vector.broadcast %238 : vector<8x1xf32> to vector<8x16xf32>
    %240 = arith.subf %6, %239 : vector<8x16xf32>
    %cst_85 = arith.constant 0.000000e+00 : f32
    %241 = vector.broadcast %cst_85 : f32 to vector<8x16xf32>
    %242 = arith.maximumf %240, %241 : vector<8x16xf32>
    %cst_86 = arith.constant dense<0.000000e+00> : vector<8xf32>
    %243 = vector.multi_reduction <add>, %242, %cst_86 [1] : vector<8x16xf32> to vector<8xf32>
    %244 = vector.shape_cast %243 : vector<8xf32> to vector<8x1xf32>
    %cst_87 = arith.constant 1.000000e+00 : f32
    %245 = vector.broadcast %cst_87 : f32 to vector<8x1xf32>
    %246 = arith.subf %244, %245 : vector<8x1xf32>
    %cst_88 = arith.constant 0.000000e+00 : f32
    %247 = vector.broadcast %cst_88 : f32 to vector<8x1xf32>
    %248 = arith.cmpf ogt, %246, %247 : vector<8x1xf32>
    %249 = arith.select %248, %238, %234 : vector<8x1xi1>, vector<8x1xf32>
    %250 = arith.select %248, %235, %238 : vector<8x1xi1>, vector<8x1xf32>
    %251 = arith.addf %249, %250 : vector<8x1xf32>
    %cst_89 = arith.constant 5.000000e-01 : f32
    %252 = vector.broadcast %cst_89 : f32 to vector<8x1xf32>
    %253 = arith.mulf %252, %251 : vector<8x1xf32>
    %254 = vector.broadcast %253 : vector<8x1xf32> to vector<8x16xf32>
    %255 = arith.subf %6, %254 : vector<8x16xf32>
    %cst_90 = arith.constant 0.000000e+00 : f32
    %256 = vector.broadcast %cst_90 : f32 to vector<8x16xf32>
    %257 = arith.maximumf %255, %256 : vector<8x16xf32>
    %cst_91 = arith.constant dense<0.000000e+00> : vector<8xf32>
    %258 = vector.multi_reduction <add>, %257, %cst_91 [1] : vector<8x16xf32> to vector<8xf32>
    %259 = vector.shape_cast %258 : vector<8xf32> to vector<8x1xf32>
    %cst_92 = arith.constant 1.000000e+00 : f32
    %260 = vector.broadcast %cst_92 : f32 to vector<8x1xf32>
    %261 = arith.subf %259, %260 : vector<8x1xf32>
    %cst_93 = arith.constant 0.000000e+00 : f32
    %262 = vector.broadcast %cst_93 : f32 to vector<8x1xf32>
    %263 = arith.cmpf ogt, %261, %262 : vector<8x1xf32>
    %264 = arith.select %263, %253, %249 : vector<8x1xi1>, vector<8x1xf32>
    %265 = arith.select %263, %250, %253 : vector<8x1xi1>, vector<8x1xf32>
    %266 = arith.addf %264, %265 : vector<8x1xf32>
    %cst_94 = arith.constant 5.000000e-01 : f32
    %267 = vector.broadcast %cst_94 : f32 to vector<8x1xf32>
    %268 = arith.mulf %267, %266 : vector<8x1xf32>
    %269 = vector.broadcast %268 : vector<8x1xf32> to vector<8x16xf32>
    %270 = arith.subf %6, %269 : vector<8x16xf32>
    %cst_95 = arith.constant 0.000000e+00 : f32
    %271 = vector.broadcast %cst_95 : f32 to vector<8x16xf32>
    %272 = arith.maximumf %270, %271 : vector<8x16xf32>
    %cst_96 = arith.constant dense<0.000000e+00> : vector<8xf32>
    %273 = vector.multi_reduction <add>, %272, %cst_96 [1] : vector<8x16xf32> to vector<8xf32>
    %274 = vector.shape_cast %273 : vector<8xf32> to vector<8x1xf32>
    %cst_97 = arith.constant 1.000000e+00 : f32
    %275 = vector.broadcast %cst_97 : f32 to vector<8x1xf32>
    %276 = arith.subf %274, %275 : vector<8x1xf32>
    %cst_98 = arith.constant 0.000000e+00 : f32
    %277 = vector.broadcast %cst_98 : f32 to vector<8x1xf32>
    %278 = arith.cmpf ogt, %276, %277 : vector<8x1xf32>
    %279 = arith.select %278, %268, %264 : vector<8x1xi1>, vector<8x1xf32>
    %280 = arith.select %278, %265, %268 : vector<8x1xi1>, vector<8x1xf32>
    %281 = arith.addf %279, %280 : vector<8x1xf32>
    %cst_99 = arith.constant 5.000000e-01 : f32
    %282 = vector.broadcast %cst_99 : f32 to vector<8x1xf32>
    %283 = arith.mulf %282, %281 : vector<8x1xf32>
    %284 = vector.broadcast %283 : vector<8x1xf32> to vector<8x16xf32>
    %285 = arith.subf %6, %284 : vector<8x16xf32>
    %cst_100 = arith.constant 0.000000e+00 : f32
    %286 = vector.broadcast %cst_100 : f32 to vector<8x16xf32>
    %287 = arith.maximumf %285, %286 : vector<8x16xf32>
    %cst_101 = arith.constant dense<0.000000e+00> : vector<8xf32>
    %288 = vector.multi_reduction <add>, %287, %cst_101 [1] : vector<8x16xf32> to vector<8xf32>
    %289 = vector.shape_cast %288 : vector<8xf32> to vector<8x1xf32>
    %cst_102 = arith.constant 1.000000e+00 : f32
    %290 = vector.broadcast %cst_102 : f32 to vector<8x1xf32>
    %291 = arith.subf %289, %290 : vector<8x1xf32>
    %cst_103 = arith.constant 0.000000e+00 : f32
    %292 = vector.broadcast %cst_103 : f32 to vector<8x1xf32>
    %293 = arith.cmpf ogt, %291, %292 : vector<8x1xf32>
    %294 = arith.select %293, %283, %279 : vector<8x1xi1>, vector<8x1xf32>
    %295 = arith.select %293, %280, %283 : vector<8x1xi1>, vector<8x1xf32>
    %296 = arith.addf %294, %295 : vector<8x1xf32>
    %cst_104 = arith.constant 5.000000e-01 : f32
    %297 = vector.broadcast %cst_104 : f32 to vector<8x1xf32>
    %298 = arith.mulf %297, %296 : vector<8x1xf32>
    %299 = vector.broadcast %298 : vector<8x1xf32> to vector<8x16xf32>
    %300 = arith.subf %6, %299 : vector<8x16xf32>
    %cst_105 = arith.constant 0.000000e+00 : f32
    %301 = vector.broadcast %cst_105 : f32 to vector<8x16xf32>
    %302 = arith.maximumf %300, %301 : vector<8x16xf32>
    %cst_106 = arith.constant dense<0.000000e+00> : vector<8xf32>
    %303 = vector.multi_reduction <add>, %302, %cst_106 [1] : vector<8x16xf32> to vector<8xf32>
    %304 = vector.shape_cast %303 : vector<8xf32> to vector<8x1xf32>
    %cst_107 = arith.constant 1.000000e+00 : f32
    %305 = vector.broadcast %cst_107 : f32 to vector<8x1xf32>
    %306 = arith.subf %304, %305 : vector<8x1xf32>
    %cst_108 = arith.constant 0.000000e+00 : f32
    %307 = vector.broadcast %cst_108 : f32 to vector<8x1xf32>
    %308 = arith.cmpf ogt, %306, %307 : vector<8x1xf32>
    %309 = arith.select %308, %298, %294 : vector<8x1xi1>, vector<8x1xf32>
    %310 = arith.select %308, %295, %298 : vector<8x1xi1>, vector<8x1xf32>
    %311 = arith.addf %309, %310 : vector<8x1xf32>
    %cst_109 = arith.constant 5.000000e-01 : f32
    %312 = vector.broadcast %cst_109 : f32 to vector<8x1xf32>
    %313 = arith.mulf %312, %311 : vector<8x1xf32>
    %314 = vector.broadcast %313 : vector<8x1xf32> to vector<8x16xf32>
    %315 = arith.subf %6, %314 : vector<8x16xf32>
    %cst_110 = arith.constant 0.000000e+00 : f32
    %316 = vector.broadcast %cst_110 : f32 to vector<8x16xf32>
    %317 = arith.maximumf %315, %316 : vector<8x16xf32>
    %cst_111 = arith.constant dense<0.000000e+00> : vector<8xf32>
    %318 = vector.multi_reduction <add>, %317, %cst_111 [1] : vector<8x16xf32> to vector<8xf32>
    %319 = vector.shape_cast %318 : vector<8xf32> to vector<8x1xf32>
    %cst_112 = arith.constant 1.000000e+00 : f32
    %320 = vector.broadcast %cst_112 : f32 to vector<8x1xf32>
    %321 = arith.subf %319, %320 : vector<8x1xf32>
    %cst_113 = arith.constant 0.000000e+00 : f32
    %322 = vector.broadcast %cst_113 : f32 to vector<8x1xf32>
    %323 = arith.cmpf ogt, %321, %322 : vector<8x1xf32>
    %324 = arith.select %323, %313, %309 : vector<8x1xi1>, vector<8x1xf32>
    %325 = arith.select %323, %310, %313 : vector<8x1xi1>, vector<8x1xf32>
    %326 = arith.addf %324, %325 : vector<8x1xf32>
    %cst_114 = arith.constant 5.000000e-01 : f32
    %327 = vector.broadcast %cst_114 : f32 to vector<8x1xf32>
    %328 = arith.mulf %327, %326 : vector<8x1xf32>
    %329 = vector.broadcast %328 : vector<8x1xf32> to vector<8x16xf32>
    %330 = arith.subf %6, %329 : vector<8x16xf32>
    %cst_115 = arith.constant 0.000000e+00 : f32
    %331 = vector.broadcast %cst_115 : f32 to vector<8x16xf32>
    %332 = arith.maximumf %330, %331 : vector<8x16xf32>
    %cst_116 = arith.constant dense<0.000000e+00> : vector<8xf32>
    %333 = vector.multi_reduction <add>, %332, %cst_116 [1] : vector<8x16xf32> to vector<8xf32>
    %334 = vector.shape_cast %333 : vector<8xf32> to vector<8x1xf32>
    %cst_117 = arith.constant 1.000000e+00 : f32
    %335 = vector.broadcast %cst_117 : f32 to vector<8x1xf32>
    %336 = arith.subf %334, %335 : vector<8x1xf32>
    %cst_118 = arith.constant 0.000000e+00 : f32
    %337 = vector.broadcast %cst_118 : f32 to vector<8x1xf32>
    %338 = arith.cmpf ogt, %336, %337 : vector<8x1xf32>
    %339 = arith.select %338, %328, %324 : vector<8x1xi1>, vector<8x1xf32>
    %340 = arith.select %338, %325, %328 : vector<8x1xi1>, vector<8x1xf32>
    %341 = arith.addf %339, %340 : vector<8x1xf32>
    %cst_119 = arith.constant 5.000000e-01 : f32
    %342 = vector.broadcast %cst_119 : f32 to vector<8x1xf32>
    %343 = arith.mulf %342, %341 : vector<8x1xf32>
    %344 = vector.broadcast %343 : vector<8x1xf32> to vector<8x16xf32>
    %345 = arith.subf %6, %344 : vector<8x16xf32>
    %cst_120 = arith.constant 0.000000e+00 : f32
    %346 = vector.broadcast %cst_120 : f32 to vector<8x16xf32>
    %347 = arith.maximumf %345, %346 : vector<8x16xf32>
    %cst_121 = arith.constant dense<0.000000e+00> : vector<8xf32>
    %348 = vector.multi_reduction <add>, %347, %cst_121 [1] : vector<8x16xf32> to vector<8xf32>
    %349 = vector.shape_cast %348 : vector<8xf32> to vector<8x1xf32>
    %cst_122 = arith.constant 1.000000e+00 : f32
    %350 = vector.broadcast %cst_122 : f32 to vector<8x1xf32>
    %351 = arith.subf %349, %350 : vector<8x1xf32>
    %cst_123 = arith.constant 0.000000e+00 : f32
    %352 = vector.broadcast %cst_123 : f32 to vector<8x1xf32>
    %353 = arith.cmpf ogt, %351, %352 : vector<8x1xf32>
    %354 = arith.select %353, %343, %339 : vector<8x1xi1>, vector<8x1xf32>
    %355 = arith.select %353, %340, %343 : vector<8x1xi1>, vector<8x1xf32>
    %356 = arith.addf %354, %355 : vector<8x1xf32>
    %cst_124 = arith.constant 5.000000e-01 : f32
    %357 = vector.broadcast %cst_124 : f32 to vector<8x1xf32>
    %358 = arith.mulf %357, %356 : vector<8x1xf32>
    %359 = vector.broadcast %358 : vector<8x1xf32> to vector<8x16xf32>
    %360 = arith.subf %6, %359 : vector<8x16xf32>
    %cst_125 = arith.constant 0.000000e+00 : f32
    %361 = vector.broadcast %cst_125 : f32 to vector<8x16xf32>
    %362 = arith.maximumf %360, %361 : vector<8x16xf32>
    %cst_126 = arith.constant dense<0.000000e+00> : vector<8xf32>
    %363 = vector.multi_reduction <add>, %362, %cst_126 [1] : vector<8x16xf32> to vector<8xf32>
    %364 = vector.shape_cast %363 : vector<8xf32> to vector<8x1xf32>
    %cst_127 = arith.constant 1.000000e+00 : f32
    %365 = vector.broadcast %cst_127 : f32 to vector<8x1xf32>
    %366 = arith.subf %364, %365 : vector<8x1xf32>
    %cst_128 = arith.constant 0.000000e+00 : f32
    %367 = vector.broadcast %cst_128 : f32 to vector<8x1xf32>
    %368 = arith.cmpf ogt, %366, %367 : vector<8x1xf32>
    %369 = arith.select %368, %358, %354 : vector<8x1xi1>, vector<8x1xf32>
    %370 = arith.select %368, %355, %358 : vector<8x1xi1>, vector<8x1xf32>
    %371 = arith.addf %369, %370 : vector<8x1xf32>
    %cst_129 = arith.constant 5.000000e-01 : f32
    %372 = vector.broadcast %cst_129 : f32 to vector<8x1xf32>
    %373 = arith.mulf %372, %371 : vector<8x1xf32>
    %374 = vector.broadcast %373 : vector<8x1xf32> to vector<8x16xf32>
    %375 = arith.subf %6, %374 : vector<8x16xf32>
    %cst_130 = arith.constant 0.000000e+00 : f32
    %376 = vector.broadcast %cst_130 : f32 to vector<8x16xf32>
    %377 = arith.maximumf %375, %376 : vector<8x16xf32>
    %cst_131 = arith.constant dense<0.000000e+00> : vector<8xf32>
    %378 = vector.multi_reduction <add>, %377, %cst_131 [1] : vector<8x16xf32> to vector<8xf32>
    %379 = vector.shape_cast %378 : vector<8xf32> to vector<8x1xf32>
    %cst_132 = arith.constant 1.000000e+00 : f32
    %380 = vector.broadcast %cst_132 : f32 to vector<8x1xf32>
    %381 = arith.subf %379, %380 : vector<8x1xf32>
    %cst_133 = arith.constant 0.000000e+00 : f32
    %382 = vector.broadcast %cst_133 : f32 to vector<8x1xf32>
    %383 = arith.cmpf ogt, %381, %382 : vector<8x1xf32>
    %384 = arith.select %383, %373, %369 : vector<8x1xi1>, vector<8x1xf32>
    %385 = arith.select %383, %370, %373 : vector<8x1xi1>, vector<8x1xf32>
    %386 = arith.addf %384, %385 : vector<8x1xf32>
    %cst_134 = arith.constant 5.000000e-01 : f32
    %387 = vector.broadcast %cst_134 : f32 to vector<8x1xf32>
    %388 = arith.mulf %387, %386 : vector<8x1xf32>
    %389 = vector.broadcast %388 : vector<8x1xf32> to vector<8x16xf32>
    %390 = arith.subf %6, %389 : vector<8x16xf32>
    %cst_135 = arith.constant 0.000000e+00 : f32
    %391 = vector.broadcast %cst_135 : f32 to vector<8x16xf32>
    %392 = arith.maximumf %390, %391 : vector<8x16xf32>
    %cst_136 = arith.constant dense<0.000000e+00> : vector<8xf32>
    %393 = vector.multi_reduction <add>, %392, %cst_136 [1] : vector<8x16xf32> to vector<8xf32>
    %394 = vector.shape_cast %393 : vector<8xf32> to vector<8x1xf32>
    %cst_137 = arith.constant 1.000000e+00 : f32
    %395 = vector.broadcast %cst_137 : f32 to vector<8x1xf32>
    %396 = arith.subf %394, %395 : vector<8x1xf32>
    %cst_138 = arith.constant 0.000000e+00 : f32
    %397 = vector.broadcast %cst_138 : f32 to vector<8x1xf32>
    %398 = arith.cmpf ogt, %396, %397 : vector<8x1xf32>
    %399 = arith.select %398, %388, %384 : vector<8x1xi1>, vector<8x1xf32>
    %400 = arith.select %398, %385, %388 : vector<8x1xi1>, vector<8x1xf32>
    %401 = arith.addf %399, %400 : vector<8x1xf32>
    %cst_139 = arith.constant 5.000000e-01 : f32
    %402 = vector.broadcast %cst_139 : f32 to vector<8x1xf32>
    %403 = arith.mulf %402, %401 : vector<8x1xf32>
    %404 = vector.broadcast %403 : vector<8x1xf32> to vector<8x16xf32>
    %405 = arith.subf %6, %404 : vector<8x16xf32>
    %cst_140 = arith.constant 0.000000e+00 : f32
    %406 = vector.broadcast %cst_140 : f32 to vector<8x16xf32>
    %407 = arith.maximumf %405, %406 : vector<8x16xf32>
    %cst_141 = arith.constant dense<0.000000e+00> : vector<8xf32>
    %408 = vector.multi_reduction <add>, %407, %cst_141 [1] : vector<8x16xf32> to vector<8xf32>
    %409 = vector.shape_cast %408 : vector<8xf32> to vector<8x1xf32>
    %cst_142 = arith.constant 1.000000e+00 : f32
    %410 = vector.broadcast %cst_142 : f32 to vector<8x1xf32>
    %411 = arith.subf %409, %410 : vector<8x1xf32>
    %cst_143 = arith.constant 0.000000e+00 : f32
    %412 = vector.broadcast %cst_143 : f32 to vector<8x1xf32>
    %413 = arith.cmpf ogt, %411, %412 : vector<8x1xf32>
    %414 = arith.select %413, %403, %399 : vector<8x1xi1>, vector<8x1xf32>
    %415 = arith.select %413, %400, %403 : vector<8x1xi1>, vector<8x1xf32>
    %416 = arith.addf %414, %415 : vector<8x1xf32>
    %cst_144 = arith.constant 5.000000e-01 : f32
    %417 = vector.broadcast %cst_144 : f32 to vector<8x1xf32>
    %418 = arith.mulf %417, %416 : vector<8x1xf32>
    %419 = vector.broadcast %418 : vector<8x1xf32> to vector<8x16xf32>
    %420 = arith.subf %6, %419 : vector<8x16xf32>
    %cst_145 = arith.constant 0.000000e+00 : f32
    %421 = vector.broadcast %cst_145 : f32 to vector<8x16xf32>
    %422 = arith.maximumf %420, %421 : vector<8x16xf32>
    %cst_146 = arith.constant dense<0.000000e+00> : vector<8xf32>
    %423 = vector.multi_reduction <add>, %422, %cst_146 [1] : vector<8x16xf32> to vector<8xf32>
    %424 = vector.shape_cast %423 : vector<8xf32> to vector<8x1xf32>
    %cst_147 = arith.constant 1.000000e+00 : f32
    %425 = vector.broadcast %cst_147 : f32 to vector<8x1xf32>
    %426 = arith.subf %424, %425 : vector<8x1xf32>
    %cst_148 = arith.constant 0.000000e+00 : f32
    %427 = vector.broadcast %cst_148 : f32 to vector<8x1xf32>
    %428 = arith.cmpf ogt, %426, %427 : vector<8x1xf32>
    %429 = arith.select %428, %418, %414 : vector<8x1xi1>, vector<8x1xf32>
    %430 = arith.select %428, %415, %418 : vector<8x1xi1>, vector<8x1xf32>
    %431 = arith.addf %429, %430 : vector<8x1xf32>
    %cst_149 = arith.constant 5.000000e-01 : f32
    %432 = vector.broadcast %cst_149 : f32 to vector<8x1xf32>
    %433 = arith.mulf %432, %431 : vector<8x1xf32>
    %434 = vector.broadcast %433 : vector<8x1xf32> to vector<8x16xf32>
    %435 = arith.subf %6, %434 : vector<8x16xf32>
    %cst_150 = arith.constant 0.000000e+00 : f32
    %436 = vector.broadcast %cst_150 : f32 to vector<8x16xf32>
    %437 = arith.maximumf %435, %436 : vector<8x16xf32>
    %cst_151 = arith.constant dense<0.000000e+00> : vector<8xf32>
    %438 = vector.multi_reduction <add>, %437, %cst_151 [1] : vector<8x16xf32> to vector<8xf32>
    %439 = vector.shape_cast %438 : vector<8xf32> to vector<8x1xf32>
    %cst_152 = arith.constant 1.000000e+00 : f32
    %440 = vector.broadcast %cst_152 : f32 to vector<8x1xf32>
    %441 = arith.subf %439, %440 : vector<8x1xf32>
    %cst_153 = arith.constant 0.000000e+00 : f32
    %442 = vector.broadcast %cst_153 : f32 to vector<8x1xf32>
    %443 = arith.cmpf ogt, %441, %442 : vector<8x1xf32>
    %444 = arith.select %443, %433, %429 : vector<8x1xi1>, vector<8x1xf32>
    %445 = arith.select %443, %430, %433 : vector<8x1xi1>, vector<8x1xf32>
    %446 = arith.addf %444, %445 : vector<8x1xf32>
    %cst_154 = arith.constant 5.000000e-01 : f32
    %447 = vector.broadcast %cst_154 : f32 to vector<8x1xf32>
    %448 = arith.mulf %447, %446 : vector<8x1xf32>
    %449 = vector.broadcast %448 : vector<8x1xf32> to vector<8x16xf32>
    %450 = arith.subf %6, %449 : vector<8x16xf32>
    %cst_155 = arith.constant 0.000000e+00 : f32
    %451 = vector.broadcast %cst_155 : f32 to vector<8x16xf32>
    %452 = arith.maximumf %450, %451 : vector<8x16xf32>
    %cst_156 = arith.constant dense<0.000000e+00> : vector<8xf32>
    %453 = vector.multi_reduction <add>, %452, %cst_156 [1] : vector<8x16xf32> to vector<8xf32>
    %454 = vector.shape_cast %453 : vector<8xf32> to vector<8x1xf32>
    %cst_157 = arith.constant 1.000000e+00 : f32
    %455 = vector.broadcast %cst_157 : f32 to vector<8x1xf32>
    %456 = arith.subf %454, %455 : vector<8x1xf32>
    %cst_158 = arith.constant 0.000000e+00 : f32
    %457 = vector.broadcast %cst_158 : f32 to vector<8x1xf32>
    %458 = arith.cmpf ogt, %456, %457 : vector<8x1xf32>
    %459 = arith.select %458, %448, %444 : vector<8x1xi1>, vector<8x1xf32>
    %460 = arith.select %458, %445, %448 : vector<8x1xi1>, vector<8x1xf32>
    %461 = arith.addf %459, %460 : vector<8x1xf32>
    %cst_159 = arith.constant 5.000000e-01 : f32
    %462 = vector.broadcast %cst_159 : f32 to vector<8x1xf32>
    %463 = arith.mulf %462, %461 : vector<8x1xf32>
    %464 = vector.broadcast %463 : vector<8x1xf32> to vector<8x16xf32>
    %465 = arith.cmpf ogt, %6, %464 : vector<8x16xf32>
    %466 = arith.extui %465 : vector<8x16xi1> to vector<8x16xi32>
    %467 = arith.sitofp %466 : vector<8x16xi32> to vector<8x16xf32>
    %cst_160 = arith.constant dense<0.000000e+00> : vector<8xf32>
    %468 = vector.multi_reduction <add>, %467, %cst_160 [1] : vector<8x16xf32> to vector<8xf32>
    %469 = vector.shape_cast %468 : vector<8xf32> to vector<8x1xf32>
    %470 = arith.mulf %6, %467 : vector<8x16xf32>
    %cst_161 = arith.constant dense<0.000000e+00> : vector<8xf32>
    %471 = vector.multi_reduction <add>, %470, %cst_161 [1] : vector<8x16xf32> to vector<8xf32>
    %472 = vector.shape_cast %471 : vector<8xf32> to vector<8x1xf32>
    %cst_162 = arith.constant 1.000000e+00 : f32
    %473 = vector.broadcast %cst_162 : f32 to vector<8x1xf32>
    %474 = arith.subf %472, %473 : vector<8x1xf32>
    %475 = arith.divf %474, %469 : vector<8x1xf32>
    %476 = vector.broadcast %475 : vector<8x1xf32> to vector<8x16xf32>
    %477 = arith.subf %6, %476 : vector<8x16xf32>
    %cst_163 = arith.constant 0.000000e+00 : f32
    %478 = vector.broadcast %cst_163 : f32 to vector<8x16xf32>
    %479 = arith.maximumf %477, %478 : vector<8x16xf32>
    %c0_164 = arith.constant 0 : index
    %c0_165 = arith.constant 0 : index
    %480 = vector.load %arg23[%c0_164, %c0_165] : memref<8x16xf32, #tpu.memory_space<vmem>>, vector<8x16xf32>
    tpu.vector_store %arg23[%c0_164, %c0_165], %479 {strides = array<i32>} : memref<8x16xf32, #tpu.memory_space<vmem>>, vector<8x16xf32>,
    %481 = arith.mulf %0, %479 : vector<8x16xf32>
    %c0_166 = arith.constant 0 : index
    %c0_167 = arith.constant 0 : index
    %482 = vector.load %arg11[%c0_166, %c0_167] : memref<16x32xf32, #tpu.memory_space<vmem>>, vector<16x32xf32>
    %cst_168 = arith.constant dense<0.000000e+00> : vector<8x32xf32>
    %483 = tpu.matmul %481, %482, %cst_168 {dimension_numbers = #tpu.dot_dimension_numbers<[1], [0], [0], [1], [0, 0, 1, 1], [], []>} : vector<8x16xf32>, vector<16x32xf32>, vector<8x32xf32> -> vector<8x32xf32>
    %c0_169 = arith.constant 0 : index
    %c0_170 = arith.constant 0 : index
    %484 = vector.load %arg12[%c0_169, %c0_170] : memref<1x32xf32, #tpu.memory_space<vmem>>, vector<1x32xf32>
    %485 = vector.broadcast %484 : vector<1x32xf32> to vector<8x32xf32>
    %486 = arith.addf %483, %485 : vector<8x32xf32>
    %cst_171 = arith.constant 0.000000e+00 : f32
    %487 = vector.broadcast %cst_171 : f32 to vector<8x32xf32>
    %488 = arith.maximumf %486, %487 : vector<8x32xf32>
    %c0_172 = arith.constant 0 : index
    %c0_173 = arith.constant 0 : index
    %489 = vector.load %arg3[%c0_172, %c0_173] : memref<8x32xf32, #tpu.memory_space<vmem>>, vector<8x32xf32>
    %490 = arith.mulf %488, %489 : vector<8x32xf32>
    %c0_174 = arith.constant 0 : index
    %c0_175 = arith.constant 0 : index
    %491 = vector.load %arg13[%c0_174, %c0_175] : memref<32x32xf32, #tpu.memory_space<vmem>>, vector<32x32xf32>
    %cst_176 = arith.constant dense<0.000000e+00> : vector<8x32xf32>
    %492 = tpu.matmul %490, %491, %cst_176 {dimension_numbers = #tpu.dot_dimension_numbers<[1], [0], [0], [1], [0, 0, 1, 1], [], []>} : vector<8x32xf32>, vector<32x32xf32>, vector<8x32xf32> -> vector<8x32xf32>
    %c0_177 = arith.constant 0 : index
    %c0_178 = arith.constant 0 : index
    %493 = vector.load %arg14[%c0_177, %c0_178] : memref<1x32xf32, #tpu.memory_space<vmem>>, vector<1x32xf32>
    %494 = vector.broadcast %493 : vector<1x32xf32> to vector<8x32xf32>
    %495 = arith.addf %492, %494 : vector<8x32xf32>
    %cst_179 = arith.constant 0.000000e+00 : f32
    %496 = vector.broadcast %cst_179 : f32 to vector<8x32xf32>
    %497 = arith.maximumf %495, %496 : vector<8x32xf32>
    %c0_180 = arith.constant 0 : index
    %c0_181 = arith.constant 0 : index
    %498 = vector.load %arg4[%c0_180, %c0_181] : memref<8x32xf32, #tpu.memory_space<vmem>>, vector<8x32xf32>
    %499 = arith.mulf %497, %498 : vector<8x32xf32>
    %c0_182 = arith.constant 0 : index
    %c0_183 = arith.constant 0 : index
    %500 = vector.load %arg9[%c0_182, %c0_183] : memref<24x24xf32, #tpu.memory_space<vmem>>, vector<24x24xf32>
    %cst_184 = arith.constant dense<0.000000e+00> : vector<8x24xf32>
    %501 = tpu.matmul %1, %500, %cst_184 {dimension_numbers = #tpu.dot_dimension_numbers<[1], [0], [0], [1], [0, 0, 1, 1], [], []>} : vector<8x24xf32>, vector<24x24xf32>, vector<8x24xf32> -> vector<8x24xf32>
    %c0_185 = arith.constant 0 : index
    %c0_186 = arith.constant 0 : index
    %502 = vector.load %arg10[%c0_185, %c0_186] : memref<1x24xf32, #tpu.memory_space<vmem>>, vector<1x24xf32>
    %503 = vector.broadcast %502 : vector<1x24xf32> to vector<8x24xf32>
    %504 = arith.addf %501, %503 : vector<8x24xf32>
    %cst_187 = arith.constant dense<0xFF800000> : vector<8xf32>
    %505 = vector.multi_reduction <maximumf>, %504, %cst_187 [1] : vector<8x24xf32> to vector<8xf32>
    %506 = vector.shape_cast %505 : vector<8xf32> to vector<8x1xf32>
    %cst_188 = arith.constant 1.000000e+00 : f32
    %507 = vector.broadcast %cst_188 : f32 to vector<8x1xf32>
    %508 = arith.subf %506, %507 : vector<8x1xf32>
    %509 = arith.addf %508, %506 : vector<8x1xf32>
    %cst_189 = arith.constant 5.000000e-01 : f32
    %510 = vector.broadcast %cst_189 : f32 to vector<8x1xf32>
    %511 = arith.mulf %510, %509 : vector<8x1xf32>
    %512 = vector.broadcast %511 : vector<8x1xf32> to vector<8x24xf32>
    %513 = arith.subf %504, %512 : vector<8x24xf32>
    %cst_190 = arith.constant 0.000000e+00 : f32
    %514 = vector.broadcast %cst_190 : f32 to vector<8x24xf32>
    %515 = arith.maximumf %513, %514 : vector<8x24xf32>
    %cst_191 = arith.constant dense<0.000000e+00> : vector<8xf32>
    %516 = vector.multi_reduction <add>, %515, %cst_191 [1] : vector<8x24xf32> to vector<8xf32>
    %517 = vector.shape_cast %516 : vector<8xf32> to vector<8x1xf32>
    %cst_192 = arith.constant 1.000000e+00 : f32
    %518 = vector.broadcast %cst_192 : f32 to vector<8x1xf32>
    %519 = arith.subf %517, %518 : vector<8x1xf32>
    %cst_193 = arith.constant 0.000000e+00 : f32
    %520 = vector.broadcast %cst_193 : f32 to vector<8x1xf32>
    %521 = arith.cmpf ogt, %519, %520 : vector<8x1xf32>
    %522 = arith.select %521, %511, %508 : vector<8x1xi1>, vector<8x1xf32>
    %523 = arith.select %521, %506, %511 : vector<8x1xi1>, vector<8x1xf32>
    %524 = arith.addf %522, %523 : vector<8x1xf32>
    %cst_194 = arith.constant 5.000000e-01 : f32
    %525 = vector.broadcast %cst_194 : f32 to vector<8x1xf32>
    %526 = arith.mulf %525, %524 : vector<8x1xf32>
    %527 = vector.broadcast %526 : vector<8x1xf32> to vector<8x24xf32>
    %528 = arith.subf %504, %527 : vector<8x24xf32>
    %cst_195 = arith.constant 0.000000e+00 : f32
    %529 = vector.broadcast %cst_195 : f32 to vector<8x24xf32>
    %530 = arith.maximumf %528, %529 : vector<8x24xf32>
    %cst_196 = arith.constant dense<0.000000e+00> : vector<8xf32>
    %531 = vector.multi_reduction <add>, %530, %cst_196 [1] : vector<8x24xf32> to vector<8xf32>
    %532 = vector.shape_cast %531 : vector<8xf32> to vector<8x1xf32>
    %cst_197 = arith.constant 1.000000e+00 : f32
    %533 = vector.broadcast %cst_197 : f32 to vector<8x1xf32>
    %534 = arith.subf %532, %533 : vector<8x1xf32>
    %cst_198 = arith.constant 0.000000e+00 : f32
    %535 = vector.broadcast %cst_198 : f32 to vector<8x1xf32>
    %536 = arith.cmpf ogt, %534, %535 : vector<8x1xf32>
    %537 = arith.select %536, %526, %522 : vector<8x1xi1>, vector<8x1xf32>
    %538 = arith.select %536, %523, %526 : vector<8x1xi1>, vector<8x1xf32>
    %539 = arith.addf %537, %538 : vector<8x1xf32>
    %cst_199 = arith.constant 5.000000e-01 : f32
    %540 = vector.broadcast %cst_199 : f32 to vector<8x1xf32>
    %541 = arith.mulf %540, %539 : vector<8x1xf32>
    %542 = vector.broadcast %541 : vector<8x1xf32> to vector<8x24xf32>
    %543 = arith.subf %504, %542 : vector<8x24xf32>
    %cst_200 = arith.constant 0.000000e+00 : f32
    %544 = vector.broadcast %cst_200 : f32 to vector<8x24xf32>
    %545 = arith.maximumf %543, %544 : vector<8x24xf32>
    %cst_201 = arith.constant dense<0.000000e+00> : vector<8xf32>
    %546 = vector.multi_reduction <add>, %545, %cst_201 [1] : vector<8x24xf32> to vector<8xf32>
    %547 = vector.shape_cast %546 : vector<8xf32> to vector<8x1xf32>
    %cst_202 = arith.constant 1.000000e+00 : f32
    %548 = vector.broadcast %cst_202 : f32 to vector<8x1xf32>
    %549 = arith.subf %547, %548 : vector<8x1xf32>
    %cst_203 = arith.constant 0.000000e+00 : f32
    %550 = vector.broadcast %cst_203 : f32 to vector<8x1xf32>
    %551 = arith.cmpf ogt, %549, %550 : vector<8x1xf32>
    %552 = arith.select %551, %541, %537 : vector<8x1xi1>, vector<8x1xf32>
    %553 = arith.select %551, %538, %541 : vector<8x1xi1>, vector<8x1xf32>
    %554 = arith.addf %552, %553 : vector<8x1xf32>
    %cst_204 = arith.constant 5.000000e-01 : f32
    %555 = vector.broadcast %cst_204 : f32 to vector<8x1xf32>
    %556 = arith.mulf %555, %554 : vector<8x1xf32>
    %557 = vector.broadcast %556 : vector<8x1xf32> to vector<8x24xf32>
    %558 = arith.subf %504, %557 : vector<8x24xf32>
    %cst_205 = arith.constant 0.000000e+00 : f32
    %559 = vector.broadcast %cst_205 : f32 to vector<8x24xf32>
    %560 = arith.maximumf %558, %559 : vector<8x24xf32>
    %cst_206 = arith.constant dense<0.000000e+00> : vector<8xf32>
    %561 = vector.multi_reduction <add>, %560, %cst_206 [1] : vector<8x24xf32> to vector<8xf32>
    %562 = vector.shape_cast %561 : vector<8xf32> to vector<8x1xf32>
    %cst_207 = arith.constant 1.000000e+00 : f32
    %563 = vector.broadcast %cst_207 : f32 to vector<8x1xf32>
    %564 = arith.subf %562, %563 : vector<8x1xf32>
    %cst_208 = arith.constant 0.000000e+00 : f32
    %565 = vector.broadcast %cst_208 : f32 to vector<8x1xf32>
    %566 = arith.cmpf ogt, %564, %565 : vector<8x1xf32>
    %567 = arith.select %566, %556, %552 : vector<8x1xi1>, vector<8x1xf32>
    %568 = arith.select %566, %553, %556 : vector<8x1xi1>, vector<8x1xf32>
    %569 = arith.addf %567, %568 : vector<8x1xf32>
    %cst_209 = arith.constant 5.000000e-01 : f32
    %570 = vector.broadcast %cst_209 : f32 to vector<8x1xf32>
    %571 = arith.mulf %570, %569 : vector<8x1xf32>
    %572 = vector.broadcast %571 : vector<8x1xf32> to vector<8x24xf32>
    %573 = arith.subf %504, %572 : vector<8x24xf32>
    %cst_210 = arith.constant 0.000000e+00 : f32
    %574 = vector.broadcast %cst_210 : f32 to vector<8x24xf32>
    %575 = arith.maximumf %573, %574 : vector<8x24xf32>
    %cst_211 = arith.constant dense<0.000000e+00> : vector<8xf32>
    %576 = vector.multi_reduction <add>, %575, %cst_211 [1] : vector<8x24xf32> to vector<8xf32>
    %577 = vector.shape_cast %576 : vector<8xf32> to vector<8x1xf32>
    %cst_212 = arith.constant 1.000000e+00 : f32
    %578 = vector.broadcast %cst_212 : f32 to vector<8x1xf32>
    %579 = arith.subf %577, %578 : vector<8x1xf32>
    %cst_213 = arith.constant 0.000000e+00 : f32
    %580 = vector.broadcast %cst_213 : f32 to vector<8x1xf32>
    %581 = arith.cmpf ogt, %579, %580 : vector<8x1xf32>
    %582 = arith.select %581, %571, %567 : vector<8x1xi1>, vector<8x1xf32>
    %583 = arith.select %581, %568, %571 : vector<8x1xi1>, vector<8x1xf32>
    %584 = arith.addf %582, %583 : vector<8x1xf32>
    %cst_214 = arith.constant 5.000000e-01 : f32
    %585 = vector.broadcast %cst_214 : f32 to vector<8x1xf32>
    %586 = arith.mulf %585, %584 : vector<8x1xf32>
    %587 = vector.broadcast %586 : vector<8x1xf32> to vector<8x24xf32>
    %588 = arith.subf %504, %587 : vector<8x24xf32>
    %cst_215 = arith.constant 0.000000e+00 : f32
    %589 = vector.broadcast %cst_215 : f32 to vector<8x24xf32>
    %590 = arith.maximumf %588, %589 : vector<8x24xf32>
    %cst_216 = arith.constant dense<0.000000e+00> : vector<8xf32>
    %591 = vector.multi_reduction <add>, %590, %cst_216 [1] : vector<8x24xf32> to vector<8xf32>
    %592 = vector.shape_cast %591 : vector<8xf32> to vector<8x1xf32>
    %cst_217 = arith.constant 1.000000e+00 : f32
    %593 = vector.broadcast %cst_217 : f32 to vector<8x1xf32>
    %594 = arith.subf %592, %593 : vector<8x1xf32>
    %cst_218 = arith.constant 0.000000e+00 : f32
    %595 = vector.broadcast %cst_218 : f32 to vector<8x1xf32>
    %596 = arith.cmpf ogt, %594, %595 : vector<8x1xf32>
    %597 = arith.select %596, %586, %582 : vector<8x1xi1>, vector<8x1xf32>
    %598 = arith.select %596, %583, %586 : vector<8x1xi1>, vector<8x1xf32>
    %599 = arith.addf %597, %598 : vector<8x1xf32>
    %cst_219 = arith.constant 5.000000e-01 : f32
    %600 = vector.broadcast %cst_219 : f32 to vector<8x1xf32>
    %601 = arith.mulf %600, %599 : vector<8x1xf32>
    %602 = vector.broadcast %601 : vector<8x1xf32> to vector<8x24xf32>
    %603 = arith.subf %504, %602 : vector<8x24xf32>
    %cst_220 = arith.constant 0.000000e+00 : f32
    %604 = vector.broadcast %cst_220 : f32 to vector<8x24xf32>
    %605 = arith.maximumf %603, %604 : vector<8x24xf32>
    %cst_221 = arith.constant dense<0.000000e+00> : vector<8xf32>
    %606 = vector.multi_reduction <add>, %605, %cst_221 [1] : vector<8x24xf32> to vector<8xf32>
    %607 = vector.shape_cast %606 : vector<8xf32> to vector<8x1xf32>
    %cst_222 = arith.constant 1.000000e+00 : f32
    %608 = vector.broadcast %cst_222 : f32 to vector<8x1xf32>
    %609 = arith.subf %607, %608 : vector<8x1xf32>
    %cst_223 = arith.constant 0.000000e+00 : f32
    %610 = vector.broadcast %cst_223 : f32 to vector<8x1xf32>
    %611 = arith.cmpf ogt, %609, %610 : vector<8x1xf32>
    %612 = arith.select %611, %601, %597 : vector<8x1xi1>, vector<8x1xf32>
    %613 = arith.select %611, %598, %601 : vector<8x1xi1>, vector<8x1xf32>
    %614 = arith.addf %612, %613 : vector<8x1xf32>
    %cst_224 = arith.constant 5.000000e-01 : f32
    %615 = vector.broadcast %cst_224 : f32 to vector<8x1xf32>
    %616 = arith.mulf %615, %614 : vector<8x1xf32>
    %617 = vector.broadcast %616 : vector<8x1xf32> to vector<8x24xf32>
    %618 = arith.subf %504, %617 : vector<8x24xf32>
    %cst_225 = arith.constant 0.000000e+00 : f32
    %619 = vector.broadcast %cst_225 : f32 to vector<8x24xf32>
    %620 = arith.maximumf %618, %619 : vector<8x24xf32>
    %cst_226 = arith.constant dense<0.000000e+00> : vector<8xf32>
    %621 = vector.multi_reduction <add>, %620, %cst_226 [1] : vector<8x24xf32> to vector<8xf32>
    %622 = vector.shape_cast %621 : vector<8xf32> to vector<8x1xf32>
    %cst_227 = arith.constant 1.000000e+00 : f32
    %623 = vector.broadcast %cst_227 : f32 to vector<8x1xf32>
    %624 = arith.subf %622, %623 : vector<8x1xf32>
    %cst_228 = arith.constant 0.000000e+00 : f32
    %625 = vector.broadcast %cst_228 : f32 to vector<8x1xf32>
    %626 = arith.cmpf ogt, %624, %625 : vector<8x1xf32>
    %627 = arith.select %626, %616, %612 : vector<8x1xi1>, vector<8x1xf32>
    %628 = arith.select %626, %613, %616 : vector<8x1xi1>, vector<8x1xf32>
    %629 = arith.addf %627, %628 : vector<8x1xf32>
    %cst_229 = arith.constant 5.000000e-01 : f32
    %630 = vector.broadcast %cst_229 : f32 to vector<8x1xf32>
    %631 = arith.mulf %630, %629 : vector<8x1xf32>
    %632 = vector.broadcast %631 : vector<8x1xf32> to vector<8x24xf32>
    %633 = arith.subf %504, %632 : vector<8x24xf32>
    %cst_230 = arith.constant 0.000000e+00 : f32
    %634 = vector.broadcast %cst_230 : f32 to vector<8x24xf32>
    %635 = arith.maximumf %633, %634 : vector<8x24xf32>
    %cst_231 = arith.constant dense<0.000000e+00> : vector<8xf32>
    %636 = vector.multi_reduction <add>, %635, %cst_231 [1] : vector<8x24xf32> to vector<8xf32>
    %637 = vector.shape_cast %636 : vector<8xf32> to vector<8x1xf32>
    %cst_232 = arith.constant 1.000000e+00 : f32
    %638 = vector.broadcast %cst_232 : f32 to vector<8x1xf32>
    %639 = arith.subf %637, %638 : vector<8x1xf32>
    %cst_233 = arith.constant 0.000000e+00 : f32
    %640 = vector.broadcast %cst_233 : f32 to vector<8x1xf32>
    %641 = arith.cmpf ogt, %639, %640 : vector<8x1xf32>
    %642 = arith.select %641, %631, %627 : vector<8x1xi1>, vector<8x1xf32>
    %643 = arith.select %641, %628, %631 : vector<8x1xi1>, vector<8x1xf32>
    %644 = arith.addf %642, %643 : vector<8x1xf32>
    %cst_234 = arith.constant 5.000000e-01 : f32
    %645 = vector.broadcast %cst_234 : f32 to vector<8x1xf32>
    %646 = arith.mulf %645, %644 : vector<8x1xf32>
    %647 = vector.broadcast %646 : vector<8x1xf32> to vector<8x24xf32>
    %648 = arith.subf %504, %647 : vector<8x24xf32>
    %cst_235 = arith.constant 0.000000e+00 : f32
    %649 = vector.broadcast %cst_235 : f32 to vector<8x24xf32>
    %650 = arith.maximumf %648, %649 : vector<8x24xf32>
    %cst_236 = arith.constant dense<0.000000e+00> : vector<8xf32>
    %651 = vector.multi_reduction <add>, %650, %cst_236 [1] : vector<8x24xf32> to vector<8xf32>
    %652 = vector.shape_cast %651 : vector<8xf32> to vector<8x1xf32>
    %cst_237 = arith.constant 1.000000e+00 : f32
    %653 = vector.broadcast %cst_237 : f32 to vector<8x1xf32>
    %654 = arith.subf %652, %653 : vector<8x1xf32>
    %cst_238 = arith.constant 0.000000e+00 : f32
    %655 = vector.broadcast %cst_238 : f32 to vector<8x1xf32>
    %656 = arith.cmpf ogt, %654, %655 : vector<8x1xf32>
    %657 = arith.select %656, %646, %642 : vector<8x1xi1>, vector<8x1xf32>
    %658 = arith.select %656, %643, %646 : vector<8x1xi1>, vector<8x1xf32>
    %659 = arith.addf %657, %658 : vector<8x1xf32>
    %cst_239 = arith.constant 5.000000e-01 : f32
    %660 = vector.broadcast %cst_239 : f32 to vector<8x1xf32>
    %661 = arith.mulf %660, %659 : vector<8x1xf32>
    %662 = vector.broadcast %661 : vector<8x1xf32> to vector<8x24xf32>
    %663 = arith.subf %504, %662 : vector<8x24xf32>
    %cst_240 = arith.constant 0.000000e+00 : f32
    %664 = vector.broadcast %cst_240 : f32 to vector<8x24xf32>
    %665 = arith.maximumf %663, %664 : vector<8x24xf32>
    %cst_241 = arith.constant dense<0.000000e+00> : vector<8xf32>
    %666 = vector.multi_reduction <add>, %665, %cst_241 [1] : vector<8x24xf32> to vector<8xf32>
    %667 = vector.shape_cast %666 : vector<8xf32> to vector<8x1xf32>
    %cst_242 = arith.constant 1.000000e+00 : f32
    %668 = vector.broadcast %cst_242 : f32 to vector<8x1xf32>
    %669 = arith.subf %667, %668 : vector<8x1xf32>
    %cst_243 = arith.constant 0.000000e+00 : f32
    %670 = vector.broadcast %cst_243 : f32 to vector<8x1xf32>
    %671 = arith.cmpf ogt, %669, %670 : vector<8x1xf32>
    %672 = arith.select %671, %661, %657 : vector<8x1xi1>, vector<8x1xf32>
    %673 = arith.select %671, %658, %661 : vector<8x1xi1>, vector<8x1xf32>
    %674 = arith.addf %672, %673 : vector<8x1xf32>
    %cst_244 = arith.constant 5.000000e-01 : f32
    %675 = vector.broadcast %cst_244 : f32 to vector<8x1xf32>
    %676 = arith.mulf %675, %674 : vector<8x1xf32>
    %677 = vector.broadcast %676 : vector<8x1xf32> to vector<8x24xf32>
    %678 = arith.subf %504, %677 : vector<8x24xf32>
    %cst_245 = arith.constant 0.000000e+00 : f32
    %679 = vector.broadcast %cst_245 : f32 to vector<8x24xf32>
    %680 = arith.maximumf %678, %679 : vector<8x24xf32>
    %cst_246 = arith.constant dense<0.000000e+00> : vector<8xf32>
    %681 = vector.multi_reduction <add>, %680, %cst_246 [1] : vector<8x24xf32> to vector<8xf32>
    %682 = vector.shape_cast %681 : vector<8xf32> to vector<8x1xf32>
    %cst_247 = arith.constant 1.000000e+00 : f32
    %683 = vector.broadcast %cst_247 : f32 to vector<8x1xf32>
    %684 = arith.subf %682, %683 : vector<8x1xf32>
    %cst_248 = arith.constant 0.000000e+00 : f32
    %685 = vector.broadcast %cst_248 : f32 to vector<8x1xf32>
    %686 = arith.cmpf ogt, %684, %685 : vector<8x1xf32>
    %687 = arith.select %686, %676, %672 : vector<8x1xi1>, vector<8x1xf32>
    %688 = arith.select %686, %673, %676 : vector<8x1xi1>, vector<8x1xf32>
    %689 = arith.addf %687, %688 : vector<8x1xf32>
    %cst_249 = arith.constant 5.000000e-01 : f32
    %690 = vector.broadcast %cst_249 : f32 to vector<8x1xf32>
    %691 = arith.mulf %690, %689 : vector<8x1xf32>
    %692 = vector.broadcast %691 : vector<8x1xf32> to vector<8x24xf32>
    %693 = arith.subf %504, %692 : vector<8x24xf32>
    %cst_250 = arith.constant 0.000000e+00 : f32
    %694 = vector.broadcast %cst_250 : f32 to vector<8x24xf32>
    %695 = arith.maximumf %693, %694 : vector<8x24xf32>
    %cst_251 = arith.constant dense<0.000000e+00> : vector<8xf32>
    %696 = vector.multi_reduction <add>, %695, %cst_251 [1] : vector<8x24xf32> to vector<8xf32>
    %697 = vector.shape_cast %696 : vector<8xf32> to vector<8x1xf32>
    %cst_252 = arith.constant 1.000000e+00 : f32
    %698 = vector.broadcast %cst_252 : f32 to vector<8x1xf32>
    %699 = arith.subf %697, %698 : vector<8x1xf32>
    %cst_253 = arith.constant 0.000000e+00 : f32
    %700 = vector.broadcast %cst_253 : f32 to vector<8x1xf32>
    %701 = arith.cmpf ogt, %699, %700 : vector<8x1xf32>
    %702 = arith.select %701, %691, %687 : vector<8x1xi1>, vector<8x1xf32>
    %703 = arith.select %701, %688, %691 : vector<8x1xi1>, vector<8x1xf32>
    %704 = arith.addf %702, %703 : vector<8x1xf32>
    %cst_254 = arith.constant 5.000000e-01 : f32
    %705 = vector.broadcast %cst_254 : f32 to vector<8x1xf32>
    %706 = arith.mulf %705, %704 : vector<8x1xf32>
    %707 = vector.broadcast %706 : vector<8x1xf32> to vector<8x24xf32>
    %708 = arith.subf %504, %707 : vector<8x24xf32>
    %cst_255 = arith.constant 0.000000e+00 : f32
    %709 = vector.broadcast %cst_255 : f32 to vector<8x24xf32>
    %710 = arith.maximumf %708, %709 : vector<8x24xf32>
    %cst_256 = arith.constant dense<0.000000e+00> : vector<8xf32>
    %711 = vector.multi_reduction <add>, %710, %cst_256 [1] : vector<8x24xf32> to vector<8xf32>
    %712 = vector.shape_cast %711 : vector<8xf32> to vector<8x1xf32>
    %cst_257 = arith.constant 1.000000e+00 : f32
    %713 = vector.broadcast %cst_257 : f32 to vector<8x1xf32>
    %714 = arith.subf %712, %713 : vector<8x1xf32>
    %cst_258 = arith.constant 0.000000e+00 : f32
    %715 = vector.broadcast %cst_258 : f32 to vector<8x1xf32>
    %716 = arith.cmpf ogt, %714, %715 : vector<8x1xf32>
    %717 = arith.select %716, %706, %702 : vector<8x1xi1>, vector<8x1xf32>
    %718 = arith.select %716, %703, %706 : vector<8x1xi1>, vector<8x1xf32>
    %719 = arith.addf %717, %718 : vector<8x1xf32>
    %cst_259 = arith.constant 5.000000e-01 : f32
    %720 = vector.broadcast %cst_259 : f32 to vector<8x1xf32>
    %721 = arith.mulf %720, %719 : vector<8x1xf32>
    %722 = vector.broadcast %721 : vector<8x1xf32> to vector<8x24xf32>
    %723 = arith.subf %504, %722 : vector<8x24xf32>
    %cst_260 = arith.constant 0.000000e+00 : f32
    %724 = vector.broadcast %cst_260 : f32 to vector<8x24xf32>
    %725 = arith.maximumf %723, %724 : vector<8x24xf32>
    %cst_261 = arith.constant dense<0.000000e+00> : vector<8xf32>
    %726 = vector.multi_reduction <add>, %725, %cst_261 [1] : vector<8x24xf32> to vector<8xf32>
    %727 = vector.shape_cast %726 : vector<8xf32> to vector<8x1xf32>
    %cst_262 = arith.constant 1.000000e+00 : f32
    %728 = vector.broadcast %cst_262 : f32 to vector<8x1xf32>
    %729 = arith.subf %727, %728 : vector<8x1xf32>
    %cst_263 = arith.constant 0.000000e+00 : f32
    %730 = vector.broadcast %cst_263 : f32 to vector<8x1xf32>
    %731 = arith.cmpf ogt, %729, %730 : vector<8x1xf32>
    %732 = arith.select %731, %721, %717 : vector<8x1xi1>, vector<8x1xf32>
    %733 = arith.select %731, %718, %721 : vector<8x1xi1>, vector<8x1xf32>
    %734 = arith.addf %732, %733 : vector<8x1xf32>
    %cst_264 = arith.constant 5.000000e-01 : f32
    %735 = vector.broadcast %cst_264 : f32 to vector<8x1xf32>
    %736 = arith.mulf %735, %734 : vector<8x1xf32>
    %737 = vector.broadcast %736 : vector<8x1xf32> to vector<8x24xf32>
    %738 = arith.subf %504, %737 : vector<8x24xf32>
    %cst_265 = arith.constant 0.000000e+00 : f32
    %739 = vector.broadcast %cst_265 : f32 to vector<8x24xf32>
    %740 = arith.maximumf %738, %739 : vector<8x24xf32>
    %cst_266 = arith.constant dense<0.000000e+00> : vector<8xf32>
    %741 = vector.multi_reduction <add>, %740, %cst_266 [1] : vector<8x24xf32> to vector<8xf32>
    %742 = vector.shape_cast %741 : vector<8xf32> to vector<8x1xf32>
    %cst_267 = arith.constant 1.000000e+00 : f32
    %743 = vector.broadcast %cst_267 : f32 to vector<8x1xf32>
    %744 = arith.subf %742, %743 : vector<8x1xf32>
    %cst_268 = arith.constant 0.000000e+00 : f32
    %745 = vector.broadcast %cst_268 : f32 to vector<8x1xf32>
    %746 = arith.cmpf ogt, %744, %745 : vector<8x1xf32>
    %747 = arith.select %746, %736, %732 : vector<8x1xi1>, vector<8x1xf32>
    %748 = arith.select %746, %733, %736 : vector<8x1xi1>, vector<8x1xf32>
    %749 = arith.addf %747, %748 : vector<8x1xf32>
    %cst_269 = arith.constant 5.000000e-01 : f32
    %750 = vector.broadcast %cst_269 : f32 to vector<8x1xf32>
    %751 = arith.mulf %750, %749 : vector<8x1xf32>
    %752 = vector.broadcast %751 : vector<8x1xf32> to vector<8x24xf32>
    %753 = arith.subf %504, %752 : vector<8x24xf32>
    %cst_270 = arith.constant 0.000000e+00 : f32
    %754 = vector.broadcast %cst_270 : f32 to vector<8x24xf32>
    %755 = arith.maximumf %753, %754 : vector<8x24xf32>
    %cst_271 = arith.constant dense<0.000000e+00> : vector<8xf32>
    %756 = vector.multi_reduction <add>, %755, %cst_271 [1] : vector<8x24xf32> to vector<8xf32>
    %757 = vector.shape_cast %756 : vector<8xf32> to vector<8x1xf32>
    %cst_272 = arith.constant 1.000000e+00 : f32
    %758 = vector.broadcast %cst_272 : f32 to vector<8x1xf32>
    %759 = arith.subf %757, %758 : vector<8x1xf32>
    %cst_273 = arith.constant 0.000000e+00 : f32
    %760 = vector.broadcast %cst_273 : f32 to vector<8x1xf32>
    %761 = arith.cmpf ogt, %759, %760 : vector<8x1xf32>
    %762 = arith.select %761, %751, %747 : vector<8x1xi1>, vector<8x1xf32>
    %763 = arith.select %761, %748, %751 : vector<8x1xi1>, vector<8x1xf32>
    %764 = arith.addf %762, %763 : vector<8x1xf32>
    %cst_274 = arith.constant 5.000000e-01 : f32
    %765 = vector.broadcast %cst_274 : f32 to vector<8x1xf32>
    %766 = arith.mulf %765, %764 : vector<8x1xf32>
    %767 = vector.broadcast %766 : vector<8x1xf32> to vector<8x24xf32>
    %768 = arith.subf %504, %767 : vector<8x24xf32>
    %cst_275 = arith.constant 0.000000e+00 : f32
    %769 = vector.broadcast %cst_275 : f32 to vector<8x24xf32>
    %770 = arith.maximumf %768, %769 : vector<8x24xf32>
    %cst_276 = arith.constant dense<0.000000e+00> : vector<8xf32>
    %771 = vector.multi_reduction <add>, %770, %cst_276 [1] : vector<8x24xf32> to vector<8xf32>
    %772 = vector.shape_cast %771 : vector<8xf32> to vector<8x1xf32>
    %cst_277 = arith.constant 1.000000e+00 : f32
    %773 = vector.broadcast %cst_277 : f32 to vector<8x1xf32>
    %774 = arith.subf %772, %773 : vector<8x1xf32>
    %cst_278 = arith.constant 0.000000e+00 : f32
    %775 = vector.broadcast %cst_278 : f32 to vector<8x1xf32>
    %776 = arith.cmpf ogt, %774, %775 : vector<8x1xf32>
    %777 = arith.select %776, %766, %762 : vector<8x1xi1>, vector<8x1xf32>
    %778 = arith.select %776, %763, %766 : vector<8x1xi1>, vector<8x1xf32>
    %779 = arith.addf %777, %778 : vector<8x1xf32>
    %cst_279 = arith.constant 5.000000e-01 : f32
    %780 = vector.broadcast %cst_279 : f32 to vector<8x1xf32>
    %781 = arith.mulf %780, %779 : vector<8x1xf32>
    %782 = vector.broadcast %781 : vector<8x1xf32> to vector<8x24xf32>
    %783 = arith.subf %504, %782 : vector<8x24xf32>
    %cst_280 = arith.constant 0.000000e+00 : f32
    %784 = vector.broadcast %cst_280 : f32 to vector<8x24xf32>
    %785 = arith.maximumf %783, %784 : vector<8x24xf32>
    %cst_281 = arith.constant dense<0.000000e+00> : vector<8xf32>
    %786 = vector.multi_reduction <add>, %785, %cst_281 [1] : vector<8x24xf32> to vector<8xf32>
    %787 = vector.shape_cast %786 : vector<8xf32> to vector<8x1xf32>
    %cst_282 = arith.constant 1.000000e+00 : f32
    %788 = vector.broadcast %cst_282 : f32 to vector<8x1xf32>
    %789 = arith.subf %787, %788 : vector<8x1xf32>
    %cst_283 = arith.constant 0.000000e+00 : f32
    %790 = vector.broadcast %cst_283 : f32 to vector<8x1xf32>
    %791 = arith.cmpf ogt, %789, %790 : vector<8x1xf32>
    %792 = arith.select %791, %781, %777 : vector<8x1xi1>, vector<8x1xf32>
    %793 = arith.select %791, %778, %781 : vector<8x1xi1>, vector<8x1xf32>
    %794 = arith.addf %792, %793 : vector<8x1xf32>
    %cst_284 = arith.constant 5.000000e-01 : f32
    %795 = vector.broadcast %cst_284 : f32 to vector<8x1xf32>
    %796 = arith.mulf %795, %794 : vector<8x1xf32>
    %797 = vector.broadcast %796 : vector<8x1xf32> to vector<8x24xf32>
    %798 = arith.subf %504, %797 : vector<8x24xf32>
    %cst_285 = arith.constant 0.000000e+00 : f32
    %799 = vector.broadcast %cst_285 : f32 to vector<8x24xf32>
    %800 = arith.maximumf %798, %799 : vector<8x24xf32>
    %cst_286 = arith.constant dense<0.000000e+00> : vector<8xf32>
    %801 = vector.multi_reduction <add>, %800, %cst_286 [1] : vector<8x24xf32> to vector<8xf32>
    %802 = vector.shape_cast %801 : vector<8xf32> to vector<8x1xf32>
    %cst_287 = arith.constant 1.000000e+00 : f32
    %803 = vector.broadcast %cst_287 : f32 to vector<8x1xf32>
    %804 = arith.subf %802, %803 : vector<8x1xf32>
    %cst_288 = arith.constant 0.000000e+00 : f32
    %805 = vector.broadcast %cst_288 : f32 to vector<8x1xf32>
    %806 = arith.cmpf ogt, %804, %805 : vector<8x1xf32>
    %807 = arith.select %806, %796, %792 : vector<8x1xi1>, vector<8x1xf32>
    %808 = arith.select %806, %793, %796 : vector<8x1xi1>, vector<8x1xf32>
    %809 = arith.addf %807, %808 : vector<8x1xf32>
    %cst_289 = arith.constant 5.000000e-01 : f32
    %810 = vector.broadcast %cst_289 : f32 to vector<8x1xf32>
    %811 = arith.mulf %810, %809 : vector<8x1xf32>
    %812 = vector.broadcast %811 : vector<8x1xf32> to vector<8x24xf32>
    %813 = arith.subf %504, %812 : vector<8x24xf32>
    %cst_290 = arith.constant 0.000000e+00 : f32
    %814 = vector.broadcast %cst_290 : f32 to vector<8x24xf32>
    %815 = arith.maximumf %813, %814 : vector<8x24xf32>
    %cst_291 = arith.constant dense<0.000000e+00> : vector<8xf32>
    %816 = vector.multi_reduction <add>, %815, %cst_291 [1] : vector<8x24xf32> to vector<8xf32>
    %817 = vector.shape_cast %816 : vector<8xf32> to vector<8x1xf32>
    %cst_292 = arith.constant 1.000000e+00 : f32
    %818 = vector.broadcast %cst_292 : f32 to vector<8x1xf32>
    %819 = arith.subf %817, %818 : vector<8x1xf32>
    %cst_293 = arith.constant 0.000000e+00 : f32
    %820 = vector.broadcast %cst_293 : f32 to vector<8x1xf32>
    %821 = arith.cmpf ogt, %819, %820 : vector<8x1xf32>
    %822 = arith.select %821, %811, %807 : vector<8x1xi1>, vector<8x1xf32>
    %823 = arith.select %821, %808, %811 : vector<8x1xi1>, vector<8x1xf32>
    %824 = arith.addf %822, %823 : vector<8x1xf32>
    %cst_294 = arith.constant 5.000000e-01 : f32
    %825 = vector.broadcast %cst_294 : f32 to vector<8x1xf32>
    %826 = arith.mulf %825, %824 : vector<8x1xf32>
    %827 = vector.broadcast %826 : vector<8x1xf32> to vector<8x24xf32>
    %828 = arith.subf %504, %827 : vector<8x24xf32>
    %cst_295 = arith.constant 0.000000e+00 : f32
    %829 = vector.broadcast %cst_295 : f32 to vector<8x24xf32>
    %830 = arith.maximumf %828, %829 : vector<8x24xf32>
    %cst_296 = arith.constant dense<0.000000e+00> : vector<8xf32>
    %831 = vector.multi_reduction <add>, %830, %cst_296 [1] : vector<8x24xf32> to vector<8xf32>
    %832 = vector.shape_cast %831 : vector<8xf32> to vector<8x1xf32>
    %cst_297 = arith.constant 1.000000e+00 : f32
    %833 = vector.broadcast %cst_297 : f32 to vector<8x1xf32>
    %834 = arith.subf %832, %833 : vector<8x1xf32>
    %cst_298 = arith.constant 0.000000e+00 : f32
    %835 = vector.broadcast %cst_298 : f32 to vector<8x1xf32>
    %836 = arith.cmpf ogt, %834, %835 : vector<8x1xf32>
    %837 = arith.select %836, %826, %822 : vector<8x1xi1>, vector<8x1xf32>
    %838 = arith.select %836, %823, %826 : vector<8x1xi1>, vector<8x1xf32>
    %839 = arith.addf %837, %838 : vector<8x1xf32>
    %cst_299 = arith.constant 5.000000e-01 : f32
    %840 = vector.broadcast %cst_299 : f32 to vector<8x1xf32>
    %841 = arith.mulf %840, %839 : vector<8x1xf32>
    %842 = vector.broadcast %841 : vector<8x1xf32> to vector<8x24xf32>
    %843 = arith.subf %504, %842 : vector<8x24xf32>
    %cst_300 = arith.constant 0.000000e+00 : f32
    %844 = vector.broadcast %cst_300 : f32 to vector<8x24xf32>
    %845 = arith.maximumf %843, %844 : vector<8x24xf32>
    %cst_301 = arith.constant dense<0.000000e+00> : vector<8xf32>
    %846 = vector.multi_reduction <add>, %845, %cst_301 [1] : vector<8x24xf32> to vector<8xf32>
    %847 = vector.shape_cast %846 : vector<8xf32> to vector<8x1xf32>
    %cst_302 = arith.constant 1.000000e+00 : f32
    %848 = vector.broadcast %cst_302 : f32 to vector<8x1xf32>
    %849 = arith.subf %847, %848 : vector<8x1xf32>
    %cst_303 = arith.constant 0.000000e+00 : f32
    %850 = vector.broadcast %cst_303 : f32 to vector<8x1xf32>
    %851 = arith.cmpf ogt, %849, %850 : vector<8x1xf32>
    %852 = arith.select %851, %841, %837 : vector<8x1xi1>, vector<8x1xf32>
    %853 = arith.select %851, %838, %841 : vector<8x1xi1>, vector<8x1xf32>
    %854 = arith.addf %852, %853 : vector<8x1xf32>
    %cst_304 = arith.constant 5.000000e-01 : f32
    %855 = vector.broadcast %cst_304 : f32 to vector<8x1xf32>
    %856 = arith.mulf %855, %854 : vector<8x1xf32>
    %857 = vector.broadcast %856 : vector<8x1xf32> to vector<8x24xf32>
    %858 = arith.subf %504, %857 : vector<8x24xf32>
    %cst_305 = arith.constant 0.000000e+00 : f32
    %859 = vector.broadcast %cst_305 : f32 to vector<8x24xf32>
    %860 = arith.maximumf %858, %859 : vector<8x24xf32>
    %cst_306 = arith.constant dense<0.000000e+00> : vector<8xf32>
    %861 = vector.multi_reduction <add>, %860, %cst_306 [1] : vector<8x24xf32> to vector<8xf32>
    %862 = vector.shape_cast %861 : vector<8xf32> to vector<8x1xf32>
    %cst_307 = arith.constant 1.000000e+00 : f32
    %863 = vector.broadcast %cst_307 : f32 to vector<8x1xf32>
    %864 = arith.subf %862, %863 : vector<8x1xf32>
    %cst_308 = arith.constant 0.000000e+00 : f32
    %865 = vector.broadcast %cst_308 : f32 to vector<8x1xf32>
    %866 = arith.cmpf ogt, %864, %865 : vector<8x1xf32>
    %867 = arith.select %866, %856, %852 : vector<8x1xi1>, vector<8x1xf32>
    %868 = arith.select %866, %853, %856 : vector<8x1xi1>, vector<8x1xf32>
    %869 = arith.addf %867, %868 : vector<8x1xf32>
    %cst_309 = arith.constant 5.000000e-01 : f32
    %870 = vector.broadcast %cst_309 : f32 to vector<8x1xf32>
    %871 = arith.mulf %870, %869 : vector<8x1xf32>
    %872 = vector.broadcast %871 : vector<8x1xf32> to vector<8x24xf32>
    %873 = arith.subf %504, %872 : vector<8x24xf32>
    %cst_310 = arith.constant 0.000000e+00 : f32
    %874 = vector.broadcast %cst_310 : f32 to vector<8x24xf32>
    %875 = arith.maximumf %873, %874 : vector<8x24xf32>
    %cst_311 = arith.constant dense<0.000000e+00> : vector<8xf32>
    %876 = vector.multi_reduction <add>, %875, %cst_311 [1] : vector<8x24xf32> to vector<8xf32>
    %877 = vector.shape_cast %876 : vector<8xf32> to vector<8x1xf32>
    %cst_312 = arith.constant 1.000000e+00 : f32
    %878 = vector.broadcast %cst_312 : f32 to vector<8x1xf32>
    %879 = arith.subf %877, %878 : vector<8x1xf32>
    %cst_313 = arith.constant 0.000000e+00 : f32
    %880 = vector.broadcast %cst_313 : f32 to vector<8x1xf32>
    %881 = arith.cmpf ogt, %879, %880 : vector<8x1xf32>
    %882 = arith.select %881, %871, %867 : vector<8x1xi1>, vector<8x1xf32>
    %883 = arith.select %881, %868, %871 : vector<8x1xi1>, vector<8x1xf32>
    %884 = arith.addf %882, %883 : vector<8x1xf32>
    %cst_314 = arith.constant 5.000000e-01 : f32
    %885 = vector.broadcast %cst_314 : f32 to vector<8x1xf32>
    %886 = arith.mulf %885, %884 : vector<8x1xf32>
    %887 = vector.broadcast %886 : vector<8x1xf32> to vector<8x24xf32>
    %888 = arith.subf %504, %887 : vector<8x24xf32>
    %cst_315 = arith.constant 0.000000e+00 : f32
    %889 = vector.broadcast %cst_315 : f32 to vector<8x24xf32>
    %890 = arith.maximumf %888, %889 : vector<8x24xf32>
    %cst_316 = arith.constant dense<0.000000e+00> : vector<8xf32>
    %891 = vector.multi_reduction <add>, %890, %cst_316 [1] : vector<8x24xf32> to vector<8xf32>
    %892 = vector.shape_cast %891 : vector<8xf32> to vector<8x1xf32>
    %cst_317 = arith.constant 1.000000e+00 : f32
    %893 = vector.broadcast %cst_317 : f32 to vector<8x1xf32>
    %894 = arith.subf %892, %893 : vector<8x1xf32>
    %cst_318 = arith.constant 0.000000e+00 : f32
    %895 = vector.broadcast %cst_318 : f32 to vector<8x1xf32>
    %896 = arith.cmpf ogt, %894, %895 : vector<8x1xf32>
    %897 = arith.select %896, %886, %882 : vector<8x1xi1>, vector<8x1xf32>
    %898 = arith.select %896, %883, %886 : vector<8x1xi1>, vector<8x1xf32>
    %899 = arith.addf %897, %898 : vector<8x1xf32>
    %cst_319 = arith.constant 5.000000e-01 : f32
    %900 = vector.broadcast %cst_319 : f32 to vector<8x1xf32>
    %901 = arith.mulf %900, %899 : vector<8x1xf32>
    %902 = vector.broadcast %901 : vector<8x1xf32> to vector<8x24xf32>
    %903 = arith.subf %504, %902 : vector<8x24xf32>
    %cst_320 = arith.constant 0.000000e+00 : f32
    %904 = vector.broadcast %cst_320 : f32 to vector<8x24xf32>
    %905 = arith.maximumf %903, %904 : vector<8x24xf32>
    %cst_321 = arith.constant dense<0.000000e+00> : vector<8xf32>
    %906 = vector.multi_reduction <add>, %905, %cst_321 [1] : vector<8x24xf32> to vector<8xf32>
    %907 = vector.shape_cast %906 : vector<8xf32> to vector<8x1xf32>
    %cst_322 = arith.constant 1.000000e+00 : f32
    %908 = vector.broadcast %cst_322 : f32 to vector<8x1xf32>
    %909 = arith.subf %907, %908 : vector<8x1xf32>
    %cst_323 = arith.constant 0.000000e+00 : f32
    %910 = vector.broadcast %cst_323 : f32 to vector<8x1xf32>
    %911 = arith.cmpf ogt, %909, %910 : vector<8x1xf32>
    %912 = arith.select %911, %901, %897 : vector<8x1xi1>, vector<8x1xf32>
    %913 = arith.select %911, %898, %901 : vector<8x1xi1>, vector<8x1xf32>
    %914 = arith.addf %912, %913 : vector<8x1xf32>
    %cst_324 = arith.constant 5.000000e-01 : f32
    %915 = vector.broadcast %cst_324 : f32 to vector<8x1xf32>
    %916 = arith.mulf %915, %914 : vector<8x1xf32>
    %917 = vector.broadcast %916 : vector<8x1xf32> to vector<8x24xf32>
    %918 = arith.subf %504, %917 : vector<8x24xf32>
    %cst_325 = arith.constant 0.000000e+00 : f32
    %919 = vector.broadcast %cst_325 : f32 to vector<8x24xf32>
    %920 = arith.maximumf %918, %919 : vector<8x24xf32>
    %cst_326 = arith.constant dense<0.000000e+00> : vector<8xf32>
    %921 = vector.multi_reduction <add>, %920, %cst_326 [1] : vector<8x24xf32> to vector<8xf32>
    %922 = vector.shape_cast %921 : vector<8xf32> to vector<8x1xf32>
    %cst_327 = arith.constant 1.000000e+00 : f32
    %923 = vector.broadcast %cst_327 : f32 to vector<8x1xf32>
    %924 = arith.subf %922, %923 : vector<8x1xf32>
    %cst_328 = arith.constant 0.000000e+00 : f32
    %925 = vector.broadcast %cst_328 : f32 to vector<8x1xf32>
    %926 = arith.cmpf ogt, %924, %925 : vector<8x1xf32>
    %927 = arith.select %926, %916, %912 : vector<8x1xi1>, vector<8x1xf32>
    %928 = arith.select %926, %913, %916 : vector<8x1xi1>, vector<8x1xf32>
    %929 = arith.addf %927, %928 : vector<8x1xf32>
    %cst_329 = arith.constant 5.000000e-01 : f32
    %930 = vector.broadcast %cst_329 : f32 to vector<8x1xf32>
    %931 = arith.mulf %930, %929 : vector<8x1xf32>
    %932 = vector.broadcast %931 : vector<8x1xf32> to vector<8x24xf32>
    %933 = arith.subf %504, %932 : vector<8x24xf32>
    %cst_330 = arith.constant 0.000000e+00 : f32
    %934 = vector.broadcast %cst_330 : f32 to vector<8x24xf32>
    %935 = arith.maximumf %933, %934 : vector<8x24xf32>
    %cst_331 = arith.constant dense<0.000000e+00> : vector<8xf32>
    %936 = vector.multi_reduction <add>, %935, %cst_331 [1] : vector<8x24xf32> to vector<8xf32>
    %937 = vector.shape_cast %936 : vector<8xf32> to vector<8x1xf32>
    %cst_332 = arith.constant 1.000000e+00 : f32
    %938 = vector.broadcast %cst_332 : f32 to vector<8x1xf32>
    %939 = arith.subf %937, %938 : vector<8x1xf32>
    %cst_333 = arith.constant 0.000000e+00 : f32
    %940 = vector.broadcast %cst_333 : f32 to vector<8x1xf32>
    %941 = arith.cmpf ogt, %939, %940 : vector<8x1xf32>
    %942 = arith.select %941, %931, %927 : vector<8x1xi1>, vector<8x1xf32>
    %943 = arith.select %941, %928, %931 : vector<8x1xi1>, vector<8x1xf32>
    %944 = arith.addf %942, %943 : vector<8x1xf32>
    %cst_334 = arith.constant 5.000000e-01 : f32
    %945 = vector.broadcast %cst_334 : f32 to vector<8x1xf32>
    %946 = arith.mulf %945, %944 : vector<8x1xf32>
    %947 = vector.broadcast %946 : vector<8x1xf32> to vector<8x24xf32>
    %948 = arith.subf %504, %947 : vector<8x24xf32>
    %cst_335 = arith.constant 0.000000e+00 : f32
    %949 = vector.broadcast %cst_335 : f32 to vector<8x24xf32>
    %950 = arith.maximumf %948, %949 : vector<8x24xf32>
    %cst_336 = arith.constant dense<0.000000e+00> : vector<8xf32>
    %951 = vector.multi_reduction <add>, %950, %cst_336 [1] : vector<8x24xf32> to vector<8xf32>
    %952 = vector.shape_cast %951 : vector<8xf32> to vector<8x1xf32>
    %cst_337 = arith.constant 1.000000e+00 : f32
    %953 = vector.broadcast %cst_337 : f32 to vector<8x1xf32>
    %954 = arith.subf %952, %953 : vector<8x1xf32>
    %cst_338 = arith.constant 0.000000e+00 : f32
    %955 = vector.broadcast %cst_338 : f32 to vector<8x1xf32>
    %956 = arith.cmpf ogt, %954, %955 : vector<8x1xf32>
    %957 = arith.select %956, %946, %942 : vector<8x1xi1>, vector<8x1xf32>
    %958 = arith.select %956, %943, %946 : vector<8x1xi1>, vector<8x1xf32>
    %959 = arith.addf %957, %958 : vector<8x1xf32>
    %cst_339 = arith.constant 5.000000e-01 : f32
    %960 = vector.broadcast %cst_339 : f32 to vector<8x1xf32>
    %961 = arith.mulf %960, %959 : vector<8x1xf32>
    %962 = vector.broadcast %961 : vector<8x1xf32> to vector<8x24xf32>
    %963 = arith.cmpf ogt, %504, %962 : vector<8x24xf32>
    %964 = arith.extui %963 : vector<8x24xi1> to vector<8x24xi32>
    %965 = arith.sitofp %964 : vector<8x24xi32> to vector<8x24xf32>
    %cst_340 = arith.constant dense<0.000000e+00> : vector<8xf32>
    %966 = vector.multi_reduction <add>, %965, %cst_340 [1] : vector<8x24xf32> to vector<8xf32>
    %967 = vector.shape_cast %966 : vector<8xf32> to vector<8x1xf32>
    %968 = arith.mulf %504, %965 : vector<8x24xf32>
    %cst_341 = arith.constant dense<0.000000e+00> : vector<8xf32>
    %969 = vector.multi_reduction <add>, %968, %cst_341 [1] : vector<8x24xf32> to vector<8xf32>
    %970 = vector.shape_cast %969 : vector<8xf32> to vector<8x1xf32>
    %cst_342 = arith.constant 1.000000e+00 : f32
    %971 = vector.broadcast %cst_342 : f32 to vector<8x1xf32>
    %972 = arith.subf %970, %971 : vector<8x1xf32>
    %973 = arith.divf %972, %967 : vector<8x1xf32>
    %974 = vector.broadcast %973 : vector<8x1xf32> to vector<8x24xf32>
    %975 = arith.subf %504, %974 : vector<8x24xf32>
    %cst_343 = arith.constant 0.000000e+00 : f32
    %976 = vector.broadcast %cst_343 : f32 to vector<8x24xf32>
    %977 = arith.maximumf %975, %976 : vector<8x24xf32>
    %c0_344 = arith.constant 0 : index
    %c0_345 = arith.constant 0 : index
    %978 = vector.load %arg24[%c0_344, %c0_345] : memref<8x24xf32, #tpu.memory_space<vmem>>, vector<8x24xf32>
    tpu.vector_store %arg24[%c0_344, %c0_345], %977 {strides = array<i32>} : memref<8x24xf32, #tpu.memory_space<vmem>>, vector<8x24xf32>,
    %979 = arith.mulf %1, %977 : vector<8x24xf32>
    %c0_346 = arith.constant 0 : index
    %c0_347 = arith.constant 0 : index
    %980 = vector.load %arg15[%c0_346, %c0_347] : memref<24x32xf32, #tpu.memory_space<vmem>>, vector<24x32xf32>
    %cst_348 = arith.constant dense<0.000000e+00> : vector<8x32xf32>
    %981 = tpu.matmul %979, %980, %cst_348 {dimension_numbers = #tpu.dot_dimension_numbers<[1], [0], [0], [1], [0, 0, 1, 1], [], []>} : vector<8x24xf32>, vector<24x32xf32>, vector<8x32xf32> -> vector<8x32xf32>
    %c0_349 = arith.constant 0 : index
    %c0_350 = arith.constant 0 : index
    %982 = vector.load %arg16[%c0_349, %c0_350] : memref<1x32xf32, #tpu.memory_space<vmem>>, vector<1x32xf32>
    %983 = vector.broadcast %982 : vector<1x32xf32> to vector<8x32xf32>
    %984 = arith.addf %981, %983 : vector<8x32xf32>
    %cst_351 = arith.constant 0.000000e+00 : f32
    %985 = vector.broadcast %cst_351 : f32 to vector<8x32xf32>
    %986 = arith.maximumf %984, %985 : vector<8x32xf32>
    %c0_352 = arith.constant 0 : index
    %c0_353 = arith.constant 0 : index
    %987 = vector.load %arg5[%c0_352, %c0_353] : memref<8x32xf32, #tpu.memory_space<vmem>>, vector<8x32xf32>
    %988 = arith.mulf %986, %987 : vector<8x32xf32>
    %c0_354 = arith.constant 0 : index
    %c0_355 = arith.constant 0 : index
    %989 = vector.load %arg17[%c0_354, %c0_355] : memref<32x32xf32, #tpu.memory_space<vmem>>, vector<32x32xf32>
    %cst_356 = arith.constant dense<0.000000e+00> : vector<8x32xf32>
    %990 = tpu.matmul %988, %989, %cst_356 {dimension_numbers = #tpu.dot_dimension_numbers<[1], [0], [0], [1], [0, 0, 1, 1], [], []>} : vector<8x32xf32>, vector<32x32xf32>, vector<8x32xf32> -> vector<8x32xf32>
    %c0_357 = arith.constant 0 : index
    %c0_358 = arith.constant 0 : index
    %991 = vector.load %arg18[%c0_357, %c0_358] : memref<1x32xf32, #tpu.memory_space<vmem>>, vector<1x32xf32>
    %992 = vector.broadcast %991 : vector<1x32xf32> to vector<8x32xf32>
    %993 = arith.addf %990, %992 : vector<8x32xf32>
    %cst_359 = arith.constant 0.000000e+00 : f32
    %994 = vector.broadcast %cst_359 : f32 to vector<8x32xf32>
    %995 = arith.maximumf %993, %994 : vector<8x32xf32>
    %c0_360 = arith.constant 0 : index
    %c0_361 = arith.constant 0 : index
    %996 = vector.load %arg6[%c0_360, %c0_361] : memref<8x32xf32, #tpu.memory_space<vmem>>, vector<8x32xf32>
    %997 = arith.mulf %995, %996 : vector<8x32xf32>
    %c0_362 = arith.constant 0 : index
    %c0_363 = arith.constant 0 : index
    %998 = vector.load %arg19[%c0_362, %c0_363] : memref<32x8xf32, #tpu.memory_space<vmem>>, vector<32x8xf32>
    %cst_364 = arith.constant dense<0.000000e+00> : vector<8x8xf32>
    %999 = tpu.matmul %499, %998, %cst_364 {dimension_numbers = #tpu.dot_dimension_numbers<[1], [0], [0], [1], [0, 0, 1, 1], [], []>} : vector<8x32xf32>, vector<32x8xf32>, vector<8x8xf32> -> vector<8x8xf32>
    %c0_365 = arith.constant 0 : index
    %c0_366 = arith.constant 0 : index
    %1000 = vector.load %arg20[%c0_365, %c0_366] : memref<32x8xf32, #tpu.memory_space<vmem>>, vector<32x8xf32>
    %cst_367 = arith.constant dense<0.000000e+00> : vector<8x8xf32>
    %1001 = tpu.matmul %997, %1000, %cst_367 {dimension_numbers = #tpu.dot_dimension_numbers<[1], [0], [0], [1], [0, 0, 1, 1], [], []>} : vector<8x32xf32>, vector<32x8xf32>, vector<8x8xf32> -> vector<8x8xf32>
    %1002 = arith.addf %999, %1001 : vector<8x8xf32>
    %c0_368 = arith.constant 0 : index
    %c0_369 = arith.constant 0 : index
    %1003 = vector.load %arg21[%c0_368, %c0_369] : memref<1x8xf32, #tpu.memory_space<vmem>>, vector<1x8xf32>
    %1004 = vector.broadcast %1003 : vector<1x8xf32> to vector<8x8xf32>
    %1005 = arith.addf %1002, %1004 : vector<8x8xf32>
    %c0_370 = arith.constant 0 : index
    %c0_371 = arith.constant 0 : index
    %1006 = vector.load %arg22[%c0_370, %c0_371] : memref<8x8xf32, #tpu.memory_space<vmem>>, vector<8x8xf32>
    tpu.vector_store %arg22[%c0_370, %c0_371], %1005 {strides = array<i32>} : memref<8x8xf32, #tpu.memory_space<vmem>>, vector<8x8xf32>,
    return
  }
  func.func @transform_0(%arg0: i32) -> (i32, i32) {
    %c0_i32 = arith.constant 0 : i32
    %c0_i32_0 = arith.constant 0 : i32
    return %arg0, %c0_i32 : i32, i32
  }
  func.func @transform_1(%arg0: i32) -> (i32, i32) {
    %c0_i32 = arith.constant 0 : i32
    %c0_i32_0 = arith.constant 0 : i32
    return %arg0, %c0_i32 : i32, i32
  }
  func.func @transform_2(%arg0: i32) -> (i32, i32) {
    %c0_i32 = arith.constant 0 : i32
    %c0_i32_0 = arith.constant 0 : i32
    return %arg0, %c0_i32 : i32, i32
  }
  func.func @transform_3(%arg0: i32) -> (i32, i32) {
    %c0_i32 = arith.constant 0 : i32
    %c0_i32_0 = arith.constant 0 : i32
    return %arg0, %c0_i32 : i32, i32
  }
  func.func @transform_4(%arg0: i32) -> (i32, i32) {
    %c0_i32 = arith.constant 0 : i32
    %c0_i32_0 = arith.constant 0 : i32
    return %arg0, %c0_i32 : i32, i32
  }
  func.func @transform_5(%arg0: i32) -> (i32, i32) {
    %c0_i32 = arith.constant 0 : i32
    %c0_i32_0 = arith.constant 0 : i32
    return %arg0, %c0_i32 : i32, i32
  }
  func.func @transform_6(%arg0: i32) -> (i32, i32) {
    %c0_i32 = arith.constant 0 : i32
    %c0_i32_0 = arith.constant 0 : i32
    %c0_i32_1 = arith.constant 0 : i32
    return %c0_i32, %c0_i32_0 : i32, i32
  }
  func.func @transform_7(%arg0: i32) -> (i32, i32) {
    %c0_i32 = arith.constant 0 : i32
    %c0_i32_0 = arith.constant 0 : i32
    %c0_i32_1 = arith.constant 0 : i32
    return %c0_i32, %c0_i32_0 : i32, i32
  }
  func.func @transform_8(%arg0: i32) -> (i32, i32) {
    %c0_i32 = arith.constant 0 : i32
    %c0_i32_0 = arith.constant 0 : i32
    %c0_i32_1 = arith.constant 0 : i32
    return %c0_i32, %c0_i32_0 : i32, i32
  }
  func.func @transform_9(%arg0: i32) -> (i32, i32) {
    %c0_i32 = arith.constant 0 : i32
    %c0_i32_0 = arith.constant 0 : i32
    %c0_i32_1 = arith.constant 0 : i32
    return %c0_i32, %c0_i32_0 : i32, i32
  }
  func.func @transform_10(%arg0: i32) -> (i32, i32) {
    %c0_i32 = arith.constant 0 : i32
    %c0_i32_0 = arith.constant 0 : i32
    %c0_i32_1 = arith.constant 0 : i32
    return %c0_i32, %c0_i32_0 : i32, i32
  }
  func.func @transform_11(%arg0: i32) -> (i32, i32) {
    %c0_i32 = arith.constant 0 : i32
    %c0_i32_0 = arith.constant 0 : i32
    %c0_i32_1 = arith.constant 0 : i32
    return %c0_i32, %c0_i32_0 : i32, i32
  }
  func.func @transform_12(%arg0: i32) -> (i32, i32) {
    %c0_i32 = arith.constant 0 : i32
    %c0_i32_0 = arith.constant 0 : i32
    %c0_i32_1 = arith.constant 0 : i32
    return %c0_i32, %c0_i32_0 : i32, i32
  }
  func.func @transform_13(%arg0: i32) -> (i32, i32) {
    %c0_i32 = arith.constant 0 : i32
    %c0_i32_0 = arith.constant 0 : i32
    %c0_i32_1 = arith.constant 0 : i32
    return %c0_i32, %c0_i32_0 : i32, i32
  }
  func.func @transform_14(%arg0: i32) -> (i32, i32) {
    %c0_i32 = arith.constant 0 : i32
    %c0_i32_0 = arith.constant 0 : i32
    %c0_i32_1 = arith.constant 0 : i32
    return %c0_i32, %c0_i32_0 : i32, i32
  }
  func.func @transform_15(%arg0: i32) -> (i32, i32) {
    %c0_i32 = arith.constant 0 : i32
    %c0_i32_0 = arith.constant 0 : i32
    %c0_i32_1 = arith.constant 0 : i32
    return %c0_i32, %c0_i32_0 : i32, i32
  }
  func.func @transform_16(%arg0: i32) -> (i32, i32) {
    %c0_i32 = arith.constant 0 : i32
    %c0_i32_0 = arith.constant 0 : i32
    %c0_i32_1 = arith.constant 0 : i32
    return %c0_i32, %c0_i32_0 : i32, i32
  }
  func.func @transform_17(%arg0: i32) -> (i32, i32) {
    %c0_i32 = arith.constant 0 : i32
    %c0_i32_0 = arith.constant 0 : i32
    %c0_i32_1 = arith.constant 0 : i32
    return %c0_i32, %c0_i32_0 : i32, i32
  }
  func.func @transform_18(%arg0: i32) -> (i32, i32) {
    %c0_i32 = arith.constant 0 : i32
    %c0_i32_0 = arith.constant 0 : i32
    %c0_i32_1 = arith.constant 0 : i32
    return %c0_i32, %c0_i32_0 : i32, i32
  }
  func.func @transform_19(%arg0: i32) -> (i32, i32) {
    %c0_i32 = arith.constant 0 : i32
    %c0_i32_0 = arith.constant 0 : i32
    %c0_i32_1 = arith.constant 0 : i32
    return %c0_i32, %c0_i32_0 : i32, i32
  }
  func.func @transform_20(%arg0: i32) -> (i32, i32) {
    %c0_i32 = arith.constant 0 : i32
    %c0_i32_0 = arith.constant 0 : i32
    %c0_i32_1 = arith.constant 0 : i32
    return %c0_i32, %c0_i32_0 : i32, i32
  }
  func.func @transform_21(%arg0: i32) -> (i32, i32) {
    %c0_i32 = arith.constant 0 : i32
    %c0_i32_0 = arith.constant 0 : i32
    return %arg0, %c0_i32 : i32, i32
  }
  func.func @transform_22(%arg0: i32) -> (i32, i32) {
    %c0_i32 = arith.constant 0 : i32
    %c0_i32_0 = arith.constant 0 : i32
    return %arg0, %c0_i32 : i32, i32
  }
  func.func @transform_23(%arg0: i32) -> (i32, i32) {
    %c0_i32 = arith.constant 0 : i32
    %c0_i32_0 = arith.constant 0 : i32
    return %arg0, %c0_i32 : i32, i32
  }
}

</mosaic_0001>

<llo_original>
// kernel: tpu_custom_call.1
$region0: #{tpu_custom_call.1}
  #allocation0 [shape = 'u32[]', space=smem, size = 0x4, offset = 0x4, fixed_abs, tag = 'smem constant byte address 0x4 - core index']
  #allocation1 [shape = 'u32[144,128]{1,0:T(1,128)}', space=vmem, size = 0x12000, scoped, tag = 'internal scratch']
  %s0 = inlined_call_operand.hbm [shape: f32[8,16], index: 0, kind: input, shape index: {}]
  %s1 = inlined_call_operand.hbm [shape: f32[8,24], index: 1, kind: input, shape index: {}]
  %s2 = inlined_call_operand.hbm [shape: f32[8,32], index: 2, kind: input, shape index: {}]
  %s3 = inlined_call_operand.hbm [shape: f32[8,32], index: 3, kind: input, shape index: {}]
  %s4 = inlined_call_operand.hbm [shape: f32[8,32], index: 4, kind: input, shape index: {}]
  %s5 = inlined_call_operand.hbm [shape: f32[8,32], index: 5, kind: input, shape index: {}]
  %s6 = inlined_call_operand.hbm [shape: f32[16,16], index: 6, kind: input, shape index: {}]
  %s7 = inlined_call_operand.vmem [shape: f32[1,16], index: 7, kind: input, shape index: {}]
  %s8 = inlined_call_operand.vmem [shape: f32[24,24], index: 8, kind: input, shape index: {}]
  %s9 = inlined_call_operand.hbm [shape: f32[1,24], index: 9, kind: input, shape index: {}]
  %s10 = inlined_call_operand.hbm [shape: f32[16,32], index: 10, kind: input, shape index: {}]
  %s11 = inlined_call_operand.hbm [shape: f32[1,32], index: 11, kind: input, shape index: {}]
  %s12 = inlined_call_operand.vmem [shape: f32[32,32], index: 12, kind: input, shape index: {}]
  %s13 = inlined_call_operand.hbm [shape: f32[1,32], index: 13, kind: input, shape index: {}]
  %s14 = inlined_call_operand.vmem [shape: f32[24,32], index: 14, kind: input, shape index: {}]
  %s15 = inlined_call_operand.vmem [shape: f32[1,32], index: 15, kind: input, shape index: {}]
  %s16 = inlined_call_operand.vmem [shape: f32[32,32], index: 16, kind: input, shape index: {}]
  %s17 = inlined_call_operand.vmem [shape: f32[1,32], index: 17, kind: input, shape index: {}]
  %s18 = inlined_call_operand.vmem [shape: f32[32,8], index: 18, kind: input, shape index: {}]
  %s19 = inlined_call_operand.vmem [shape: f32[32,8], index: 19, kind: input, shape index: {}]
  %s20 = inlined_call_operand.vmem [shape: f32[1,8], index: 20, kind: input, shape index: {}]
  %s21 = inlined_call_operand.hbm [shape: f32[8,8], index: 21, kind: output, shape index: {0}]
  %s22 = inlined_call_operand.hbm [shape: f32[8,16], index: 22, kind: output, shape index: {1}]
  %s23 = inlined_call_operand.hbm [shape: f32[8,24], index: 23, kind: output, shape index: {2}]
  %24 = xla_tuple %s21, %s22, %s23
  %s25 = sld [smem:[#allocation0]]
  $region154: #{tpu_custom_call.1} parent=0
    _
  %s27 = ssub.s32 1, %s25
  %s28 = scalar_select 0, %s27, %s25
  $region1: #{tpu_custom_call.1} parent=0
    #allocation2 [shape = 'u8[4096]{0}', space=vmem, size = 0x1000, scoped, tag = 'input window, operand 0, single buffered']
    #allocation3 [shape = 's32[1]{0}', space=sflag, size = 0x4, scoped, tag = 'scoped memory for tpu_custom_call.1']
    #allocation4 [shape = 's32[1]{0}', space=sflag, size = 0x4, scoped, tag = 'scoped memory for tpu_custom_call.1']
    #allocation5 [shape = 'u8[4096]{0}', space=vmem, size = 0x1000, scoped, tag = 'input window, operand 1, single buffered']
    #allocation6 [shape = 's32[1]{0}', space=sflag, size = 0x4, scoped, tag = 'scoped memory for tpu_custom_call.1']
    #allocation7 [shape = 'u8[4096]{0}', space=vmem, size = 0x1000, scoped, tag = 'input window, operand 2, single buffered']
    #allocation8 [shape = 'u8[4096]{0}', space=vmem, size = 0x1000, scoped, tag = 'input window, operand 3, single buffered']
    #allocation9 [shape = 's32[1]{0}', space=sflag, size = 0x4, scoped, tag = 'scoped memory for tpu_custom_call.1']
    #allocation10 [shape = 'u8[4096]{0}', space=vmem, size = 0x1000, scoped, tag = 'input window, operand 4, single buffered']
    #allocation11 [shape = 'u8[4096]{0}', space=vmem, size = 0x1000, scoped, tag = 'input window, operand 5, single buffered']
    #allocation12 [shape = 's32[1]{0}', space=sflag, size = 0x4, scoped, tag = 'scoped memory for tpu_custom_call.1']
    #allocation13 [shape = 'u8[8192]{0}', space=vmem, size = 0x2000, scoped, tag = 'input window, operand 6, single buffered']
    #allocation14 [shape = 'u8[512]{0}', space=vmem, size = 0x400, scoped, tag = 'input window, operand 9, single buffered']
    #allocation15 [shape = 's32[1]{0}', space=sflag, size = 0x4, scoped, tag = 'scoped memory for tpu_custom_call.1']
    #allocation16 [shape = 'u8[8192]{0}', space=vmem, size = 0x2000, scoped, tag = 'input window, operand 10, single buffered']
    #allocation17 [shape = 'u8[512]{0}', space=vmem, size = 0x400, scoped, tag = 'input window, operand 11, single buffered']
    #allocation18 [shape = 's32[1]{0}', space=sflag, size = 0x4, scoped, tag = 'scoped memory for tpu_custom_call.1']
    #allocation19 [shape = 'u8[512]{0}', space=vmem, size = 0x400, scoped, tag = 'input window, operand 13, single buffered']
    #allocation20 [shape = 'u8[4096]{0}', space=vmem, size = 0x1000, scoped, tag = 'output window, operand 0, single buffered']
    #allocation21 [shape = 'u8[4096]{0}', space=vmem, size = 0x1000, scoped, tag = 'output window, operand 1, single buffered']
    #allocation22 [shape = 's32[1]{0}', space=sflag, size = 0x4, scoped, tag = 'scoped memory for tpu_custom_call.1']
    #allocation23 [shape = 'u8[4096]{0}', space=vmem, size = 0x1000, scoped, tag = 'output window, operand 2, single buffered']
    %29 = vsyncpa [#allocation3], 0
    %30 = vsyncpa [#allocation6], 0
    %31 = vsyncpa [#allocation9], 0
    %32 = vsyncpa [#allocation12], 0
    %33 = vsyncpa [#allocation15], 0
    %34 = vsyncpa [#allocation18], 0
    %35 = vsyncpa [#allocation4], 0
    %36 = vsyncpa [#allocation22], 0
    // Predicated region
    $region2: #{tpu_custom_call.1} parent=1 // pred_check
      _
    $region3: #{tpu_custom_call.1} parent=1 // pred_check_branch
      %38 = sbr.rel (0) target = $region5
    $region4: #{tpu_custom_call.1} parent=1 // pred_region
      %s40 = ssub.s32 128, 128
      %41 = vsyncadd [#allocation3], %s40
      %s43 = sshll.u32 [#allocation2], 4
      %s44 = int_to_ptr.vmem [resolvable:$true] %s43
      %46 = dma.hbm_to_vmem [thread:$0]  %s0, 128, %s44, [#allocation3]
    $region5: #{tpu_custom_call.1} parent=1 // pred_fallthru
      _
    // Predicated region
    $region6: #{tpu_custom_call.1} parent=1 // pred_check
      _
    $region7: #{tpu_custom_call.1} parent=1 // pred_check_branch
      %48 = sbr.rel (0) target = $region9
    $region8: #{tpu_custom_call.1} parent=1 // pred_region
      %s50 = ssub.s32 128, 128
      %51 = vsyncadd [#allocation6], %s50
      %s53 = sshll.u32 [#allocation5], 4
      %s54 = int_to_ptr.vmem [resolvable:$true] %s53
      %56 = dma.hbm_to_vmem [thread:$0]  %s1, 128, %s54, [#allocation6]
    $region9: #{tpu_custom_call.1} parent=1 // pred_fallthru
      _
    // Predicated region
    $region10: #{tpu_custom_call.1} parent=1 // pred_check
      _
    $region11: #{tpu_custom_call.1} parent=1 // pred_check_branch
      %58 = sbr.rel (0) target = $region13
    $region12: #{tpu_custom_call.1} parent=1 // pred_region
      %s60 = ssub.s32 128, 128
      %61 = vsyncadd [#allocation6], %s60
      %s63 = sshll.u32 [#allocation7], 4
      %s64 = int_to_ptr.vmem [resolvable:$true] %s63
      %66 = dma.hbm_to_vmem [thread:$0]  %s2, 128, %s64, [#allocation6]
    $region13: #{tpu_custom_call.1} parent=1 // pred_fallthru
      _
    // Predicated region
    $region14: #{tpu_custom_call.1} parent=1 // pred_check
      _
    $region15: #{tpu_custom_call.1} parent=1 // pred_check_branch
      %68 = sbr.rel (0) target = $region17
    $region16: #{tpu_custom_call.1} parent=1 // pred_region
      %s70 = ssub.s32 128, 128
      %71 = vsyncadd [#allocation9], %s70
      %s73 = sshll.u32 [#allocation8], 4
      %s74 = int_to_ptr.vmem [resolvable:$true] %s73
      %76 = dma.hbm_to_vmem [thread:$0]  %s3, 128, %s74, [#allocation9]
    $region17: #{tpu_custom_call.1} parent=1 // pred_fallthru
      _
    // Predicated region
    $region18: #{tpu_custom_call.1} parent=1 // pred_check
      _
    $region19: #{tpu_custom_call.1} parent=1 // pred_check_branch
      %78 = sbr.rel (0) target = $region21
    $region20: #{tpu_custom_call.1} parent=1 // pred_region
      %s80 = ssub.s32 128, 128
      %81 = vsyncadd [#allocation9], %s80
      %s83 = sshll.u32 [#allocation10], 4
      %s84 = int_to_ptr.vmem [resolvable:$true] %s83
      %86 = dma.hbm_to_vmem [thread:$0]  %s4, 128, %s84, [#allocation9]
    $region21: #{tpu_custom_call.1} parent=1 // pred_fallthru
      _
    // Predicated region
    $region22: #{tpu_custom_call.1} parent=1 // pred_check
      _
    $region23: #{tpu_custom_call.1} parent=1 // pred_check_branch
      %88 = sbr.rel (0) target = $region25
    $region24: #{tpu_custom_call.1} parent=1 // pred_region
      %s90 = ssub.s32 128, 128
      %91 = vsyncadd [#allocation12], %s90
      %s93 = sshll.u32 [#allocation11], 4
      %s94 = int_to_ptr.vmem [resolvable:$true] %s93
      %96 = dma.hbm_to_vmem [thread:$0]  %s5, 128, %s94, [#allocation12]
    $region25: #{tpu_custom_call.1} parent=1 // pred_fallthru
      _
    // Predicated region
    $region26: #{tpu_custom_call.1} parent=1 // pred_check
      _
    $region27: #{tpu_custom_call.1} parent=1 // pred_check_branch
      %98 = sbr.rel (0) target = $region29
    $region28: #{tpu_custom_call.1} parent=1 // pred_region
      %s100 = ssub.s32 256, 256
      %101 = vsyncadd [#allocation12], %s100
      %s102 = sshll.u32 [#allocation13], 4
      %s103 = int_to_ptr.vmem [resolvable:$true] %s102
      %108 = dma.hbm_to_vmem [thread:$0]  %s6, 256, %s103, [#allocation12], 128, 128, 8
    $region29: #{tpu_custom_call.1} parent=1 // pred_fallthru
      _
    // Predicated region
    $region30: #{tpu_custom_call.1} parent=1 // pred_check
      _
    $region31: #{tpu_custom_call.1} parent=1 // pred_check_branch
      %110 = sbr.rel (0) target = $region33
    $region32: #{tpu_custom_call.1} parent=1 // pred_region
      _
    $region33: #{tpu_custom_call.1} parent=1 // pred_fallthru
      _
    // Predicated region
    $region34: #{tpu_custom_call.1} parent=1 // pred_check
      _
    $region35: #{tpu_custom_call.1} parent=1 // pred_check_branch
      %112 = sbr.rel (0) target = $region37
    $region36: #{tpu_custom_call.1} parent=1 // pred_region
      _
    $region37: #{tpu_custom_call.1} parent=1 // pred_fallthru
      _
    // Predicated region
    $region38: #{tpu_custom_call.1} parent=1 // pred_check
      _
    $region39: #{tpu_custom_call.1} parent=1 // pred_check_branch
      %114 = sbr.rel (0) target = $region41
    $region40: #{tpu_custom_call.1} parent=1 // pred_region
      %s116 = ssub.s32 16, 16
      %117 = vsyncadd [#allocation15], %s116
      %s119 = sshll.u32 [#allocation14], 4
      %s120 = int_to_ptr.vmem [resolvable:$true] %s119
      %122 = dma.hbm_to_vmem [thread:$0]  %s9, 16, %s120, [#allocation15]
    $region41: #{tpu_custom_call.1} parent=1 // pred_fallthru
      _
    // Predicated region
    $region42: #{tpu_custom_call.1} parent=1 // pred_check
      _
    $region43: #{tpu_custom_call.1} parent=1 // pred_check_branch
      %124 = sbr.rel (0) target = $region45
    $region44: #{tpu_custom_call.1} parent=1 // pred_region
      %s126 = ssub.s32 256, 256
      %127 = vsyncadd [#allocation15], %s126
      %s128 = sshll.u32 [#allocation16], 4
      %s129 = int_to_ptr.vmem [resolvable:$true] %s128
      %134 = dma.hbm_to_vmem [thread:$0]  %s10, 256, %s129, [#allocation15], 128, 128, 8
    $region45: #{tpu_custom_call.1} parent=1 // pred_fallthru
      _
    // Predicated region
    $region46: #{tpu_custom_call.1} parent=1 // pred_check
      _
    $region47: #{tpu_custom_call.1} parent=1 // pred_check_branch
      %136 = sbr.rel (0) target = $region49
    $region48: #{tpu_custom_call.1} parent=1 // pred_region
      %s138 = ssub.s32 16, 16
      %139 = vsyncadd [#allocation18], %s138
      %s141 = sshll.u32 [#allocation17], 4
      %s142 = int_to_ptr.vmem [resolvable:$true] %s141
      %144 = dma.hbm_to_vmem [thread:$0]  %s11, 16, %s142, [#allocation18]
    $region49: #{tpu_custom_call.1} parent=1 // pred_fallthru
      _
    // Predicated region
    $region50: #{tpu_custom_call.1} parent=1 // pred_check
      _
    $region51: #{tpu_custom_call.1} parent=1 // pred_check_branch
      %146 = sbr.rel (0) target = $region53
    $region52: #{tpu_custom_call.1} parent=1 // pred_region
      _
    $region53: #{tpu_custom_call.1} parent=1 // pred_fallthru
      _
    // Predicated region
    $region54: #{tpu_custom_call.1} parent=1 // pred_check
      _
    $region55: #{tpu_custom_call.1} parent=1 // pred_check_branch
      %148 = sbr.rel (0) target = $region57
    $region56: #{tpu_custom_call.1} parent=1 // pred_region
      %s150 = ssub.s32 16, 16
      %151 = vsyncadd [#allocation18], %s150
      %s153 = sshll.u32 [#allocation19], 4
      %s154 = int_to_ptr.vmem [resolvable:$true] %s153
      %156 = dma.hbm_to_vmem [thread:$0]  %s13, 16, %s154, [#allocation18]
    $region57: #{tpu_custom_call.1} parent=1 // pred_fallthru
      _
    // Predicated region
    $region58: #{tpu_custom_call.1} parent=1 // pred_check
      _
    $region59: #{tpu_custom_call.1} parent=1 // pred_check_branch
      %158 = sbr.rel (0) target = $region61
    $region60: #{tpu_custom_call.1} parent=1 // pred_region
      _
    $region61: #{tpu_custom_call.1} parent=1 // pred_fallthru
      _
    // Predicated region
    $region62: #{tpu_custom_call.1} parent=1 // pred_check
      _
    $region63: #{tpu_custom_call.1} parent=1 // pred_check_branch
      %160 = sbr.rel (0) target = $region65
    $region64: #{tpu_custom_call.1} parent=1 // pred_region
      _
    $region65: #{tpu_custom_call.1} parent=1 // pred_fallthru
      _
    // Predicated region
    $region66: #{tpu_custom_call.1} parent=1 // pred_check
      _
    $region67: #{tpu_custom_call.1} parent=1 // pred_check_branch
      %162 = sbr.rel (0) target = $region69
    $region68: #{tpu_custom_call.1} parent=1 // pred_region
      _
    $region69: #{tpu_custom_call.1} parent=1 // pred_fallthru
      _
    // Predicated region
    $region70: #{tpu_custom_call.1} parent=1 // pred_check
      _
    $region71: #{tpu_custom_call.1} parent=1 // pred_check_branch
      %164 = sbr.rel (0) target = $region73
    $region72: #{tpu_custom_call.1} parent=1 // pred_region
      _
    $region73: #{tpu_custom_call.1} parent=1 // pred_fallthru
      _
    // Predicated region
    $region74: #{tpu_custom_call.1} parent=1 // pred_check
      _
    $region75: #{tpu_custom_call.1} parent=1 // pred_check_branch
      %166 = sbr.rel (0) target = $region77
    $region76: #{tpu_custom_call.1} parent=1 // pred_region
      _
    $region77: #{tpu_custom_call.1} parent=1 // pred_fallthru
      _
    // Predicated region
    $region78: #{tpu_custom_call.1} parent=1 // pred_check
      _
    $region79: #{tpu_custom_call.1} parent=1 // pred_check_branch
      %168 = sbr.rel (0) target = $region81
    $region80: #{tpu_custom_call.1} parent=1 // pred_region
      _
    $region81: #{tpu_custom_call.1} parent=1 // pred_fallthru
      _
    // Predicated region
    $region82: #{tpu_custom_call.1} parent=1 // pred_check
      _
    $region83: #{tpu_custom_call.1} parent=1 // pred_check_branch
      %170 = sbr.rel (0) target = $region85
    $region84: #{tpu_custom_call.1} parent=1 // pred_region
      _
    $region85: #{tpu_custom_call.1} parent=1 // pred_fallthru
      _
    // Predicated region
    $region86: #{tpu_custom_call.1} parent=1 // pred_check
      _
    $region87: #{tpu_custom_call.1} parent=1 // pred_check_branch
      %172 = sbr.rel (0) target = $region89
    $region88: #{tpu_custom_call.1} parent=1 // pred_region
      %173 = dma.done [#allocation3], 128
    $region89: #{tpu_custom_call.1} parent=1 // pred_fallthru
      _
    // Predicated region
    $region90: #{tpu_custom_call.1} parent=1 // pred_check
      _
    $region91: #{tpu_custom_call.1} parent=1 // pred_check_branch
      %175 = sbr.rel (0) target = $region93
    $region92: #{tpu_custom_call.1} parent=1 // pred_region
      %176 = dma.done [#allocation6], 128
    $region93: #{tpu_custom_call.1} parent=1 // pred_fallthru
      _
    // Predicated region
    $region94: #{tpu_custom_call.1} parent=1 // pred_check
      _
    $region95: #{tpu_custom_call.1} parent=1 // pred_check_branch
      %178 = sbr.rel (0) target = $region97
    $region96: #{tpu_custom_call.1} parent=1 // pred_region
      %179 = dma.done [#allocation6], 128
    $region97: #{tpu_custom_call.1} parent=1 // pred_fallthru
      _
    // Predicated region
    $region98: #{tpu_custom_call.1} parent=1 // pred_check
      _
    $region99: #{tpu_custom_call.1} parent=1 // pred_check_branch
      %181 = sbr.rel (0) target = $region101
    $region100: #{tpu_custom_call.1} parent=1 // pred_region
      %182 = dma.done [#allocation9], 128
    $region101: #{tpu_custom_call.1} parent=1 // pred_fallthru
      _
    // Predicated region
    $region102: #{tpu_custom_call.1} parent=1 // pred_check
      _
    $region103: #{tpu_custom_call.1} parent=1 // pred_check_branch
      %184 = sbr.rel (0) target = $region105
    $region104: #{tpu_custom_call.1} parent=1 // pred_region
      %185 = dma.done [#allocation9], 128
    $region105: #{tpu_custom_call.1} parent=1 // pred_fallthru
      _
    // Predicated region
    $region106: #{tpu_custom_call.1} parent=1 // pred_check
      _
    $region107: #{tpu_custom_call.1} parent=1 // pred_check_branch
      %187 = sbr.rel (0) target = $region109
    $region108: #{tpu_custom_call.1} parent=1 // pred_region
      %188 = dma.done [#allocation12], 128
    $region109: #{tpu_custom_call.1} parent=1 // pred_fallthru
      _
    // Predicated region
    $region110: #{tpu_custom_call.1} parent=1 // pred_check
      _
    $region111: #{tpu_custom_call.1} parent=1 // pred_check_branch
      %190 = sbr.rel (0) target = $region113
    $region112: #{tpu_custom_call.1} parent=1 // pred_region
      %191 = dma.done [#allocation12], 256
    $region113: #{tpu_custom_call.1} parent=1 // pred_fallthru
      _
    // Predicated region
    $region114: #{tpu_custom_call.1} parent=1 // pred_check
      _
    $region115: #{tpu_custom_call.1} parent=1 // pred_check_branch
      %193 = sbr.rel (0) target = $region117
    $region116: #{tpu_custom_call.1} parent=1 // pred_region
      %194 = dma.done [#allocation15], 16
    $region117: #{tpu_custom_call.1} parent=1 // pred_fallthru
      _
    // Predicated region
    $region118: #{tpu_custom_call.1} parent=1 // pred_check
      _
    $region119: #{tpu_custom_call.1} parent=1 // pred_check_branch
      %196 = sbr.rel (0) target = $region121
    $region120: #{tpu_custom_call.1} parent=1 // pred_region
      %197 = dma.done [#allocation15], 256
    $region121: #{tpu_custom_call.1} parent=1 // pred_fallthru
      _
    // Predicated region
    $region122: #{tpu_custom_call.1} parent=1 // pred_check
      _
    $region123: #{tpu_custom_call.1} parent=1 // pred_check_branch
      %199 = sbr.rel (0) target = $region125
    $region124: #{tpu_custom_call.1} parent=1 // pred_region
      %200 = dma.done [#allocation18], 16
    $region125: #{tpu_custom_call.1} parent=1 // pred_fallthru
      _
    // Predicated region
    $region126: #{tpu_custom_call.1} parent=1 // pred_check
      _
    $region127: #{tpu_custom_call.1} parent=1 // pred_check_branch
      %202 = sbr.rel (0) target = $region129
    $region128: #{tpu_custom_call.1} parent=1 // pred_region
      %203 = dma.done [#allocation18], 16
    $region129: #{tpu_custom_call.1} parent=1 // pred_fallthru
      _
    %v204 = vld [vmem:[#allocation2] sm:$0xff]
    %v205 = vld [vmem:[#allocation5] sm:$0xff]
    %v206 = vld [vmem:[#allocation13] sm:$0xff]
    %v207 = vld [vmem:[#allocation13 + $0x8] sm:$0xff]
    %v208 = vld [vmem:[%s7] sm:$0x1]
    %v210 = vlaneseq
    %v211 = vshrl.u32 %v210, 7
    %v212 = vsub.s32 0, %v211
    %v213 = vrot.slane %v208, %v212
    %vm215 = vcmask 130048
    %v217 = vsel %vm215, %v204, 0
    %219 = vmatprep.subr.mxu0 0.0
    %220 = vmatpush1.msra.mxu0 %v206
    %221 = vmatprep.subr.mxu0 0.0
    %222 = vmatpush1.msra.mxu0 %v207
    %223 = vmatprep.subr.mxu0 0.0
    %224 = vmatpush1.msra.mxu0 0.0
    %225 = vmatprep.subr.mxu0 0.0
    %226 = vmatpush1.msra.mxu0 0.0
    %227 = vmatprep.subr.mxu0 0.0
    %228 = vmatpush1.msra.mxu0 0.0
    %229 = vmatprep.subr.mxu0 0.0
    %230 = vmatpush1.msra.mxu0 0.0
    %231 = vmatprep.subr.mxu0 0.0
    %232 = vmatpush1.msra.mxu0 0.0
    %233 = vmatprep.subr.mxu0 0.0
    %234 = vmatpush1.msra.mxu0 0.0
    %235 = vmatprep.subr.mxu0 0.0
    %236 = vmatpush1.msra.mxu0 0.0
    %237 = vmatprep.subr.mxu0 0.0
    %238 = vmatpush1.msra.mxu0 0.0
    %239 = vmatprep.subr.mxu0 0.0
    %240 = vmatpush1.msra.mxu0 0.0
    %241 = vmatprep.subr.mxu0 0.0
    %242 = vmatpush1.msra.mxu0 0.0
    %243 = vmatprep.subr.mxu0 0.0
    %244 = vmatpush1.msra.mxu0 0.0
    %245 = vmatprep.subr.mxu0 0.0
    %246 = vmatpush1.msra.mxu0 0.0
    %247 = vmatprep.subr.mxu0 0.0
    %248 = vmatpush1.msra.mxu0 0.0
    %249 = vmatprep.subr.mxu0 0.0
    %250 = vmatpush1.msra.mxu0 0.0
    %251 = vmatprep.subr.mxu0 0.0
    %252 = vmatpush1.msra.mxu0 0.0
    %253 = vmatprep.subr.mxu0 0.0
    %254 = vmatpush1.msra.mxu0 0.0
    %255 = vmatprep.subr.mxu0 0.0
    %256 = vmatpush1.msra.mxu0 0.0
    %257 = vmatprep.subr.mxu0 0.0
    %258 = vmatpush1.msra.mxu0 0.0
    %259 = vmatprep.subr.mxu0 0.0
    %260 = vmatpush1.msra.mxu0 0.0
    %261 = vmatprep.subr.mxu0 0.0
    %262 = vmatpush1.msra.mxu0 0.0
    %263 = vmatprep.subr.mxu0 0.0
    %264 = vmatpush1.msra.mxu0 0.0
    %265 = vmatprep.subr.mxu0 0.0
    %266 = vmatpush1.msra.mxu0 0.0
    %267 = vmatprep.subr.mxu0 0.0
    %268 = vmatpush1.msra.mxu0 0.0
    %269 = vmatprep.subr.mxu0 0.0
    %270 = vmatpush1.msra.mxu0 0.0
    %271 = vmatprep.subr.mxu0 0.0
    %272 = vmatpush1.msra.mxu0 0.0
    %273 = vmatprep.subr.mxu0 0.0
    %274 = vmatpush1.msra.mxu0 0.0
    %275 = vmatprep.subr.mxu0 0.0
    %276 = vmatpush1.msra.mxu0 0.0
    %277 = vmatprep.subr.mxu0 0.0
    %278 = vmatpush1.msra.mxu0 0.0
    %279 = vmatprep.subr.mxu0 0.0
    %280 = vmatpush1.msra.mxu0 0.0
    %281 = vmatprep.subr.mxu0 0.0
    %282 = vmatpush1.msra.mxu0 0.0
    %283 = vmatprep.mubr.f32.mxu0 0.0
    %284 = vmatmul.mubr.f32.gmra.mrb[0].mxu0 %v217
    %v285 = vpop.f32.mrb[0].mxu0
    %v286 = vadd.f32 %v213, %v285
    %v287 = vpop.f32.mrb[0].mxu0
    %288 = vdwg.mxu0
    %v289 = vsel %vm215, %v286, -inf
    %290 = vmax.xlane.f32.xlu0 %v289
    %v291 = vpop.xlane.xlu0 %290
    %v292 = vsub.f32 %v291, 1.0
    %v293 = vadd.f32 %v292, %v291
    %v294 = vmul.f32 %v293, 0.5
    %v295 = vsub.f32 %v286, %v294
    %v296 = vmax.f32 %v295, 0.0
    %v297 = vsel %vm215, %v296, 0.0
    %298 = vadd.xlane.f32.xlu0 %v297
    %v299 = vpop.xlane.xlu0 %298
    %v300 = vsub.f32 %v299, 1.0
    %vm301 = vcmp.gt.f32.partialorder %v300, 0.0
    %v302 = vsel %vm301, %v294, %v292
    %v303 = vsel %vm301, %v291, %v294
    %v304 = vadd.f32 %v302, %v303
    %v305 = vmul.f32 %v304, 0.5
    %v306 = vsub.f32 %v286, %v305
    %v307 = vmax.f32 %v306, 0.0
    %v308 = vsel %vm215, %v307, 0.0
    %309 = vadd.xlane.f32.xlu0 %v308
    %v310 = vpop.xlane.xlu0 %309
    %v311 = vsub.f32 %v310, 1.0
    %vm312 = vcmp.gt.f32.partialorder %v311, 0.0
    %v313 = vsel %vm312, %v305, %v302
    %v314 = vsel %vm312, %v303, %v305
    %v315 = vadd.f32 %v313, %v314
    %v316 = vmul.f32 %v315, 0.5
    %v317 = vsub.f32 %v286, %v316
    %v318 = vmax.f32 %v317, 0.0
    %v319 = vsel %vm215, %v318, 0.0
    %320 = vadd.xlane.f32.xlu0 %v319
    %v321 = vpop.xlane.xlu0 %320
    %v322 = vsub.f32 %v321, 1.0
    %vm323 = vcmp.gt.f32.partialorder %v322, 0.0
    %v324 = vsel %vm323, %v316, %v313
    %v325 = vsel %vm323, %v314, %v316
    %v326 = vadd.f32 %v324, %v325
    %v327 = vmul.f32 %v326, 0.5
    %v328 = vsub.f32 %v286, %v327
    %v329 = vmax.f32 %v328, 0.0
    %v330 = vsel %vm215, %v329, 0.0
    %331 = vadd.xlane.f32.xlu0 %v330
    %v332 = vpop.xlane.xlu0 %331
    %v333 = vsub.f32 %v332, 1.0
    %vm334 = vcmp.gt.f32.partialorder %v333, 0.0
    %v335 = vsel %vm334, %v327, %v324
    %v336 = vsel %vm334, %v325, %v327
    %v337 = vadd.f32 %v335, %v336
    %v338 = vmul.f32 %v337, 0.5
    %v339 = vsub.f32 %v286, %v338
    %v340 = vmax.f32 %v339, 0.0
    %v341 = vsel %vm215, %v340, 0.0
    %342 = vadd.xlane.f32.xlu0 %v341
    %v343 = vpop.xlane.xlu0 %342
    %v344 = vsub.f32 %v343, 1.0
    %vm345 = vcmp.gt.f32.partialorder %v344, 0.0
    %v346 = vsel %vm345, %v338, %v335
    %v347 = vsel %vm345, %v336, %v338
    %v348 = vadd.f32 %v346, %v347
    %v349 = vmul.f32 %v348, 0.5
    %v350 = vsub.f32 %v286, %v349
    %v351 = vmax.f32 %v350, 0.0
    %v352 = vsel %vm215, %v351, 0.0
    %353 = vadd.xlane.f32.xlu0 %v352
    %v354 = vpop.xlane.xlu0 %353
    %v355 = vsub.f32 %v354, 1.0
    %vm356 = vcmp.gt.f32.partialorder %v355, 0.0
    %v357 = vsel %vm356, %v349, %v346
    %v358 = vsel %vm356, %v347, %v349
    %v359 = vadd.f32 %v357, %v358
    %v360 = vmul.f32 %v359, 0.5
    %v361 = vsub.f32 %v286, %v360
    %v362 = vmax.f32 %v361, 0.0
    %v363 = vsel %vm215, %v362, 0.0
    %364 = vadd.xlane.f32.xlu0 %v363
    %v365 = vpop.xlane.xlu0 %364
    %v366 = vsub.f32 %v365, 1.0
    %vm367 = vcmp.gt.f32.partialorder %v366, 0.0
    %v368 = vsel %vm367, %v360, %v357
    %v369 = vsel %vm367, %v358, %v360
    %v370 = vadd.f32 %v368, %v369
    %v371 = vmul.f32 %v370, 0.5
    %v372 = vsub.f32 %v286, %v371
    %v373 = vmax.f32 %v372, 0.0
    %v374 = vsel %vm215, %v373, 0.0
    %375 = vadd.xlane.f32.xlu0 %v374
    %v376 = vpop.xlane.xlu0 %375
    %v377 = vsub.f32 %v376, 1.0
    %vm378 = vcmp.gt.f32.partialorder %v377, 0.0
    %v379 = vsel %vm378, %v371, %v368
    %v380 = vsel %vm378, %v369, %v371
    %v381 = vadd.f32 %v379, %v380
    %v382 = vmul.f32 %v381, 0.5
    %v383 = vsub.f32 %v286, %v382
    %v384 = vmax.f32 %v383, 0.0
    %v385 = vsel %vm215, %v384, 0.0
    %386 = vadd.xlane.f32.xlu0 %v385
    %v387 = vpop.xlane.xlu0 %386
    %v388 = vsub.f32 %v387, 1.0
    %vm389 = vcmp.gt.f32.partialorder %v388, 0.0
    %v390 = vsel %vm389, %v382, %v379
    %v391 = vsel %vm389, %v380, %v382
    %v392 = vadd.f32 %v390, %v391
    %v393 = vmul.f32 %v392, 0.5
    %v394 = vsub.f32 %v286, %v393
    %v395 = vmax.f32 %v394, 0.0
    %v396 = vsel %vm215, %v395, 0.0
    %397 = vadd.xlane.f32.xlu0 %v396
    %v398 = vpop.xlane.xlu0 %397
    %v399 = vsub.f32 %v398, 1.0
    %vm400 = vcmp.gt.f32.partialorder %v399, 0.0
    %v401 = vsel %vm400, %v393, %v390
    %v402 = vsel %vm400, %v391, %v393
    %v403 = vadd.f32 %v401, %v402
    %v404 = vmul.f32 %v403, 0.5
    %v405 = vsub.f32 %v286, %v404
    %v406 = vmax.f32 %v405, 0.0
    %v407 = vsel %vm215, %v406, 0.0
    %408 = vadd.xlane.f32.xlu0 %v407
    %v409 = vpop.xlane.xlu0 %408
    %v410 = vsub.f32 %v409, 1.0
    %vm411 = vcmp.gt.f32.partialorder %v410, 0.0
    %v412 = vsel %vm411, %v404, %v401
    %v413 = vsel %vm411, %v402, %v404
    %v414 = vadd.f32 %v412, %v413
    %v415 = vmul.f32 %v414, 0.5
    %v416 = vsub.f32 %v286, %v415
    %v417 = vmax.f32 %v416, 0.0
    %v418 = vsel %vm215, %v417, 0.0
    %419 = vadd.xlane.f32.xlu0 %v418
    %v420 = vpop.xlane.xlu0 %419
    %v421 = vsub.f32 %v420, 1.0
    %vm422 = vcmp.gt.f32.partialorder %v421, 0.0
    %v423 = vsel %vm422, %v415, %v412
    %v424 = vsel %vm422, %v413, %v415
    %v425 = vadd.f32 %v423, %v424
    %v426 = vmul.f32 %v425, 0.5
    %v427 = vsub.f32 %v286, %v426
    %v428 = vmax.f32 %v427, 0.0
    %v429 = vsel %vm215, %v428, 0.0
    %430 = vadd.xlane.f32.xlu0 %v429
    %v431 = vpop.xlane.xlu0 %430
    %v432 = vsub.f32 %v431, 1.0
    %vm433 = vcmp.gt.f32.partialorder %v432, 0.0
    %v434 = vsel %vm433, %v426, %v423
    %v435 = vsel %vm433, %v424, %v426
    %v436 = vadd.f32 %v434, %v435
    %v437 = vmul.f32 %v436, 0.5
    %v438 = vsub.f32 %v286, %v437
    %v439 = vmax.f32 %v438, 0.0
    %v440 = vsel %vm215, %v439, 0.0
    %441 = vadd.xlane.f32.xlu0 %v440
    %v442 = vpop.xlane.xlu0 %441
    %v443 = vsub.f32 %v442, 1.0
    %vm444 = vcmp.gt.f32.partialorder %v443, 0.0
    %v445 = vsel %vm444, %v437, %v434
    %v446 = vsel %vm444, %v435, %v437
    %v447 = vadd.f32 %v445, %v446
    %v448 = vmul.f32 %v447, 0.5
    %v449 = vsub.f32 %v286, %v448
    %v450 = vmax.f32 %v449, 0.0
    %v451 = vsel %vm215, %v450, 0.0
    %452 = vadd.xlane.f32.xlu0 %v451
    %v453 = vpop.xlane.xlu0 %452
    %v454 = vsub.f32 %v453, 1.0
    %vm455 = vcmp.gt.f32.partialorder %v454, 0.0
    %v456 = vsel %vm455, %v448, %v445
    %v457 = vsel %vm455, %v446, %v448
    %v458 = vadd.f32 %v456, %v457
    %v459 = vmul.f32 %v458, 0.5
    %v460 = vsub.f32 %v286, %v459
    %v461 = vmax.f32 %v460, 0.0
    %v462 = vsel %vm215, %v461, 0.0
    %463 = vadd.xlane.f32.xlu0 %v462
    %v464 = vpop.xlane.xlu0 %463
    %v465 = vsub.f32 %v464, 1.0
    %vm466 = vcmp.gt.f32.partialorder %v465, 0.0
    %v467 = vsel %vm466, %v459, %v456
    %v468 = vsel %vm466, %v457, %v459
    %v469 = vadd.f32 %v467, %v468
    %v470 = vmul.f32 %v469, 0.5
    %v471 = vsub.f32 %v286, %v470
    %v472 = vmax.f32 %v471, 0.0
    %v473 = vsel %vm215, %v472, 0.0
    %474 = vadd.xlane.f32.xlu0 %v473
    %v475 = vpop.xlane.xlu0 %474
    %v476 = vsub.f32 %v475, 1.0
    %vm477 = vcmp.gt.f32.partialorder %v476, 0.0
    %v478 = vsel %vm477, %v470, %v467
    %v479 = vsel %vm477, %v468, %v470
    %v480 = vadd.f32 %v478, %v479
    %v481 = vmul.f32 %v480, 0.5
    %v482 = vsub.f32 %v286, %v481
    %v483 = vmax.f32 %v482, 0.0
    %v484 = vsel %vm215, %v483, 0.0
    %485 = vadd.xlane.f32.xlu0 %v484
    %v486 = vpop.xlane.xlu0 %485
    %v487 = vsub.f32 %v486, 1.0
    %vm488 = vcmp.gt.f32.partialorder %v487, 0.0
    %v489 = vsel %vm488, %v481, %v478
    %v490 = vsel %vm488, %v479, %v481
    %v491 = vadd.f32 %v489, %v490
    %v492 = vmul.f32 %v491, 0.5
    %v493 = vsub.f32 %v286, %v492
    %v494 = vmax.f32 %v493, 0.0
    %v495 = vsel %vm215, %v494, 0.0
    %496 = vadd.xlane.f32.xlu0 %v495
    %v497 = vpop.xlane.xlu0 %496
    %v498 = vsub.f32 %v497, 1.0
    %vm499 = vcmp.gt.f32.partialorder %v498, 0.0
    %v500 = vsel %vm499, %v492, %v489
    %v501 = vsel %vm499, %v490, %v492
    %v502 = vadd.f32 %v500, %v501
    %v503 = vmul.f32 %v502, 0.5
    %v504 = vsub.f32 %v286, %v503
    %v505 = vmax.f32 %v504, 0.0
    %v506 = vsel %vm215, %v505, 0.0
    %507 = vadd.xlane.f32.xlu0 %v506
    %v508 = vpop.xlane.xlu0 %507
    %v509 = vsub.f32 %v508, 1.0
    %vm510 = vcmp.gt.f32.partialorder %v509, 0.0
    %v511 = vsel %vm510, %v503, %v500
    %v512 = vsel %vm510, %v501, %v503
    %v513 = vadd.f32 %v511, %v512
    %v514 = vmul.f32 %v513, 0.5
    %v515 = vsub.f32 %v286, %v514
    %v516 = vmax.f32 %v515, 0.0
    %v517 = vsel %vm215, %v516, 0.0
    %518 = vadd.xlane.f32.xlu0 %v517
    %v519 = vpop.xlane.xlu0 %518
    %v520 = vsub.f32 %v519, 1.0
    %vm521 = vcmp.gt.f32.partialorder %v520, 0.0
    %v522 = vsel %vm521, %v514, %v511
    %v523 = vsel %vm521, %v512, %v514
    %v524 = vadd.f32 %v522, %v523
    %v525 = vmul.f32 %v524, 0.5
    %v526 = vsub.f32 %v286, %v525
    %v527 = vmax.f32 %v526, 0.0
    %v528 = vsel %vm215, %v527, 0.0
    %529 = vadd.xlane.f32.xlu0 %v528
    %v530 = vpop.xlane.xlu0 %529
    %v531 = vsub.f32 %v530, 1.0
    %vm532 = vcmp.gt.f32.partialorder %v531, 0.0
    %v533 = vsel %vm532, %v525, %v522
    %v534 = vsel %vm532, %v523, %v525
    %v535 = vadd.f32 %v533, %v534
    %v536 = vmul.f32 %v535, 0.5
    %v537 = vsub.f32 %v286, %v536
    %v538 = vmax.f32 %v537, 0.0
    %v539 = vsel %vm215, %v538, 0.0
    %540 = vadd.xlane.f32.xlu0 %v539
    %v541 = vpop.xlane.xlu0 %540
    %v542 = vsub.f32 %v541, 1.0
    %vm543 = vcmp.gt.f32.partialorder %v542, 0.0
    %v544 = vsel %vm543, %v536, %v533
    %v545 = vsel %vm543, %v534, %v536
    %v546 = vadd.f32 %v544, %v545
    %v547 = vmul.f32 %v546, 0.5
    %v548 = vsub.f32 %v286, %v547
    %v549 = vmax.f32 %v548, 0.0
    %v550 = vsel %vm215, %v549, 0.0
    %551 = vadd.xlane.f32.xlu0 %v550
    %v552 = vpop.xlane.xlu0 %551
    %v553 = vsub.f32 %v552, 1.0
    %vm554 = vcmp.gt.f32.partialorder %v553, 0.0
    %v555 = vsel %vm554, %v547, %v544
    %v556 = vsel %vm554, %v545, %v547
    %v557 = vadd.f32 %v555, %v556
    %v558 = vmul.f32 %v557, 0.5
    %v559 = vsub.f32 %v286, %v558
    %v560 = vmax.f32 %v559, 0.0
    %v561 = vsel %vm215, %v560, 0.0
    %562 = vadd.xlane.f32.xlu0 %v561
    %v563 = vpop.xlane.xlu0 %562
    %v564 = vsub.f32 %v563, 1.0
    %vm565 = vcmp.gt.f32.partialorder %v564, 0.0
    %v566 = vsel %vm565, %v558, %v555
    %v567 = vsel %vm565, %v556, %v558
    %v568 = vadd.f32 %v566, %v567
    %v569 = vmul.f32 %v568, 0.5
    %v570 = vsub.f32 %v286, %v569
    %v571 = vmax.f32 %v570, 0.0
    %v572 = vsel %vm215, %v571, 0.0
    %573 = vadd.xlane.f32.xlu0 %v572
    %v574 = vpop.xlane.xlu0 %573
    %v575 = vsub.f32 %v574, 1.0
    %vm576 = vcmp.gt.f32.partialorder %v575, 0.0
    %v577 = vsel %vm576, %v569, %v566
    %v578 = vsel %vm576, %v567, %v569
    %v579 = vadd.f32 %v577, %v578
    %v580 = vmul.f32 %v579, 0.5
    %v581 = vsub.f32 %v286, %v580
    %v582 = vmax.f32 %v581, 0.0
    %v583 = vsel %vm215, %v582, 0.0
    %584 = vadd.xlane.f32.xlu0 %v583
    %v585 = vpop.xlane.xlu0 %584
    %v586 = vsub.f32 %v585, 1.0
    %vm587 = vcmp.gt.f32.partialorder %v586, 0.0
    %v588 = vsel %vm587, %v580, %v577
    %v589 = vsel %vm587, %v578, %v580
    %v590 = vadd.f32 %v588, %v589
    %v591 = vmul.f32 %v590, 0.5
    %v592 = vsub.f32 %v286, %v591
    %v593 = vmax.f32 %v592, 0.0
    %v594 = vsel %vm215, %v593, 0.0
    %595 = vadd.xlane.f32.xlu0 %v594
    %v596 = vpop.xlane.xlu0 %595
    %v597 = vsub.f32 %v596, 1.0
    %vm598 = vcmp.gt.f32.partialorder %v597, 0.0
    %v599 = vsel %vm598, %v591, %v588
    %v600 = vsel %vm598, %v589, %v591
    %v601 = vadd.f32 %v599, %v600
    %v602 = vmul.f32 %v601, 0.5
    %v603 = vsub.f32 %v286, %v602
    %v604 = vmax.f32 %v603, 0.0
    %v605 = vsel %vm215, %v604, 0.0
    %606 = vadd.xlane.f32.xlu0 %v605
    %v607 = vpop.xlane.xlu0 %606
    %v608 = vsub.f32 %v607, 1.0
    %vm609 = vcmp.gt.f32.partialorder %v608, 0.0
    %v610 = vsel %vm609, %v602, %v599
    %v611 = vsel %vm609, %v600, %v602
    %v612 = vadd.f32 %v610, %v611
    %v613 = vmul.f32 %v612, 0.5
    %v614 = vsub.f32 %v286, %v613
    %v615 = vmax.f32 %v614, 0.0
    %v616 = vsel %vm215, %v615, 0.0
    %617 = vadd.xlane.f32.xlu0 %v616
    %v618 = vpop.xlane.xlu0 %617
    %v619 = vsub.f32 %v618, 1.0
    %vm620 = vcmp.gt.f32.partialorder %v619, 0.0
    %v621 = vsel %vm620, %v613, %v610
    %v622 = vsel %vm620, %v611, %v613
    %v623 = vadd.f32 %v621, %v622
    %v624 = vmul.f32 %v623, 0.5
    %vm625 = vcmp.gt.f32.partialorder %v286, %v624
    %v626 = vsel %vm625, 1, 0
    %v627 = vcvt.s32.f32 %v626
    %v628 = vsel %vm215, %v627, 0.0
    %629 = vadd.xlane.f32.xlu0 %v628
    %v630 = vpop.xlane.xlu0 %629
    %v631 = vmul.f32 %v286, %v627
    %v632 = vsel %vm215, %v631, 0.0
    %633 = vadd.xlane.f32.xlu0 %v632
    %v634 = vpop.xlane.xlu0 %633
    %v635 = vsub.f32 %v634, 1.0
    %v636 = vrcp.pop %v630
    %v637 = vmul.f32 %v635, %v636
    %v638 = vsub.f32 %v286, %v637
    %v639 = vmax.f32 %v638, 0.0
    %640 = vst.msk [vmem:[#allocation21] sm:$0xff] %vm215, %v639
    %v641 = vmul.f32 %v204, %v639
    %v642 = vld [vmem:[#allocation16] sm:$0xff]
    %v643 = vld [vmem:[#allocation16 + $0x8] sm:$0xff]
    %v644 = vld [vmem:[#allocation17] sm:$0x1]
    %v646 = vlaneseq
    %v647 = vshrl.u32 %v646, 7
    %v648 = vsub.s32 0, %v647
    %v649 = vrot.slane %v644, %v648
    %v652 = vsel %vm215, %v641, 0
    %654 = vmatprep.subr.mxu0 0.0
    %655 = vmatpush1.msra.mxu0 %v642
    %656 = vmatprep.subr.mxu0 0.0
    %657 = vmatpush1.msra.mxu0 %v643
    %658 = vmatprep.subr.mxu0 0.0
    %659 = vmatpush1.msra.mxu0 0.0
    %660 = vmatprep.subr.mxu0 0.0
    %661 = vmatpush1.msra.mxu0 0.0
    %662 = vmatprep.subr.mxu0 0.0
    %663 = vmatpush1.msra.mxu0 0.0
    %664 = vmatprep.subr.mxu0 0.0
    %665 = vmatpush1.msra.mxu0 0.0
    %666 = vmatprep.subr.mxu0 0.0
    %667 = vmatpush1.msra.mxu0 0.0
    %668 = vmatprep.subr.mxu0 0.0
    %669 = vmatpush1.msra.mxu0 0.0
    %670 = vmatprep.subr.mxu0 0.0
    %671 = vmatpush1.msra.mxu0 0.0
    %672 = vmatprep.subr.mxu0 0.0
    %673 = vmatpush1.msra.mxu0 0.0
    %674 = vmatprep.subr.mxu0 0.0
    %675 = vmatpush1.msra.mxu0 0.0
    %676 = vmatprep.subr.mxu0 0.0
    %677 = vmatpush1.msra.mxu0 0.0
    %678 = vmatprep.subr.mxu0 0.0
    %679 = vmatpush1.msra.mxu0 0.0
    %680 = vmatprep.subr.mxu0 0.0
    %681 = vmatpush1.msra.mxu0 0.0
    %682 = vmatprep.subr.mxu0 0.0
    %683 = vmatpush1.msra.mxu0 0.0
    %684 = vmatprep.subr.mxu0 0.0
    %685 = vmatpush1.msra.mxu0 0.0
    %686 = vmatprep.subr.mxu0 0.0
    %687 = vmatpush1.msra.mxu0 0.0
    %688 = vmatprep.subr.mxu0 0.0
    %689 = vmatpush1.msra.mxu0 0.0
    %690 = vmatprep.subr.mxu0 0.0
    %691 = vmatpush1.msra.mxu0 0.0
    %692 = vmatprep.subr.mxu0 0.0
    %693 = vmatpush1.msra.mxu0 0.0
    %694 = vmatprep.subr.mxu0 0.0
    %695 = vmatpush1.msra.mxu0 0.0
    %696 = vmatprep.subr.mxu0 0.0
    %697 = vmatpush1.msra.mxu0 0.0
    %698 = vmatprep.subr.mxu0 0.0
    %699 = vmatpush1.msra.mxu0 0.0
    %700 = vmatprep.subr.mxu0 0.0
    %701 = vmatpush1.msra.mxu0 0.0
    %702 = vmatprep.subr.mxu0 0.0
    %703 = vmatpush1.msra.mxu0 0.0
    %704 = vmatprep.subr.mxu0 0.0
    %705 = vmatpush1.msra.mxu0 0.0
    %706 = vmatprep.subr.mxu0 0.0
    %707 = vmatpush1.msra.mxu0 0.0
    %708 = vmatprep.subr.mxu0 0.0
    %709 = vmatpush1.msra.mxu0 0.0
    %710 = vmatprep.subr.mxu0 0.0
    %711 = vmatpush1.msra.mxu0 0.0
    %712 = vmatprep.subr.mxu0 0.0
    %713 = vmatpush1.msra.mxu0 0.0
    %714 = vmatprep.subr.mxu0 0.0
    %715 = vmatpush1.msra.mxu0 0.0
    %716 = vmatprep.subr.mxu0 0.0
    %717 = vmatpush1.msra.mxu0 0.0
    %718 = vmatprep.mubr.f32.mxu0 0.0
    %719 = vmatmul.mubr.f32.gmra.mrb[0].mxu0 %v652
    %v720 = vpop.f32.mrb[0].mxu0
    %v721 = vadd.f32 %v649, %v720
    %v722 = vpop.f32.mrb[0].mxu0
    %723 = vdwg.mxu0
    %v724 = vmax.f32 %v721, 0.0
    %v725 = vld [vmem:[#allocation7] sm:$0xff]
    %v726 = vmul.f32 %v724, %v725
    %v727 = vld [vmem:[%s12] sm:$0xff]
    %v728 = vld [vmem:[%s12 + $0x8] sm:$0xff]
    %v729 = vld [vmem:[%s12 + $0x10] sm:$0xff]
    %v730 = vld [vmem:[%s12 + $0x18] sm:$0xff]
    %v731 = vld [vmem:[#allocation19] sm:$0x1]
    %v733 = vlaneseq
    %v734 = vshrl.u32 %v733, 7
    %v735 = vsub.s32 0, %v734
    %v736 = vrot.slane %v731, %v735
    %vm738 = vcmask 261120
    %v740 = vsel %vm738, %v726, 0
    %742 = vmatprep.subr.mxu0 0.0
    %743 = vmatpush1.msra.mxu0 %v727
    %744 = vmatprep.subr.mxu0 0.0
    %745 = vmatpush1.msra.mxu0 %v728
    %746 = vmatprep.subr.mxu0 0.0
    %747 = vmatpush1.msra.mxu0 %v729
    %748 = vmatprep.subr.mxu0 0.0
    %749 = vmatpush1.msra.mxu0 %v730
    %750 = vmatprep.subr.mxu0 0.0
    %751 = vmatpush1.msra.mxu0 0.0
    %752 = vmatprep.subr.mxu0 0.0
    %753 = vmatpush1.msra.mxu0 0.0
    %754 = vmatprep.subr.mxu0 0.0
    %755 = vmatpush1.msra.mxu0 0.0
    %756 = vmatprep.subr.mxu0 0.0
    %757 = vmatpush1.msra.mxu0 0.0
    %758 = vmatprep.subr.mxu0 0.0
    %759 = vmatpush1.msra.mxu0 0.0
    %760 = vmatprep.subr.mxu0 0.0
    %761 = vmatpush1.msra.mxu0 0.0
    %762 = vmatprep.subr.mxu0 0.0
    %763 = vmatpush1.msra.mxu0 0.0
    %764 = vmatprep.subr.mxu0 0.0
    %765 = vmatpush1.msra.mxu0 0.0
    %766 = vmatprep.subr.mxu0 0.0
    %767 = vmatpush1.msra.mxu0 0.0
    %768 = vmatprep.subr.mxu0 0.0
    %769 = vmatpush1.msra.mxu0 0.0
    %770 = vmatprep.subr.mxu0 0.0
    %771 = vmatpush1.msra.mxu0 0.0
    %772 = vmatprep.subr.mxu0 0.0
    %773 = vmatpush1.msra.mxu0 0.0
    %774 = vmatprep.subr.mxu0 0.0
    %775 = vmatpush1.msra.mxu0 0.0
    %776 = vmatprep.subr.mxu0 0.0
    %777 = vmatpush1.msra.mxu0 0.0
    %778 = vmatprep.subr.mxu0 0.0
    %779 = vmatpush1.msra.mxu0 0.0
    %780 = vmatprep.subr.mxu0 0.0
    %781 = vmatpush1.msra.mxu0 0.0
    %782 = vmatprep.subr.mxu0 0.0
    %783 = vmatpush1.msra.mxu0 0.0
    %784 = vmatprep.subr.mxu0 0.0
    %785 = vmatpush1.msra.mxu0 0.0
    %786 = vmatprep.subr.mxu0 0.0
    %787 = vmatpush1.msra.mxu0 0.0
    %788 = vmatprep.subr.mxu0 0.0
    %789 = vmatpush1.msra.mxu0 0.0
    %790 = vmatprep.subr.mxu0 0.0
    %791 = vmatpush1.msra.mxu0 0.0
    %792 = vmatprep.subr.mxu0 0.0
    %793 = vmatpush1.msra.mxu0 0.0
    %794 = vmatprep.subr.mxu0 0.0
    %795 = vmatpush1.msra.mxu0 0.0
    %796 = vmatprep.subr.mxu0 0.0
    %797 = vmatpush1.msra.mxu0 0.0
    %798 = vmatprep.subr.mxu0 0.0
    %799 = vmatpush1.msra.mxu0 0.0
    %800 = vmatprep.subr.mxu0 0.0
    %801 = vmatpush1.msra.mxu0 0.0
    %802 = vmatprep.subr.mxu0 0.0
    %803 = vmatpush1.msra.mxu0 0.0
    %804 = vmatprep.subr.mxu0 0.0
    %805 = vmatpush1.msra.mxu0 0.0
    %806 = vmatprep.mubr.f32.mxu0 0.0
    %807 = vmatmul.mubr.f32.gmra.mrb[0].mxu0 %v740
    %v808 = vpop.f32.mrb[0].mxu0
    %v809 = vadd.f32 %v736, %v808
    %v810 = vpop.f32.mrb[0].mxu0
    %811 = vdwg.mxu0
    %v812 = vmax.f32 %v809, 0.0
    %v813 = vld [vmem:[#allocation8] sm:$0xff]
    %v814 = vmul.f32 %v812, %v813
    %v815 = vld [vmem:[%s8] sm:$0xff]
    %v816 = vld [vmem:[%s8 + $0x8] sm:$0xff]
    %v817 = vld [vmem:[%s8 + $0x10] sm:$0xff]
    %v818 = vld [vmem:[#allocation14] sm:$0x1]
    %v820 = vlaneseq
    %v821 = vshrl.u32 %v820, 7
    %v822 = vsub.s32 0, %v821
    %v823 = vrot.slane %v818, %v822
    %vm825 = vcmask 195584
    %v827 = vsel %vm825, %v205, 0
    %829 = vmatprep.subr.mxu0 0.0
    %830 = vmatpush1.msra.mxu0 %v815
    %831 = vmatprep.subr.mxu0 0.0
    %832 = vmatpush1.msra.mxu0 %v816
    %833 = vmatprep.subr.mxu0 0.0
    %834 = vmatpush1.msra.mxu0 %v817
    %835 = vmatprep.subr.mxu0 0.0
    %836 = vmatpush1.msra.mxu0 0.0
    %837 = vmatprep.subr.mxu0 0.0
    %838 = vmatpush1.msra.mxu0 0.0
    %839 = vmatprep.subr.mxu0 0.0
    %840 = vmatpush1.msra.mxu0 0.0
    %841 = vmatprep.subr.mxu0 0.0
    %842 = vmatpush1.msra.mxu0 0.0
    %843 = vmatprep.subr.mxu0 0.0
    %844 = vmatpush1.msra.mxu0 0.0
    %845 = vmatprep.subr.mxu0 0.0
    %846 = vmatpush1.msra.mxu0 0.0
    %847 = vmatprep.subr.mxu0 0.0
    %848 = vmatpush1.msra.mxu0 0.0
    %849 = vmatprep.subr.mxu0 0.0
    %850 = vmatpush1.msra.mxu0 0.0
    %851 = vmatprep.subr.mxu0 0.0
    %852 = vmatpush1.msra.mxu0 0.0
    %853 = vmatprep.subr.mxu0 0.0
    %854 = vmatpush1.msra.mxu0 0.0
    %855 = vmatprep.subr.mxu0 0.0
    %856 = vmatpush1.msra.mxu0 0.0
    %857 = vmatprep.subr.mxu0 0.0
    %858 = vmatpush1.msra.mxu0 0.0
    %859 = vmatprep.subr.mxu0 0.0
    %860 = vmatpush1.msra.mxu0 0.0
    %861 = vmatprep.subr.mxu0 0.0
    %862 = vmatpush1.msra.mxu0 0.0
    %863 = vmatprep.subr.mxu0 0.0
    %864 = vmatpush1.msra.mxu0 0.0
    %865 = vmatprep.subr.mxu0 0.0
    %866 = vmatpush1.msra.mxu0 0.0
    %867 = vmatprep.subr.mxu0 0.0
    %868 = vmatpush1.msra.mxu0 0.0
    %869 = vmatprep.subr.mxu0 0.0
    %870 = vmatpush1.msra.mxu0 0.0
    %871 = vmatprep.subr.mxu0 0.0
    %872 = vmatpush1.msra.mxu0 0.0
    %873 = vmatprep.subr.mxu0 0.0
    %874 = vmatpush1.msra.mxu0 0.0
    %875 = vmatprep.subr.mxu0 0.0
    %876 = vmatpush1.msra.mxu0 0.0
    %877 = vmatprep.subr.mxu0 0.0
    %878 = vmatpush1.msra.mxu0 0.0
    %879 = vmatprep.subr.mxu0 0.0
    %880 = vmatpush1.msra.mxu0 0.0
    %881 = vmatprep.subr.mxu0 0.0
    %882 = vmatpush1.msra.mxu0 0.0
    %883 = vmatprep.subr.mxu0 0.0
    %884 = vmatpush1.msra.mxu0 0.0
    %885 = vmatprep.subr.mxu0 0.0
    %886 = vmatpush1.msra.mxu0 0.0
    %887 = vmatprep.subr.mxu0 0.0
    %888 = vmatpush1.msra.mxu0 0.0
    %889 = vmatprep.subr.mxu0 0.0
    %890 = vmatpush1.msra.mxu0 0.0
    %891 = vmatprep.subr.mxu0 0.0
    %892 = vmatpush1.msra.mxu0 0.0
    %893 = vmatprep.mubr.f32.mxu0 0.0
    %894 = vmatmul.mubr.f32.gmra.mrb[0].mxu0 %v827
    %v895 = vpop.f32.mrb[0].mxu0
    %v896 = vadd.f32 %v823, %v895
    %v897 = vpop.f32.mrb[0].mxu0
    %898 = vdwg.mxu0
    %v899 = vsel %vm825, %v896, -inf
    %900 = vmax.xlane.f32.xlu0 %v899
    %v901 = vpop.xlane.xlu0 %900
    %v902 = vsub.f32 %v901, 1.0
    %v903 = vadd.f32 %v902, %v901
    %v904 = vmul.f32 %v903, 0.5
    %v905 = vsub.f32 %v896, %v904
    %v906 = vmax.f32 %v905, 0.0
    %v907 = vsel %vm825, %v906, 0.0
    %908 = vadd.xlane.f32.xlu0 %v907
    %v909 = vpop.xlane.xlu0 %908
    %v910 = vsub.f32 %v909, 1.0
    %vm911 = vcmp.gt.f32.partialorder %v910, 0.0
    %v912 = vsel %vm911, %v904, %v902
    %v913 = vsel %vm911, %v901, %v904
    %v914 = vadd.f32 %v912, %v913
    %v915 = vmul.f32 %v914, 0.5
    %v916 = vsub.f32 %v896, %v915
    %v917 = vmax.f32 %v916, 0.0
    %v918 = vsel %vm825, %v917, 0.0
    %919 = vadd.xlane.f32.xlu0 %v918
    %v920 = vpop.xlane.xlu0 %919
    %v921 = vsub.f32 %v920, 1.0
    %vm922 = vcmp.gt.f32.partialorder %v921, 0.0
    %v923 = vsel %vm922, %v915, %v912
    %v924 = vsel %vm922, %v913, %v915
    %v925 = vadd.f32 %v923, %v924
    %v926 = vmul.f32 %v925, 0.5
    %v927 = vsub.f32 %v896, %v926
    %v928 = vmax.f32 %v927, 0.0
    %v929 = vsel %vm825, %v928, 0.0
    %930 = vadd.xlane.f32.xlu0 %v929
    %v931 = vpop.xlane.xlu0 %930
    %v932 = vsub.f32 %v931, 1.0
    %vm933 = vcmp.gt.f32.partialorder %v932, 0.0
    %v934 = vsel %vm933, %v926, %v923
    %v935 = vsel %vm933, %v924, %v926
    %v936 = vadd.f32 %v934, %v935
    %v937 = vmul.f32 %v936, 0.5
    %v938 = vsub.f32 %v896, %v937
    %v939 = vmax.f32 %v938, 0.0
    %v940 = vsel %vm825, %v939, 0.0
    %941 = vadd.xlane.f32.xlu0 %v940
    %v942 = vpop.xlane.xlu0 %941
    %v943 = vsub.f32 %v942, 1.0
    %vm944 = vcmp.gt.f32.partialorder %v943, 0.0
    %v945 = vsel %vm944, %v937, %v934
    %v946 = vsel %vm944, %v935, %v937
    %v947 = vadd.f32 %v945, %v946
    %v948 = vmul.f32 %v947, 0.5
    %v949 = vsub.f32 %v896, %v948
    %v950 = vmax.f32 %v949, 0.0
    %v951 = vsel %vm825, %v950, 0.0
    %952 = vadd.xlane.f32.xlu0 %v951
    %v953 = vpop.xlane.xlu0 %952
    %v954 = vsub.f32 %v953, 1.0
    %vm955 = vcmp.gt.f32.partialorder %v954, 0.0
    %v956 = vsel %vm955, %v948, %v945
    %v957 = vsel %vm955, %v946, %v948
    %v958 = vadd.f32 %v956, %v957
    %v959 = vmul.f32 %v958, 0.5
    %v960 = vsub.f32 %v896, %v959
    %v961 = vmax.f32 %v960, 0.0
    %v962 = vsel %vm825, %v961, 0.0
    %963 = vadd.xlane.f32.xlu0 %v962
    %v964 = vpop.xlane.xlu0 %963
    %v965 = vsub.f32 %v964, 1.0
    %vm966 = vcmp.gt.f32.partialorder %v965, 0.0
    %v967 = vsel %vm966, %v959, %v956
    %v968 = vsel %vm966, %v957, %v959
    %v969 = vadd.f32 %v967, %v968
    %v970 = vmul.f32 %v969, 0.5
    %v971 = vsub.f32 %v896, %v970
    %v972 = vmax.f32 %v971, 0.0
    %v973 = vsel %vm825, %v972, 0.0
    %974 = vadd.xlane.f32.xlu0 %v973
    %v975 = vpop.xlane.xlu0 %974
    %v976 = vsub.f32 %v975, 1.0
    %vm977 = vcmp.gt.f32.partialorder %v976, 0.0
    %v978 = vsel %vm977, %v970, %v967
    %v979 = vsel %vm977, %v968, %v970
    %v980 = vadd.f32 %v978, %v979
    %v981 = vmul.f32 %v980, 0.5
    %v982 = vsub.f32 %v896, %v981
    %v983 = vmax.f32 %v982, 0.0
    %v984 = vsel %vm825, %v983, 0.0
    %985 = vadd.xlane.f32.xlu0 %v984
    %v986 = vpop.xlane.xlu0 %985
    %v987 = vsub.f32 %v986, 1.0
    %vm988 = vcmp.gt.f32.partialorder %v987, 0.0
    %v989 = vsel %vm988, %v981, %v978
    %v990 = vsel %vm988, %v979, %v981
    %v991 = vadd.f32 %v989, %v990
    %v992 = vmul.f32 %v991, 0.5
    %v993 = vsub.f32 %v896, %v992
    %v994 = vmax.f32 %v993, 0.0
    %v995 = vsel %vm825, %v994, 0.0
    %996 = vadd.xlane.f32.xlu0 %v995
    %v997 = vpop.xlane.xlu0 %996
    %v998 = vsub.f32 %v997, 1.0
    %vm999 = vcmp.gt.f32.partialorder %v998, 0.0
    %v1000 = vsel %vm999, %v992, %v989
    %v1001 = vsel %vm999, %v990, %v992
    %v1002 = vadd.f32 %v1000, %v1001
    %v1003 = vmul.f32 %v1002, 0.5
    %v1004 = vsub.f32 %v896, %v1003
    %v1005 = vmax.f32 %v1004, 0.0
    %v1006 = vsel %vm825, %v1005, 0.0
    %1007 = vadd.xlane.f32.xlu0 %v1006
    %v1008 = vpop.xlane.xlu0 %1007
    %v1009 = vsub.f32 %v1008, 1.0
    %vm1010 = vcmp.gt.f32.partialorder %v1009, 0.0
    %v1011 = vsel %vm1010, %v1003, %v1000
    %v1012 = vsel %vm1010, %v1001, %v1003
    %v1013 = vadd.f32 %v1011, %v1012
    %v1014 = vmul.f32 %v1013, 0.5
    %v1015 = vsub.f32 %v896, %v1014
    %v1016 = vmax.f32 %v1015, 0.0
    %v1017 = vsel %vm825, %v1016, 0.0
    %1018 = vadd.xlane.f32.xlu0 %v1017
    %v1019 = vpop.xlane.xlu0 %1018
    %v1020 = vsub.f32 %v1019, 1.0
    %vm1021 = vcmp.gt.f32.partialorder %v1020, 0.0
    %v1022 = vsel %vm1021, %v1014, %v1011
    %v1023 = vsel %vm1021, %v1012, %v1014
    %v1024 = vadd.f32 %v1022, %v1023
    %v1025 = vmul.f32 %v1024, 0.5
    %v1026 = vsub.f32 %v896, %v1025
    %v1027 = vmax.f32 %v1026, 0.0
    %v1028 = vsel %vm825, %v1027, 0.0
    %1029 = vadd.xlane.f32.xlu0 %v1028
    %v1030 = vpop.xlane.xlu0 %1029
    %v1031 = vsub.f32 %v1030, 1.0
    %vm1032 = vcmp.gt.f32.partialorder %v1031, 0.0
    %v1033 = vsel %vm1032, %v1025, %v1022
    %v1034 = vsel %vm1032, %v1023, %v1025
    %v1035 = vadd.f32 %v1033, %v1034
    %v1036 = vmul.f32 %v1035, 0.5
    %v1037 = vsub.f32 %v896, %v1036
    %v1038 = vmax.f32 %v1037, 0.0
    %v1039 = vsel %vm825, %v1038, 0.0
    %1040 = vadd.xlane.f32.xlu0 %v1039
    %v1041 = vpop.xlane.xlu0 %1040
    %v1042 = vsub.f32 %v1041, 1.0
    %vm1043 = vcmp.gt.f32.partialorder %v1042, 0.0
    %v1044 = vsel %vm1043, %v1036, %v1033
    %v1045 = vsel %vm1043, %v1034, %v1036
    %v1046 = vadd.f32 %v1044, %v1045
    %v1047 = vmul.f32 %v1046, 0.5
    %v1048 = vsub.f32 %v896, %v1047
    %v1049 = vmax.f32 %v1048, 0.0
    %v1050 = vsel %vm825, %v1049, 0.0
    %1051 = vadd.xlane.f32.xlu0 %v1050
    %v1052 = vpop.xlane.xlu0 %1051
    %v1053 = vsub.f32 %v1052, 1.0
    %vm1054 = vcmp.gt.f32.partialorder %v1053, 0.0
    %v1055 = vsel %vm1054, %v1047, %v1044
    %v1056 = vsel %vm1054, %v1045, %v1047
    %v1057 = vadd.f32 %v1055, %v1056
    %v1058 = vmul.f32 %v1057, 0.5
    %v1059 = vsub.f32 %v896, %v1058
    %v1060 = vmax.f32 %v1059, 0.0
    %v1061 = vsel %vm825, %v1060, 0.0
    %1062 = vadd.xlane.f32.xlu0 %v1061
    %v1063 = vpop.xlane.xlu0 %1062
    %v1064 = vsub.f32 %v1063, 1.0
    %vm1065 = vcmp.gt.f32.partialorder %v1064, 0.0
    %v1066 = vsel %vm1065, %v1058, %v1055
    %v1067 = vsel %vm1065, %v1056, %v1058
    %v1068 = vadd.f32 %v1066, %v1067
    %v1069 = vmul.f32 %v1068, 0.5
    %v1070 = vsub.f32 %v896, %v1069
    %v1071 = vmax.f32 %v1070, 0.0
    %v1072 = vsel %vm825, %v1071, 0.0
    %1073 = vadd.xlane.f32.xlu0 %v1072
    %v1074 = vpop.xlane.xlu0 %1073
    %v1075 = vsub.f32 %v1074, 1.0
    %vm1076 = vcmp.gt.f32.partialorder %v1075, 0.0
    %v1077 = vsel %vm1076, %v1069, %v1066
    %v1078 = vsel %vm1076, %v1067, %v1069
    %v1079 = vadd.f32 %v1077, %v1078
    %v1080 = vmul.f32 %v1079, 0.5
    %v1081 = vsub.f32 %v896, %v1080
    %v1082 = vmax.f32 %v1081, 0.0
    %v1083 = vsel %vm825, %v1082, 0.0
    %1084 = vadd.xlane.f32.xlu0 %v1083
    %v1085 = vpop.xlane.xlu0 %1084
    %v1086 = vsub.f32 %v1085, 1.0
    %vm1087 = vcmp.gt.f32.partialorder %v1086, 0.0
    %v1088 = vsel %vm1087, %v1080, %v1077
    %v1089 = vsel %vm1087, %v1078, %v1080
    %v1090 = vadd.f32 %v1088, %v1089
    %v1091 = vmul.f32 %v1090, 0.5
    %v1092 = vsub.f32 %v896, %v1091
    %v1093 = vmax.f32 %v1092, 0.0
    %v1094 = vsel %vm825, %v1093, 0.0
    %1095 = vadd.xlane.f32.xlu0 %v1094
    %v1096 = vpop.xlane.xlu0 %1095
    %v1097 = vsub.f32 %v1096, 1.0
    %vm1098 = vcmp.gt.f32.partialorder %v1097, 0.0
    %v1099 = vsel %vm1098, %v1091, %v1088
    %v1100 = vsel %vm1098, %v1089, %v1091
    %v1101 = vadd.f32 %v1099, %v1100
    %v1102 = vmul.f32 %v1101, 0.5
    %v1103 = vsub.f32 %v896, %v1102
    %v1104 = vmax.f32 %v1103, 0.0
    %v1105 = vsel %vm825, %v1104, 0.0
    %1106 = vadd.xlane.f32.xlu0 %v1105
    %v1107 = vpop.xlane.xlu0 %1106
    %v1108 = vsub.f32 %v1107, 1.0
    %vm1109 = vcmp.gt.f32.partialorder %v1108, 0.0
    %v1110 = vsel %vm1109, %v1102, %v1099
    %v1111 = vsel %vm1109, %v1100, %v1102
    %v1112 = vadd.f32 %v1110, %v1111
    %v1113 = vmul.f32 %v1112, 0.5
    %v1114 = vsub.f32 %v896, %v1113
    %v1115 = vmax.f32 %v1114, 0.0
    %v1116 = vsel %vm825, %v1115, 0.0
    %1117 = vadd.xlane.f32.xlu0 %v1116
    %v1118 = vpop.xlane.xlu0 %1117
    %v1119 = vsub.f32 %v1118, 1.0
    %vm1120 = vcmp.gt.f32.partialorder %v1119, 0.0
    %v1121 = vsel %vm1120, %v1113, %v1110
    %v1122 = vsel %vm1120, %v1111, %v1113
    %v1123 = vadd.f32 %v1121, %v1122
    %v1124 = vmul.f32 %v1123, 0.5
    %v1125 = vsub.f32 %v896, %v1124
    %v1126 = vmax.f32 %v1125, 0.0
    %v1127 = vsel %vm825, %v1126, 0.0
    %1128 = vadd.xlane.f32.xlu0 %v1127
    %v1129 = vpop.xlane.xlu0 %1128
    %v1130 = vsub.f32 %v1129, 1.0
    %vm1131 = vcmp.gt.f32.partialorder %v1130, 0.0
    %v1132 = vsel %vm1131, %v1124, %v1121
    %v1133 = vsel %vm1131, %v1122, %v1124
    %v1134 = vadd.f32 %v1132, %v1133
    %v1135 = vmul.f32 %v1134, 0.5
    %v1136 = vsub.f32 %v896, %v1135
    %v1137 = vmax.f32 %v1136, 0.0
    %v1138 = vsel %vm825, %v1137, 0.0
    %1139 = vadd.xlane.f32.xlu0 %v1138
    %v1140 = vpop.xlane.xlu0 %1139
    %v1141 = vsub.f32 %v1140, 1.0
    %vm1142 = vcmp.gt.f32.partialorder %v1141, 0.0
    %v1143 = vsel %vm1142, %v1135, %v1132
    %v1144 = vsel %vm1142, %v1133, %v1135
    %v1145 = vadd.f32 %v1143, %v1144
    %v1146 = vmul.f32 %v1145, 0.5
    %v1147 = vsub.f32 %v896, %v1146
    %v1148 = vmax.f32 %v1147, 0.0
    %v1149 = vsel %vm825, %v1148, 0.0
    %1150 = vadd.xlane.f32.xlu0 %v1149
    %v1151 = vpop.xlane.xlu0 %1150
    %v1152 = vsub.f32 %v1151, 1.0
    %vm1153 = vcmp.gt.f32.partialorder %v1152, 0.0
    %v1154 = vsel %vm1153, %v1146, %v1143
    %v1155 = vsel %vm1153, %v1144, %v1146
    %v1156 = vadd.f32 %v1154, %v1155
    %v1157 = vmul.f32 %v1156, 0.5
    %v1158 = vsub.f32 %v896, %v1157
    %v1159 = vmax.f32 %v1158, 0.0
    %v1160 = vsel %vm825, %v1159, 0.0
    %1161 = vadd.xlane.f32.xlu0 %v1160
    %v1162 = vpop.xlane.xlu0 %1161
    %v1163 = vsub.f32 %v1162, 1.0
    %vm1164 = vcmp.gt.f32.partialorder %v1163, 0.0
    %v1165 = vsel %vm1164, %v1157, %v1154
    %v1166 = vsel %vm1164, %v1155, %v1157
    %v1167 = vadd.f32 %v1165, %v1166
    %v1168 = vmul.f32 %v1167, 0.5
    %v1169 = vsub.f32 %v896, %v1168
    %v1170 = vmax.f32 %v1169, 0.0
    %v1171 = vsel %vm825, %v1170, 0.0
    %1172 = vadd.xlane.f32.xlu0 %v1171
    %v1173 = vpop.xlane.xlu0 %1172
    %v1174 = vsub.f32 %v1173, 1.0
    %vm1175 = vcmp.gt.f32.partialorder %v1174, 0.0
    %v1176 = vsel %vm1175, %v1168, %v1165
    %v1177 = vsel %vm1175, %v1166, %v1168
    %v1178 = vadd.f32 %v1176, %v1177
    %v1179 = vmul.f32 %v1178, 0.5
    %v1180 = vsub.f32 %v896, %v1179
    %v1181 = vmax.f32 %v1180, 0.0
    %v1182 = vsel %vm825, %v1181, 0.0
    %1183 = vadd.xlane.f32.xlu0 %v1182
    %v1184 = vpop.xlane.xlu0 %1183
    %v1185 = vsub.f32 %v1184, 1.0
    %vm1186 = vcmp.gt.f32.partialorder %v1185, 0.0
    %v1187 = vsel %vm1186, %v1179, %v1176
    %v1188 = vsel %vm1186, %v1177, %v1179
    %v1189 = vadd.f32 %v1187, %v1188
    %v1190 = vmul.f32 %v1189, 0.5
    %v1191 = vsub.f32 %v896, %v1190
    %v1192 = vmax.f32 %v1191, 0.0
    %v1193 = vsel %vm825, %v1192, 0.0
    %1194 = vadd.xlane.f32.xlu0 %v1193
    %v1195 = vpop.xlane.xlu0 %1194
    %v1196 = vsub.f32 %v1195, 1.0
    %vm1197 = vcmp.gt.f32.partialorder %v1196, 0.0
    %v1198 = vsel %vm1197, %v1190, %v1187
    %v1199 = vsel %vm1197, %v1188, %v1190
    %v1200 = vadd.f32 %v1198, %v1199
    %v1201 = vmul.f32 %v1200, 0.5
    %v1202 = vsub.f32 %v896, %v1201
    %v1203 = vmax.f32 %v1202, 0.0
    %v1204 = vsel %vm825, %v1203, 0.0
    %1205 = vadd.xlane.f32.xlu0 %v1204
    %v1206 = vpop.xlane.xlu0 %1205
    %v1207 = vsub.f32 %v1206, 1.0
    %vm1208 = vcmp.gt.f32.partialorder %v1207, 0.0
    %v1209 = vsel %vm1208, %v1201, %v1198
    %v1210 = vsel %vm1208, %v1199, %v1201
    %v1211 = vadd.f32 %v1209, %v1210
    %v1212 = vmul.f32 %v1211, 0.5
    %v1213 = vsub.f32 %v896, %v1212
    %v1214 = vmax.f32 %v1213, 0.0
    %v1215 = vsel %vm825, %v1214, 0.0
    %1216 = vadd.xlane.f32.xlu0 %v1215
    %v1217 = vpop.xlane.xlu0 %1216
    %v1218 = vsub.f32 %v1217, 1.0
    %vm1219 = vcmp.gt.f32.partialorder %v1218, 0.0
    %v1220 = vsel %vm1219, %v1212, %v1209
    %v1221 = vsel %vm1219, %v1210, %v1212
    %v1222 = vadd.f32 %v1220, %v1221
    %v1223 = vmul.f32 %v1222, 0.5
    %v1224 = vsub.f32 %v896, %v1223
    %v1225 = vmax.f32 %v1224, 0.0
    %v1226 = vsel %vm825, %v1225, 0.0
    %1227 = vadd.xlane.f32.xlu0 %v1226
    %v1228 = vpop.xlane.xlu0 %1227
    %v1229 = vsub.f32 %v1228, 1.0
    %vm1230 = vcmp.gt.f32.partialorder %v1229, 0.0
    %v1231 = vsel %vm1230, %v1223, %v1220
    %v1232 = vsel %vm1230, %v1221, %v1223
    %v1233 = vadd.f32 %v1231, %v1232
    %v1234 = vmul.f32 %v1233, 0.5
    %vm1235 = vcmp.gt.f32.partialorder %v896, %v1234
    %v1236 = vsel %vm1235, 1, 0
    %v1237 = vcvt.s32.f32 %v1236
    %v1238 = vsel %vm825, %v1237, 0.0
    %1239 = vadd.xlane.f32.xlu0 %v1238
    %v1240 = vpop.xlane.xlu0 %1239
    %v1241 = vmul.f32 %v896, %v1237
    %v1242 = vsel %vm825, %v1241, 0.0
    %1243 = vadd.xlane.f32.xlu0 %v1242
    %v1244 = vpop.xlane.xlu0 %1243
    %v1245 = vsub.f32 %v1244, 1.0
    %v1246 = vrcp.pop %v1240
    %v1247 = vmul.f32 %v1245, %v1246
    %v1248 = vsub.f32 %v896, %v1247
    %v1249 = vmax.f32 %v1248, 0.0
    %1250 = vst.msk [vmem:[#allocation23] sm:$0xff] %vm825, %v1249
    %v1251 = vmul.f32 %v205, %v1249
    %v1252 = vld [vmem:[%s14] sm:$0xff]
    %v1253 = vld [vmem:[%s14 + $0x8] sm:$0xff]
    %v1254 = vld [vmem:[%s14 + $0x10] sm:$0xff]
    %v1255 = vld [vmem:[%s15] sm:$0x1]
    %v1257 = vlaneseq
    %v1258 = vshrl.u32 %v1257, 7
    %v1259 = vsub.s32 0, %v1258
    %v1260 = vrot.slane %v1255, %v1259
    %v1263 = vsel %vm825, %v1251, 0
    %1265 = vmatprep.subr.mxu0 0.0
    %1266 = vmatpush1.msra.mxu0 %v1252
    %1267 = vmatprep.subr.mxu0 0.0
    %1268 = vmatpush1.msra.mxu0 %v1253
    %1269 = vmatprep.subr.mxu0 0.0
    %1270 = vmatpush1.msra.mxu0 %v1254
    %1271 = vmatprep.subr.mxu0 0.0
    %1272 = vmatpush1.msra.mxu0 0.0
    %1273 = vmatprep.subr.mxu0 0.0
    %1274 = vmatpush1.msra.mxu0 0.0
    %1275 = vmatprep.subr.mxu0 0.0
    %1276 = vmatpush1.msra.mxu0 0.0
    %1277 = vmatprep.subr.mxu0 0.0
    %1278 = vmatpush1.msra.mxu0 0.0
    %1279 = vmatprep.subr.mxu0 0.0
    %1280 = vmatpush1.msra.mxu0 0.0
    %1281 = vmatprep.subr.mxu0 0.0
    %1282 = vmatpush1.msra.mxu0 0.0
    %1283 = vmatprep.subr.mxu0 0.0
    %1284 = vmatpush1.msra.mxu0 0.0
    %1285 = vmatprep.subr.mxu0 0.0
    %1286 = vmatpush1.msra.mxu0 0.0
    %1287 = vmatprep.subr.mxu0 0.0
    %1288 = vmatpush1.msra.mxu0 0.0
    %1289 = vmatprep.subr.mxu0 0.0
    %1290 = vmatpush1.msra.mxu0 0.0
    %1291 = vmatprep.subr.mxu0 0.0
    %1292 = vmatpush1.msra.mxu0 0.0
    %1293 = vmatprep.subr.mxu0 0.0
    %1294 = vmatpush1.msra.mxu0 0.0
    %1295 = vmatprep.subr.mxu0 0.0
    %1296 = vmatpush1.msra.mxu0 0.0
    %1297 = vmatprep.subr.mxu0 0.0
    %1298 = vmatpush1.msra.mxu0 0.0
    %1299 = vmatprep.subr.mxu0 0.0
    %1300 = vmatpush1.msra.mxu0 0.0
    %1301 = vmatprep.subr.mxu0 0.0
    %1302 = vmatpush1.msra.mxu0 0.0
    %1303 = vmatprep.subr.mxu0 0.0
    %1304 = vmatpush1.msra.mxu0 0.0
    %1305 = vmatprep.subr.mxu0 0.0
    %1306 = vmatpush1.msra.mxu0 0.0
    %1307 = vmatprep.subr.mxu0 0.0
    %1308 = vmatpush1.msra.mxu0 0.0
    %1309 = vmatprep.subr.mxu0 0.0
    %1310 = vmatpush1.msra.mxu0 0.0
    %1311 = vmatprep.subr.mxu0 0.0
    %1312 = vmatpush1.msra.mxu0 0.0
    %1313 = vmatprep.subr.mxu0 0.0
    %1314 = vmatpush1.msra.mxu0 0.0
    %1315 = vmatprep.subr.mxu0 0.0
    %1316 = vmatpush1.msra.mxu0 0.0
    %1317 = vmatprep.subr.mxu0 0.0
    %1318 = vmatpush1.msra.mxu0 0.0
    %1319 = vmatprep.subr.mxu0 0.0
    %1320 = vmatpush1.msra.mxu0 0.0
    %1321 = vmatprep.subr.mxu0 0.0
    %1322 = vmatpush1.msra.mxu0 0.0
    %1323 = vmatprep.subr.mxu0 0.0
    %1324 = vmatpush1.msra.mxu0 0.0
    %1325 = vmatprep.subr.mxu0 0.0
    %1326 = vmatpush1.msra.mxu0 0.0
    %1327 = vmatprep.subr.mxu0 0.0
    %1328 = vmatpush1.msra.mxu0 0.0
    %1329 = vmatprep.mubr.f32.mxu0 0.0
    %1330 = vmatmul.mubr.f32.gmra.mrb[0].mxu0 %v1263
    %v1331 = vpop.f32.mrb[0].mxu0
    %v1332 = vadd.f32 %v1260, %v1331
    %v1333 = vpop.f32.mrb[0].mxu0
    %1334 = vdwg.mxu0
    %v1335 = vmax.f32 %v1332, 0.0
    %v1336 = vld [vmem:[#allocation10] sm:$0xff]
    %v1337 = vmul.f32 %v1335, %v1336
    %v1338 = vld [vmem:[%s16] sm:$0xff]
    %v1339 = vld [vmem:[%s16 + $0x8] sm:$0xff]
    %v1340 = vld [vmem:[%s16 + $0x10] sm:$0xff]
    %v1341 = vld [vmem:[%s16 + $0x18] sm:$0xff]
    %v1342 = vld [vmem:[%s17] sm:$0x1]
    %v1344 = vlaneseq
    %v1345 = vshrl.u32 %v1344, 7
    %v1346 = vsub.s32 0, %v1345
    %v1347 = vrot.slane %v1342, %v1346
    %v1350 = vsel %vm738, %v1337, 0
    %1352 = vmatprep.subr.mxu0 0.0
    %1353 = vmatpush1.msra.mxu0 %v1338
    %1354 = vmatprep.subr.mxu0 0.0
    %1355 = vmatpush1.msra.mxu0 %v1339
    %1356 = vmatprep.subr.mxu0 0.0
    %1357 = vmatpush1.msra.mxu0 %v1340
    %1358 = vmatprep.subr.mxu0 0.0
    %1359 = vmatpush1.msra.mxu0 %v1341
    %1360 = vmatprep.subr.mxu0 0.0
    %1361 = vmatpush1.msra.mxu0 0.0
    %1362 = vmatprep.subr.mxu0 0.0
    %1363 = vmatpush1.msra.mxu0 0.0
    %1364 = vmatprep.subr.mxu0 0.0
    %1365 = vmatpush1.msra.mxu0 0.0
    %1366 = vmatprep.subr.mxu0 0.0
    %1367 = vmatpush1.msra.mxu0 0.0
    %1368 = vmatprep.subr.mxu0 0.0
    %1369 = vmatpush1.msra.mxu0 0.0
    %1370 = vmatprep.subr.mxu0 0.0
    %1371 = vmatpush1.msra.mxu0 0.0
    %1372 = vmatprep.subr.mxu0 0.0
    %1373 = vmatpush1.msra.mxu0 0.0
    %1374 = vmatprep.subr.mxu0 0.0
    %1375 = vmatpush1.msra.mxu0 0.0
    %1376 = vmatprep.subr.mxu0 0.0
    %1377 = vmatpush1.msra.mxu0 0.0
    %1378 = vmatprep.subr.mxu0 0.0
    %1379 = vmatpush1.msra.mxu0 0.0
    %1380 = vmatprep.subr.mxu0 0.0
    %1381 = vmatpush1.msra.mxu0 0.0
    %1382 = vmatprep.subr.mxu0 0.0
    %1383 = vmatpush1.msra.mxu0 0.0
    %1384 = vmatprep.subr.mxu0 0.0
    %1385 = vmatpush1.msra.mxu0 0.0
    %1386 = vmatprep.subr.mxu0 0.0
    %1387 = vmatpush1.msra.mxu0 0.0
    %1388 = vmatprep.subr.mxu0 0.0
    %1389 = vmatpush1.msra.mxu0 0.0
    %1390 = vmatprep.subr.mxu0 0.0
    %1391 = vmatpush1.msra.mxu0 0.0
    %1392 = vmatprep.subr.mxu0 0.0
    %1393 = vmatpush1.msra.mxu0 0.0
    %1394 = vmatprep.subr.mxu0 0.0
    %1395 = vmatpush1.msra.mxu0 0.0
    %1396 = vmatprep.subr.mxu0 0.0
    %1397 = vmatpush1.msra.mxu0 0.0
    %1398 = vmatprep.subr.mxu0 0.0
    %1399 = vmatpush1.msra.mxu0 0.0
    %1400 = vmatprep.subr.mxu0 0.0
    %1401 = vmatpush1.msra.mxu0 0.0
    %1402 = vmatprep.subr.mxu0 0.0
    %1403 = vmatpush1.msra.mxu0 0.0
    %1404 = vmatprep.subr.mxu0 0.0
    %1405 = vmatpush1.msra.mxu0 0.0
    %1406 = vmatprep.subr.mxu0 0.0
    %1407 = vmatpush1.msra.mxu0 0.0
    %1408 = vmatprep.subr.mxu0 0.0
    %1409 = vmatpush1.msra.mxu0 0.0
    %1410 = vmatprep.subr.mxu0 0.0
    %1411 = vmatpush1.msra.mxu0 0.0
    %1412 = vmatprep.subr.mxu0 0.0
    %1413 = vmatpush1.msra.mxu0 0.0
    %1414 = vmatprep.subr.mxu0 0.0
    %1415 = vmatpush1.msra.mxu0 0.0
    %1416 = vmatprep.mubr.f32.mxu0 0.0
    %1417 = vmatmul.mubr.f32.gmra.mrb[0].mxu0 %v1350
    %v1418 = vpop.f32.mrb[0].mxu0
    %v1419 = vadd.f32 %v1347, %v1418
    %v1420 = vpop.f32.mrb[0].mxu0
    %1421 = vdwg.mxu0
    %v1422 = vmax.f32 %v1419, 0.0
    %v1423 = vld [vmem:[#allocation11] sm:$0xff]
    %v1424 = vmul.f32 %v1422, %v1423
    %v1425 = vld [vmem:[%s18] sm:$0xff]
    %v1426 = vld [vmem:[%s18 + $0x8] sm:$0xff]
    %v1427 = vld [vmem:[%s18 + $0x10] sm:$0xff]
    %v1428 = vld [vmem:[%s18 + $0x18] sm:$0xff]
    %v1429 = vld [vmem:[%s19] sm:$0xff]
    %v1430 = vld [vmem:[%s19 + $0x8] sm:$0xff]
    %v1431 = vld [vmem:[%s19 + $0x10] sm:$0xff]
    %v1432 = vld [vmem:[%s19 + $0x18] sm:$0xff]
    %v1434 = vsel %vm738, %v1424, 0
    %1436 = vmatprep.subr.mxu0 0.0
    %1437 = vmatpush1.msra.mxu0 %v1429
    %1438 = vmatprep.subr.mxu0 0.0
    %1439 = vmatpush1.msra.mxu0 %v1430
    %1440 = vmatprep.subr.mxu0 0.0
    %1441 = vmatpush1.msra.mxu0 %v1431
    %1442 = vmatprep.subr.mxu0 0.0
    %1443 = vmatpush1.msra.mxu0 %v1432
    %1444 = vmatprep.subr.mxu0 0.0
    %1445 = vmatpush1.msra.mxu0 0.0
    %1446 = vmatprep.subr.mxu0 0.0
    %1447 = vmatpush1.msra.mxu0 0.0
    %1448 = vmatprep.subr.mxu0 0.0
    %1449 = vmatpush1.msra.mxu0 0.0
    %1450 = vmatprep.subr.mxu0 0.0
    %1451 = vmatpush1.msra.mxu0 0.0
    %1452 = vmatprep.subr.mxu0 0.0
    %1453 = vmatpush1.msra.mxu0 0.0
    %1454 = vmatprep.subr.mxu0 0.0
    %1455 = vmatpush1.msra.mxu0 0.0
    %1456 = vmatprep.subr.mxu0 0.0
    %1457 = vmatpush1.msra.mxu0 0.0
    %1458 = vmatprep.subr.mxu0 0.0
    %1459 = vmatpush1.msra.mxu0 0.0
    %1460 = vmatprep.subr.mxu0 0.0
    %1461 = vmatpush1.msra.mxu0 0.0
    %1462 = vmatprep.subr.mxu0 0.0
    %1463 = vmatpush1.msra.mxu0 0.0
    %1464 = vmatprep.subr.mxu0 0.0
    %1465 = vmatpush1.msra.mxu0 0.0
    %1466 = vmatprep.subr.mxu0 0.0
    %1467 = vmatpush1.msra.mxu0 0.0
    %1468 = vmatprep.subr.mxu0 0.0
    %1469 = vmatpush1.msra.mxu0 0.0
    %1470 = vmatprep.subr.mxu0 0.0
    %1471 = vmatpush1.msra.mxu0 0.0
    %1472 = vmatprep.subr.mxu0 0.0
    %1473 = vmatpush1.msra.mxu0 0.0
    %1474 = vmatprep.subr.mxu0 0.0
    %1475 = vmatpush1.msra.mxu0 0.0
    %1476 = vmatprep.subr.mxu0 0.0
    %1477 = vmatpush1.msra.mxu0 0.0
    %1478 = vmatprep.subr.mxu0 0.0
    %1479 = vmatpush1.msra.mxu0 0.0
    %1480 = vmatprep.subr.mxu0 0.0
    %1481 = vmatpush1.msra.mxu0 0.0
    %1482 = vmatprep.subr.mxu0 0.0
    %1483 = vmatpush1.msra.mxu0 0.0
    %1484 = vmatprep.subr.mxu0 0.0
    %1485 = vmatpush1.msra.mxu0 0.0
    %1486 = vmatprep.subr.mxu0 0.0
    %1487 = vmatpush1.msra.mxu0 0.0
    %1488 = vmatprep.subr.mxu0 0.0
    %1489 = vmatpush1.msra.mxu0 0.0
    %1490 = vmatprep.subr.mxu0 0.0
    %1491 = vmatpush1.msra.mxu0 0.0
    %1492 = vmatprep.subr.mxu0 0.0
    %1493 = vmatpush1.msra.mxu0 0.0
    %1494 = vmatprep.subr.mxu0 0.0
    %1495 = vmatpush1.msra.mxu0 0.0
    %1496 = vmatprep.subr.mxu0 0.0
    %1497 = vmatpush1.msra.mxu0 0.0
    %1498 = vmatprep.subr.mxu0 0.0
    %1499 = vmatpush1.msra.mxu0 0.0
    %1500 = vmatprep.mubr.f32.mxu0 0.0
    %1501 = vmatmul.mubr.f32.gmra.mrb[0].mxu0 %v1434
    %v1502 = vpop.f32.mrb[0].mxu0
    %v1503 = vadd.f32 0.0, %v1502
    %v1504 = vpop.f32.mrb[0].mxu0
    %1505 = vdwg.mxu0
    %v1507 = vsel %vm738, %v814, 0
    %1509 = vmatprep.subr.mxu0 0.0
    %1510 = vmatpush1.msra.mxu0 %v1425
    %1511 = vmatprep.subr.mxu0 0.0
    %1512 = vmatpush1.msra.mxu0 %v1426
    %1513 = vmatprep.subr.mxu0 0.0
    %1514 = vmatpush1.msra.mxu0 %v1427
    %1515 = vmatprep.subr.mxu0 0.0
    %1516 = vmatpush1.msra.mxu0 %v1428
    %1517 = vmatprep.subr.mxu0 0.0
    %1518 = vmatpush1.msra.mxu0 0.0
    %1519 = vmatprep.subr.mxu0 0.0
    %1520 = vmatpush1.msra.mxu0 0.0
    %1521 = vmatprep.subr.mxu0 0.0
    %1522 = vmatpush1.msra.mxu0 0.0
    %1523 = vmatprep.subr.mxu0 0.0
    %1524 = vmatpush1.msra.mxu0 0.0
    %1525 = vmatprep.subr.mxu0 0.0
    %1526 = vmatpush1.msra.mxu0 0.0
    %1527 = vmatprep.subr.mxu0 0.0
    %1528 = vmatpush1.msra.mxu0 0.0
    %1529 = vmatprep.subr.mxu0 0.0
    %1530 = vmatpush1.msra.mxu0 0.0
    %1531 = vmatprep.subr.mxu0 0.0
    %1532 = vmatpush1.msra.mxu0 0.0
    %1533 = vmatprep.subr.mxu0 0.0
    %1534 = vmatpush1.msra.mxu0 0.0
    %1535 = vmatprep.subr.mxu0 0.0
    %1536 = vmatpush1.msra.mxu0 0.0
    %1537 = vmatprep.subr.mxu0 0.0
    %1538 = vmatpush1.msra.mxu0 0.0
    %1539 = vmatprep.subr.mxu0 0.0
    %1540 = vmatpush1.msra.mxu0 0.0
    %1541 = vmatprep.subr.mxu0 0.0
    %1542 = vmatpush1.msra.mxu0 0.0
    %1543 = vmatprep.subr.mxu0 0.0
    %1544 = vmatpush1.msra.mxu0 0.0
    %1545 = vmatprep.subr.mxu0 0.0
    %1546 = vmatpush1.msra.mxu0 0.0
    %1547 = vmatprep.subr.mxu0 0.0
    %1548 = vmatpush1.msra.mxu0 0.0
    %1549 = vmatprep.subr.mxu0 0.0
    %1550 = vmatpush1.msra.mxu0 0.0
    %1551 = vmatprep.subr.mxu0 0.0
    %1552 = vmatpush1.msra.mxu0 0.0
    %1553 = vmatprep.subr.mxu0 0.0
    %1554 = vmatpush1.msra.mxu0 0.0
    %1555 = vmatprep.subr.mxu0 0.0
    %1556 = vmatpush1.msra.mxu0 0.0
    %1557 = vmatprep.subr.mxu0 0.0
    %1558 = vmatpush1.msra.mxu0 0.0
    %1559 = vmatprep.subr.mxu0 0.0
    %1560 = vmatpush1.msra.mxu0 0.0
    %1561 = vmatprep.subr.mxu0 0.0
    %1562 = vmatpush1.msra.mxu0 0.0
    %1563 = vmatprep.subr.mxu0 0.0
    %1564 = vmatpush1.msra.mxu0 0.0
    %1565 = vmatprep.subr.mxu0 0.0
    %1566 = vmatpush1.msra.mxu0 0.0
    %1567 = vmatprep.subr.mxu0 0.0
    %1568 = vmatpush1.msra.mxu0 0.0
    %1569 = vmatprep.subr.mxu0 0.0
    %1570 = vmatpush1.msra.mxu0 0.0
    %1571 = vmatprep.subr.mxu0 0.0
    %1572 = vmatpush1.msra.mxu0 0.0
    %1573 = vmatprep.mubr.f32.mxu0 0.0
    %1574 = vmatmul.mubr.f32.gmra.mrb[0].mxu0 %v1507
    %v1575 = vpop.f32.mrb[0].mxu0
    %v1576 = vadd.f32 %v1503, %v1575
    %v1577 = vpop.f32.mrb[0].mxu0
    %1578 = vdwg.mxu0
    %v1579 = vld [vmem:[%s20] sm:$0x1]
    %v1581 = vlaneseq
    %v1582 = vshrl.u32 %v1581, 7
    %v1583 = vsub.s32 0, %v1582
    %v1584 = vrot.slane %v1579, %v1583
    %v1586 = vadd.f32 %v1576, %v1584
    %vm1587 = vcmask 64512
    %1588 = vst.msk [vmem:[#allocation20] sm:$0xff] %vm1587, %v1586
    // Predicated region
    $region130: #{tpu_custom_call.1} parent=1 // pred_check
      _
    $region131: #{tpu_custom_call.1} parent=1 // pred_check_branch
      %1590 = sbr.rel (0) target = $region133
    $region132: #{tpu_custom_call.1} parent=1 // pred_region
      %s1592 = ssub.s32 128, 128
      %1593 = vsyncadd [#allocation4], %s1592
      %s1595 = sshll.u32 [#allocation20], 4
      %s1596 = int_to_ptr.vmem [resolvable:$true] %s1595
      %1598 = dma.vmem_to_hbm [thread:$0]  %s1596, 128, %s21, [#allocation4]
    $region133: #{tpu_custom_call.1} parent=1 // pred_fallthru
      _
    // Predicated region
    $region134: #{tpu_custom_call.1} parent=1 // pred_check
      _
    $region135: #{tpu_custom_call.1} parent=1 // pred_check_branch
      %1600 = sbr.rel (0) target = $region137
    $region136: #{tpu_custom_call.1} parent=1 // pred_region
      %s1602 = ssub.s32 128, 128
      %1603 = vsyncadd [#allocation22], %s1602
      %s1605 = sshll.u32 [#allocation21], 4
      %s1606 = int_to_ptr.vmem [resolvable:$true] %s1605
      %1608 = dma.vmem_to_hbm [thread:$0]  %s1606, 128, %s22, [#allocation22]
    $region137: #{tpu_custom_call.1} parent=1 // pred_fallthru
      _
    // Predicated region
    $region138: #{tpu_custom_call.1} parent=1 // pred_check
      _
    $region139: #{tpu_custom_call.1} parent=1 // pred_check_branch
      %1610 = sbr.rel (0) target = $region141
    $region140: #{tpu_custom_call.1} parent=1 // pred_region
      %s1612 = ssub.s32 128, 128
      %1613 = vsyncadd [#allocation22], %s1612
      %s1615 = sshll.u32 [#allocation23], 4
      %s1616 = int_to_ptr.vmem [resolvable:$true] %s1615
      %1618 = dma.vmem_to_hbm [thread:$0]  %s1616, 128, %s23, [#allocation22]
    $region141: #{tpu_custom_call.1} parent=1 // pred_fallthru
      _
    // Predicated region
    $region142: #{tpu_custom_call.1} parent=1 // pred_check
      _
    $region143: #{tpu_custom_call.1} parent=1 // pred_check_branch
      %1620 = sbr.rel (0) target = $region145
    $region144: #{tpu_custom_call.1} parent=1 // pred_region
      %1621 = dma.done [#allocation4], 128
    $region145: #{tpu_custom_call.1} parent=1 // pred_fallthru
      _
    // Predicated region
    $region146: #{tpu_custom_call.1} parent=1 // pred_check
      _
    $region147: #{tpu_custom_call.1} parent=1 // pred_check_branch
      %1623 = sbr.rel (0) target = $region149
    $region148: #{tpu_custom_call.1} parent=1 // pred_region
      %1624 = dma.done [#allocation22], 128
    $region149: #{tpu_custom_call.1} parent=1 // pred_fallthru
      _
    // Predicated region
    $region150: #{tpu_custom_call.1} parent=1 // pred_check
      _
    $region151: #{tpu_custom_call.1} parent=1 // pred_check_branch
      %1626 = sbr.rel (0) target = $region153
    $region152: #{tpu_custom_call.1} parent=1 // pred_region
      %1627 = dma.done [#allocation22], 128
    $region153: #{tpu_custom_call.1} parent=1 // pred_fallthru
      _
    %1628 = vsyncpa [#allocation3], 1
    %1629 = vsyncpa [#allocation6], 1
    %1630 = vsyncpa [#allocation9], 1
    %1631 = vsyncpa [#allocation12], 1
    %1632 = vsyncpa [#allocation15], 1
    %1633 = vsyncpa [#allocation18], 1
    %1634 = vsyncpa [#allocation4], 1
    %1635 = vsyncpa [#allocation22], 1

</llo_original>
